<compile_context>
chip_gen: v7x
topology: tpu7x:2x2x1
jax: 0.10.0
libtpu: 0.0.40
codegen_flags: <defaults>
</compile_context>

<pallas_src>
import functools
import math

import jax
import jax.numpy as jnp
from jax.experimental import pallas as pl
from jax.experimental.pallas import tpu as pltpu

# pl.Squeezed() and None are equivalent block-dim spellings (dim squeezed out
# of the kernel Ref); fall back to None on older jax.
_SQUEEZED = pl.Squeezed() if hasattr(pl, "Squeezed") else None
_HIGHEST = jax.lax.Precision.HIGHEST


def _ssa_kernel(w_fused_ref, b_fused_ref, wo_t_ref, bo_ref, x_ref, o_ref, *,
                num_classes):
    """One (batch, row-chunk) block of the spatial-semantic attention forward.

    x_ref / o_ref : (H_chunk, W, C) tile of the NHWC activation tensor.
    w_fused_ref   : (C, N + C)  [ Wk^T @ Q^T / sqrt(D) | Wv^T ]
    b_fused_ref   : (1, N + C)  [ bk @ Q^T   / sqrt(D) | bv   ]
    wo_t_ref      : (C, C)      W_o weight, transposed to (in, out)
    bo_ref        : (1, C)      W_o bias
    """
    Hc, W, C = x_ref.shape
    N = num_classes

    x = x_ref[...]                                   # (Hc, W, C), f32
    x2d = x.reshape(Hc * W, C)                       # layout-free reshape

    # Fused projection: [scores | V] = x @ W_fused + b_fused      (Hc*W, N+C)
    fused = jnp.dot(x2d, w_fused_ref[...],
                    preferred_element_type=jnp.float32,
                    precision=_HIGHEST) + b_fused_ref[...]
    scores = fused[:, :N].reshape(Hc, W, N)          # already scaled by 1/sqrt(D)
    v = fused[:, N:].reshape(Hc, W, C)

    # Softmax over the width axis (PyTorch dim=-1), independently per (row, n).
    m = jnp.max(scores, axis=1, keepdims=True)       # (Hc, 1, N)
    e = jnp.exp(scores - m)
    denom = jnp.sum(e, axis=1, keepdims=True)        # (Hc, 1, N)
    attn = e * pl.reciprocal(denom, approx=True)     # (Hc, W, N)

    # attn_output = sum_n attn[n] * V  ==  V * (sum_n attn[n])
    gate = jnp.sum(attn, axis=2, keepdims=True)      # (Hc, W, 1)
    attn_out = (v * gate).reshape(Hc * W, C)         # (Hc*W, C)

    # W_o 1x1 conv + residual
    out = jnp.dot(attn_out, wo_t_ref[...],
                  preferred_element_type=jnp.float32,
                  precision=_HIGHEST) + bo_ref[...]
    o_ref[...] = (x + out.reshape(Hc, W, C)).astype(o_ref.dtype)


def _pick_h_chunk(H, W, C, itemsize, budget_bytes):
    """Largest divisor of H whose (h_chunk, W, C) block fits the byte budget.

    Keeps double-buffered in+out blocks well under v7x's 64 MiB VMEM while
    still amortizing the ~0.35 us per-grid-step overhead over big blocks.
    """
    best = 1
    for hc in range(1, H + 1):
        if H % hc == 0 and hc * W * C * itemsize <= budget_bytes:
            best = hc
    return best


def spatial_semantic_attention(x_nchw, semantic_embedding, weights, params, *,
                               block_budget_bytes=4 * 1024 * 1024):
    """Pallas forward pass. x_nchw: (B, C, H, W) float32. Returns (B, C, H, W)."""
    B, C, H, W = x_nchw.shape
    N, D = semantic_embedding.shape

    # ---- grid-invariant algebra hoisted out of the kernel (plain JAX) ----
    we = semantic_embedding * weights[:, None]                        # (N, D)
    q = jnp.dot(we, params["wq"].T, precision=_HIGHEST) + params["bq"]  # (N, C)
    q_t = q.T                                                         # (C, N)
    inv_scale = 1.0 / math.sqrt(D)
    # Fold W_k and 1/sqrt(D) into the score projection:
    #   scores = ((x @ Wk^T + bk) @ Q^T) / sqrt(D) = x @ wkq + score_bias
    wkq = jnp.dot(params["wk"].T, q_t, precision=_HIGHEST) * inv_scale       # (C, N)
    score_bias = (jnp.dot(params["bk"], q_t, precision=_HIGHEST)
                  * inv_scale)[None, :]                                      # (1, N)
    wv_t = params["wv"].T                                             # (C, C)
    bv = params["bv"][None, :]                                        # (1, C)
    # Fuse the score and V projections into one (C, N + C) matmul.
    w_fused = jnp.concatenate([wkq, wv_t], axis=1)                    # (C, N+C)
    b_fused = jnp.concatenate([score_bias, bv], axis=1)               # (1, N+C)
    wo_t = params["wo"].T                                             # (C, C)
    bo = params["bo"][None, :]                                        # (1, C)

    # Glue: NCHW -> NHWC (channels on lanes, width on sublanes).
    x = jnp.transpose(x_nchw, (0, 2, 3, 1))                           # (B, H, W, C)

    h_chunk = _pick_h_chunk(H, W, C, x.dtype.itemsize, block_budget_bytes)
    grid = (B, H // h_chunk)
    const = lambda b, hc: (0, 0)
    xmap = lambda b, hc: (b, hc, 0, 0)

    kernel = functools.partial(_ssa_kernel, num_classes=N)

    out_nhwc = pl.pallas_call(
        kernel,
        out_shape=jax.ShapeDtypeStruct((B, H, W, C), x.dtype),
        grid_spec=pltpu.PrefetchScalarGridSpec(
            num_scalar_prefetch=0,
            grid=grid,
            in_specs=[
                pl.BlockSpec((C, N + C), const),
                pl.BlockSpec((1, N + C), const),
                pl.BlockSpec((C, C), const),
                pl.BlockSpec((1, C), const),
                pl.BlockSpec((_SQUEEZED, h_chunk, W, C), xmap),
            ],
            out_specs=pl.BlockSpec((_SQUEEZED, h_chunk, W, C), xmap),
        ),
        compiler_params=pltpu.CompilerParams(
            # Reduction-free grid; both axes shardable across v7x's 2 TCs.
            dimension_semantics=("parallel", "parallel")),
    )(w_fused, b_fused, wo_t, bo, x)

    return jnp.transpose(out_nhwc, (0, 3, 1, 2))                      # NCHW


def reference(x, sem_emb, weights, params):
    """Plain-JAX port of the PyTorch forward (for verification)."""
    B, C, H, W = x.shape
    N, D = sem_emb.shape
    we = sem_emb * weights[:, None]                                   # (N, D)
    Q = jnp.dot(we, params["wq"].T, precision=_HIGHEST) + params["bq"]  # (N, C)
    K = jnp.einsum("oi,bihw->bohw", params["wk"], x,
                   precision=_HIGHEST) + params["bk"][None, :, None, None]
    V = jnp.einsum("oi,bihw->bohw", params["wv"], x,
                   precision=_HIGHEST) + params["bv"][None, :, None, None]
    scores = jnp.einsum("nc,bchw->bnhw", Q, K, precision=_HIGHEST) / math.sqrt(D)
    attn = jax.nn.softmax(scores, axis=-1)                            # softmax over W
    attn_out = V * jnp.sum(attn, axis=1)[:, None, :, :]               # (B, C, H, W)
    attn_out = jnp.einsum("oi,bihw->bohw", params["wo"], attn_out,
                          precision=_HIGHEST) + params["bo"][None, :, None, None]
    return x + attn_out


def init_params(key, in_channels, semantic_dim):
    ks = jax.random.split(key, 8)
    s = 0.2
    return {
        "wq": jax.random.normal(ks[0], (in_channels, semantic_dim), jnp.float32) * s,
        "bq": jax.random.normal(ks[1], (in_channels,), jnp.float32) * s,
        "wk": jax.random.normal(ks[2], (in_channels, in_channels), jnp.float32) * s,
        "bk": jax.random.normal(ks[3], (in_channels,), jnp.float32) * s,
        "wv": jax.random.normal(ks[4], (in_channels, in_channels), jnp.float32) * s,
        "bv": jax.random.normal(ks[5], (in_channels,), jnp.float32) * s,
        "wo": jax.random.normal(ks[6], (in_channels, in_channels), jnp.float32) * s,
        "bo": jax.random.normal(ks[7], (in_channels,), jnp.float32) * s,
    }


if __name__ == "__main__":
    B, C, H, W = 2, 4, 16, 16          # batch, in_channels, spatial
    N, D = 8, 32                       # num semantic classes, semantic_dim

    key = jax.random.PRNGKey(0)
    k_x, k_e, k_w, k_p = jax.random.split(key, 4)
    x = jax.random.normal(k_x, (B, C, H, W), jnp.float32)
    sem_emb = jax.random.normal(k_e, (N, D), jnp.float32)
    weights = jax.random.uniform(k_w, (N,), jnp.float32)
    params = init_params(k_p, C, D)

    out = jax.block_until_ready(
        spatial_semantic_attention(x, sem_emb, weights, params))
    ref = jax.block_until_ready(reference(x, sem_emb, weights, params))

    assert out.shape == (B, C, H, W)
    # Tolerance covers (a) the algebraic refactor (W_k and 1/sqrt(D) folded
    # into the fused weight) and (b) the EUP approximate reciprocal in the
    # softmax; the exact-division path matches the reference to ~1e-6.
    assert jnp.allclose(out, ref, rtol=1e-3, atol=1e-3), (
        float(jnp.max(jnp.abs(out - ref))))
    print("KERNEL_OK")
</pallas_src>

<mosaic_0001>
module attributes {stable_mosaic.version = 11 : i64} {
  func.func @_ssa_kernel(%arg0: i32, %arg1: i32, %arg2: memref<4x12xf32, #tpu.memory_space<vmem>>, %arg3: memref<1x12xf32, #tpu.memory_space<vmem>>, %arg4: memref<4x4xf32, #tpu.memory_space<vmem>>, %arg5: memref<1x4xf32, #tpu.memory_space<vmem>>, %arg6: memref<1x16x16x4xf32, #tpu.memory_space<vmem>>, %arg7: memref<1x16x16x4xf32, #tpu.memory_space<vmem>>) attributes {dimension_semantics = [#tpu.dimension_semantics<parallel>, #tpu.dimension_semantics<parallel>], iteration_bounds = array<i64: 2, 1>, scalar_prefetch = 0 : i64, scratch_operands = 0 : i64, tpu.core_type = #tpu.core_type<tc>, window_params = [{pipeline_mode = #tpu.pipeline_mode<synchronous>, transform_indices = @transform_0, window_bounds = array<i64: 4, 12>}, {pipeline_mode = #tpu.pipeline_mode<synchronous>, transform_indices = @transform_1, window_bounds = array<i64: 1, 12>}, {pipeline_mode = #tpu.pipeline_mode<synchronous>, transform_indices = @transform_2, window_bounds = array<i64: 4, 4>}, {pipeline_mode = #tpu.pipeline_mode<synchronous>, transform_indices = @transform_3, window_bounds = array<i64: 1, 4>}, {transform_indices = @transform_4, window_bounds = array<i64: 1, 16, 16, 4>}, {transform_indices = @transform_5, window_bounds = array<i64: 1, 16, 16, 4>}]} {
    %c0 = arith.constant 0 : index
    %c0_0 = arith.constant 0 : index
    %c0_1 = arith.constant 0 : index
    %c0_2 = arith.constant 0 : index
    %0 = vector.load %arg6[%c0, %c0_0, %c0_1, %c0_2] : memref<1x16x16x4xf32, #tpu.memory_space<vmem>>, vector<1x16x16x4xf32>
    %1 = vector.shape_cast %0 : vector<1x16x16x4xf32> to vector<16x16x4xf32>
    %2 = vector.shape_cast %1 : vector<16x16x4xf32> to vector<256x4xf32>
    %c0_3 = arith.constant 0 : index
    %c0_4 = arith.constant 0 : index
    %3 = vector.load %arg2[%c0_3, %c0_4] : memref<4x12xf32, #tpu.memory_space<vmem>>, vector<4x12xf32>
    %cst = arith.constant dense<0.000000e+00> : vector<256x12xf32>
    %4 = tpu.matmul %2, %3, %cst {dimension_numbers = #tpu.dot_dimension_numbers<[1], [0], [0], [1], [0, 0, 1, 1], [], []>, precision = #tpu.contract_precision<fp32>} : vector<256x4xf32>, vector<4x12xf32>, vector<256x12xf32> -> vector<256x12xf32>
    %c0_5 = arith.constant 0 : index
    %c0_6 = arith.constant 0 : index
    %5 = vector.load %arg3[%c0_5, %c0_6] : memref<1x12xf32, #tpu.memory_space<vmem>>, vector<1x12xf32>
    %6 = vector.broadcast %5 : vector<1x12xf32> to vector<256x12xf32>
    %7 = arith.addf %4, %6 : vector<256x12xf32>
    %8 = vector.extract_strided_slice %7 {offsets = [0, 0], sizes = [256, 8], strides = [1, 1]} : vector<256x12xf32> to vector<256x8xf32>
    %9 = vector.shape_cast %8 : vector<256x8xf32> to vector<16x16x8xf32>
    %10 = vector.extract_strided_slice %7 {offsets = [0, 8], sizes = [256, 4], strides = [1, 1]} : vector<256x12xf32> to vector<256x4xf32>
    %11 = vector.shape_cast %10 : vector<256x4xf32> to vector<16x16x4xf32>
    %cst_7 = arith.constant dense<0xFF800000> : vector<16x8xf32>
    %12 = vector.multi_reduction <maximumf>, %9, %cst_7 [1] : vector<16x16x8xf32> to vector<16x8xf32>
    %13 = vector.shape_cast %12 : vector<16x8xf32> to vector<16x1x8xf32>
    %14 = vector.broadcast %13 : vector<16x1x8xf32> to vector<16x16x8xf32>
    %15 = arith.subf %9, %14 : vector<16x16x8xf32>
    %16 = math.exp %15 : vector<16x16x8xf32>
    %cst_8 = arith.constant dense<0.000000e+00> : vector<16x8xf32>
    %17 = vector.multi_reduction <add>, %16, %cst_8 [1] : vector<16x16x8xf32> to vector<16x8xf32>
    %18 = vector.shape_cast %17 : vector<16x8xf32> to vector<16x1x8xf32>
    %19 = tpu.reciprocal %18 {approx = true} : vector<16x1x8xf32> -> vector<16x1x8xf32>
    %20 = vector.broadcast %19 : vector<16x1x8xf32> to vector<16x16x8xf32>
    %21 = arith.mulf %16, %20 : vector<16x16x8xf32>
    %cst_9 = arith.constant dense<0.000000e+00> : vector<16x16xf32>
    %22 = vector.multi_reduction <add>, %21, %cst_9 [2] : vector<16x16x8xf32> to vector<16x16xf32>
    %23 = vector.shape_cast %22 : vector<16x16xf32> to vector<16x16x1xf32>
    %24 = vector.broadcast %23 : vector<16x16x1xf32> to vector<16x16x4xf32>
    %25 = arith.mulf %11, %24 : vector<16x16x4xf32>
    %26 = vector.shape_cast %25 : vector<16x16x4xf32> to vector<256x4xf32>
    %c0_10 = arith.constant 0 : index
    %c0_11 = arith.constant 0 : index
    %27 = vector.load %arg4[%c0_10, %c0_11] : memref<4x4xf32, #tpu.memory_space<vmem>>, vector<4x4xf32>
    %cst_12 = arith.constant dense<0.000000e+00> : vector<256x4xf32>
    %28 = tpu.matmul %26, %27, %cst_12 {dimension_numbers = #tpu.dot_dimension_numbers<[1], [0], [0], [1], [0, 0, 1, 1], [], []>, precision = #tpu.contract_precision<fp32>} : vector<256x4xf32>, vector<4x4xf32>, vector<256x4xf32> -> vector<256x4xf32>
    %c0_13 = arith.constant 0 : index
    %c0_14 = arith.constant 0 : index
    %29 = vector.load %arg5[%c0_13, %c0_14] : memref<1x4xf32, #tpu.memory_space<vmem>>, vector<1x4xf32>
    %30 = vector.broadcast %29 : vector<1x4xf32> to vector<256x4xf32>
    %31 = arith.addf %28, %30 : vector<256x4xf32>
    %32 = vector.shape_cast %31 : vector<256x4xf32> to vector<16x16x4xf32>
    %33 = arith.addf %1, %32 : vector<16x16x4xf32>
    %c0_15 = arith.constant 0 : index
    %c0_16 = arith.constant 0 : index
    %c0_17 = arith.constant 0 : index
    %c0_18 = arith.constant 0 : index
    %34 = vector.load %arg7[%c0_15, %c0_16, %c0_17, %c0_18] : memref<1x16x16x4xf32, #tpu.memory_space<vmem>>, vector<1x16x16x4xf32>
    %35 = vector.shape_cast %34 : vector<1x16x16x4xf32> to vector<16x16x4xf32>
    %36 = vector.shape_cast %33 : vector<16x16x4xf32> to vector<1x16x16x4xf32>
    tpu.vector_store %arg7[%c0_15, %c0_16, %c0_17, %c0_18], %36 {strides = array<i32>} : memref<1x16x16x4xf32, #tpu.memory_space<vmem>>, vector<1x16x16x4xf32>,
    return
  }
  func.func @transform_0(%arg0: i32, %arg1: i32) -> (i32, i32) {
    %c0_i32 = arith.constant 0 : i32
    %c0_i32_0 = arith.constant 0 : i32
    %c0_i32_1 = arith.constant 0 : i32
    return %c0_i32, %c0_i32_0 : i32, i32
  }
  func.func @transform_1(%arg0: i32, %arg1: i32) -> (i32, i32) {
    %c0_i32 = arith.constant 0 : i32
    %c0_i32_0 = arith.constant 0 : i32
    %c0_i32_1 = arith.constant 0 : i32
    return %c0_i32, %c0_i32_0 : i32, i32
  }
  func.func @transform_2(%arg0: i32, %arg1: i32) -> (i32, i32) {
    %c0_i32 = arith.constant 0 : i32
    %c0_i32_0 = arith.constant 0 : i32
    %c0_i32_1 = arith.constant 0 : i32
    return %c0_i32, %c0_i32_0 : i32, i32
  }
  func.func @transform_3(%arg0: i32, %arg1: i32) -> (i32, i32) {
    %c0_i32 = arith.constant 0 : i32
    %c0_i32_0 = arith.constant 0 : i32
    %c0_i32_1 = arith.constant 0 : i32
    return %c0_i32, %c0_i32_0 : i32, i32
  }
  func.func @transform_4(%arg0: i32, %arg1: i32) -> (i32, i32, i32, i32) {
    %c0_i32 = arith.constant 0 : i32
    %c0_i32_0 = arith.constant 0 : i32
    %c0_i32_1 = arith.constant 0 : i32
    return %arg0, %arg1, %c0_i32, %c0_i32_0 : i32, i32, i32, i32
  }
  func.func @transform_5(%arg0: i32, %arg1: i32) -> (i32, i32, i32, i32) {
    %c0_i32 = arith.constant 0 : i32
    %c0_i32_0 = arith.constant 0 : i32
    %c0_i32_1 = arith.constant 0 : i32
    return %arg0, %arg1, %c0_i32, %c0_i32_0 : i32, i32, i32, i32
  }
}

</mosaic_0001>

<llo_original>
// kernel: tpu_custom_call.1
$region0: #{tpu_custom_call.1}
  #allocation0 [shape = 'u32[]', space=smem, size = 0x4, offset = 0x4, fixed_abs, tag = 'smem constant byte address 0x4 - core index']
  #allocation1 [shape = 'u32[144,128]{1,0:T(1,128)}', space=vmem, size = 0x12000, scoped, tag = 'internal scratch']
  %s0 = inlined_call_operand.vmem [shape: f32[4,12], index: 0, kind: input, shape index: {}]
  %s1 = inlined_call_operand.vmem [shape: f32[1,12], index: 1, kind: input, shape index: {}]
  %s2 = inlined_call_operand.vmem [shape: f32[4,4], index: 2, kind: input, shape index: {}]
  %s3 = inlined_call_operand.vmem [shape: f32[1,4], index: 3, kind: input, shape index: {}]
  %s4 = inlined_call_operand.vmem [shape: f32[2,16,16,4], index: 4, kind: input, shape index: {}]
  %s5 = inlined_call_operand.vmem [shape: f32[2,16,16,4], index: 5, kind: output, shape index: {}]
  %s6 = sld [smem:[#allocation0]]
  $region53: #{tpu_custom_call.1} parent=0
    _
  %s8 = ssub.s32 1, %s6
  %s9 = scalar_select 0, %s8, %s6
  loop: start=0, step=1, limit=4
  $region2: #{tpu_custom_call.1} parent=0 // loop_pre_header
    _
  $region3: #{tpu_custom_call.1} parent=0 // loop_header
    %s11 = sphi 0, %s15
    %p12 = scmp.ge.s32.totalorder %s11, 4
    %s18 = sphi 0, %s30
    %s19 = sphi 0, %s26
    %s20 = sphi 0, %s18
    %s21 = sphi 0, %s19
    %s22 = sphi 0, %s20
    %s23 = sphi 0, %s21
    %s31 = sphi 0, %s31
    %s33 = sphi 0, %s31
    %s34 = sphi 0, %s33
    %s48 = sphi 0, %s34
    %s52 = sphi 0, %s52
    %s54 = sphi 0, %s52
    %s55 = sphi 0, %s54
    %s69 = sphi 0, %s55
    %s73 = sphi 0, %s73
    %s75 = sphi 0, %s73
    %s76 = sphi 0, %s75
    %s90 = sphi 0, %s76
    %s94 = sphi 0, %s94
    %s96 = sphi 0, %s94
    %s97 = sphi 0, %s96
    %s111 = sphi 0, %s97
    %s119 = sphi 0, %s121
    %s122 = sphi 0, %s119
    %s123 = sphi 0, %s122
    %s139 = sphi 0, %s123
    %s147 = sphi 0, %s149
    %s150 = sphi 0, %s147
    %s151 = sphi 0, %s150
    %s167 = sphi 0, %s151
  $region4: #{tpu_custom_call.1} parent=0 // loop_header_branch
    %14 = sbr.rel (%p12) target = $region8
  $region5: #{tpu_custom_call.1} parent=0 // loop_body
    %s16 = ssub.s32 %s11, 1
    %s17 = ssub.s32 %s11, 2
    %s24 = sadd.s32 1, %s19
    %p25 = scmp.ge.s32.totalorder %s24, 1
    %s26 = scalar_select %p25, 0, %s24
    %s27 = sadd.s32 1, %s18
    %s28 = scalar_select %p25, %s27, %s18
    %p29 = scmp.ge.s32.totalorder %s28, 2
    %s30 = scalar_select %p29, 0, %s28
    %s32 = sadd.s32 %s31, 1
    %p35 = scmp.eq.s32.totalorder %s11, 1
    %p36 = scmp.ne.s32.totalorder %s31, %s33
    %p37 = scmp.eq.s32.totalorder %s11, 0
    %p38 = por %p36, %p37
    %p39 = scmp.ne.s32.totalorder %s31, %s33
    %p40 = scmp.eq.s32.totalorder %s16, 1
    %p41 = por %p39, %p40
    %p42 = scmp.ne.s32.totalorder %s33, %s34
    %p43 = scmp.eq.s32.totalorder %s16, 0
    %p44 = por %p42, %p43
    %p45 = scmp.ne.s32.totalorder %s33, %s34
    %p46 = scmp.eq.s32.totalorder %s17, 1
    %p47 = por %p45, %p46
    %p49 = scmp.ne.s32.totalorder %s34, %s48
    %p50 = scmp.eq.s32.totalorder %s17, 0
    %p51 = por %p49, %p50
    %s53 = sadd.s32 %s52, 1
    %p56 = scmp.eq.s32.totalorder %s11, 1
    %p57 = scmp.ne.s32.totalorder %s52, %s54
    %p58 = scmp.eq.s32.totalorder %s11, 0
    %p59 = por %p57, %p58
    %p60 = scmp.ne.s32.totalorder %s52, %s54
    %p61 = scmp.eq.s32.totalorder %s16, 1
    %p62 = por %p60, %p61
    %p63 = scmp.ne.s32.totalorder %s54, %s55
    %p64 = scmp.eq.s32.totalorder %s16, 0
    %p65 = por %p63, %p64
    %p66 = scmp.ne.s32.totalorder %s54, %s55
    %p67 = scmp.eq.s32.totalorder %s17, 1
    %p68 = por %p66, %p67
    %p70 = scmp.ne.s32.totalorder %s55, %s69
    %p71 = scmp.eq.s32.totalorder %s17, 0
    %p72 = por %p70, %p71
    %s74 = sadd.s32 %s73, 1
    %p77 = scmp.eq.s32.totalorder %s11, 1
    %p78 = scmp.ne.s32.totalorder %s73, %s75
    %p79 = scmp.eq.s32.totalorder %s11, 0
    %p80 = por %p78, %p79
    %p81 = scmp.ne.s32.totalorder %s73, %s75
    %p82 = scmp.eq.s32.totalorder %s16, 1
    %p83 = por %p81, %p82
    %p84 = scmp.ne.s32.totalorder %s75, %s76
    %p85 = scmp.eq.s32.totalorder %s16, 0
    %p86 = por %p84, %p85
    %p87 = scmp.ne.s32.totalorder %s75, %s76
    %p88 = scmp.eq.s32.totalorder %s17, 1
    %p89 = por %p87, %p88
    %p91 = scmp.ne.s32.totalorder %s76, %s90
    %p92 = scmp.eq.s32.totalorder %s17, 0
    %p93 = por %p91, %p92
    %s95 = sadd.s32 %s94, 1
    %p98 = scmp.eq.s32.totalorder %s11, 1
    %p99 = scmp.ne.s32.totalorder %s94, %s96
    %p100 = scmp.eq.s32.totalorder %s11, 0
    %p101 = por %p99, %p100
    %p102 = scmp.ne.s32.totalorder %s94, %s96
    %p103 = scmp.eq.s32.totalorder %s16, 1
    %p104 = por %p102, %p103
    %p105 = scmp.ne.s32.totalorder %s96, %s97
    %p106 = scmp.eq.s32.totalorder %s16, 0
    %p107 = por %p105, %p106
    %p108 = scmp.ne.s32.totalorder %s96, %s97
    %p109 = scmp.eq.s32.totalorder %s17, 1
    %p110 = por %p108, %p109
    %p112 = scmp.ne.s32.totalorder %s97, %s111
    %p113 = scmp.eq.s32.totalorder %s17, 0
    %p114 = por %p112, %p113
    %s115 = ssub.s32 %s18, %s30
    %s116 = ssub.s32 %s19, %s26
    %s117 = sor.u32 %s115, %s116
    %p118 = scmp.eq.s32.totalorder %s117, 0
    %s120 = sadd.s32 %s119, 1
    %s121 = scalar_select %p118, %s119, %s120
    %p124 = pneg %p118
    %p125 = scmp.eq.s32.totalorder %s11, 1
    %p126 = por %p124, %p125
    %p127 = scmp.ne.s32.totalorder %s119, %s122
    %p128 = scmp.eq.s32.totalorder %s11, 0
    %p129 = por %p127, %p128
    %p130 = scmp.ne.s32.totalorder %s119, %s122
    %p131 = scmp.eq.s32.totalorder %s16, 1
    %p132 = por %p130, %p131
    %p133 = scmp.ne.s32.totalorder %s122, %s123
    %p134 = scmp.eq.s32.totalorder %s16, 0
    %p135 = por %p133, %p134
    %p136 = scmp.ne.s32.totalorder %s122, %s123
    %p137 = scmp.eq.s32.totalorder %s17, 1
    %p138 = por %p136, %p137
    %p140 = scmp.ne.s32.totalorder %s123, %s139
    %p141 = scmp.eq.s32.totalorder %s17, 0
    %p142 = por %p140, %p141
    %s143 = ssub.s32 %s18, %s30
    %s144 = ssub.s32 %s19, %s26
    %s145 = sor.u32 %s143, %s144
    %p146 = scmp.eq.s32.totalorder %s145, 0
    %s148 = sadd.s32 %s147, 1
    %s149 = scalar_select %p146, %s147, %s148
    %p152 = pneg %p146
    %p153 = scmp.eq.s32.totalorder %s11, 1
    %p154 = por %p152, %p153
    %p155 = scmp.ne.s32.totalorder %s147, %s150
    %p156 = scmp.eq.s32.totalorder %s11, 0
    %p157 = por %p155, %p156
    %p158 = scmp.ne.s32.totalorder %s147, %s150
    %p159 = scmp.eq.s32.totalorder %s16, 1
    %p160 = por %p158, %p159
    %p161 = scmp.ne.s32.totalorder %s150, %s151
    %p162 = scmp.eq.s32.totalorder %s16, 0
    %p163 = por %p161, %p162
    %p164 = scmp.ne.s32.totalorder %s150, %s151
    %p165 = scmp.eq.s32.totalorder %s17, 1
    %p166 = por %p164, %p165
    %p168 = scmp.ne.s32.totalorder %s151, %s167
    %p169 = scmp.eq.s32.totalorder %s17, 0
    %p170 = por %p168, %p169
    %p171 = scmp.le.s32.totalorder 1, %s11
    %p172 = scmp.lt.s32.totalorder %s11, 3
    %p173 = pnand %p171, %p172
    %p174 = pneg %p173
    // Predicated region
    $region9: #{tpu_custom_call.1} parent=5 // pred_check
      _
    $region10: #{tpu_custom_call.1} parent=5 // pred_check_branch
      %176 = sbr.rel (%p173) target = $region12
    $region11: #{tpu_custom_call.1} parent=5 // pred_region
      %s177 = ssub.s32 %s11, 1
      // Predicated region
      $region13: #{tpu_custom_call.1} parent=11 // pred_check
        %p178 = pneg %p44
      $region14: #{tpu_custom_call.1} parent=11 // pred_check_branch
        %180 = sbr.rel (%p178) target = $region16
      $region15: #{tpu_custom_call.1} parent=11 // pred_region
        _
      $region16: #{tpu_custom_call.1} parent=11 // pred_fallthru
        _
      // Predicated region
      $region17: #{tpu_custom_call.1} parent=11 // pred_check
        %p181 = pneg %p65
      $region18: #{tpu_custom_call.1} parent=11 // pred_check_branch
        %183 = sbr.rel (%p181) target = $region20
      $region19: #{tpu_custom_call.1} parent=11 // pred_region
        _
      $region20: #{tpu_custom_call.1} parent=11 // pred_fallthru
        _
      // Predicated region
      $region21: #{tpu_custom_call.1} parent=11 // pred_check
        %p184 = pneg %p86
      $region22: #{tpu_custom_call.1} parent=11 // pred_check_branch
        %186 = sbr.rel (%p184) target = $region24
      $region23: #{tpu_custom_call.1} parent=11 // pred_region
        _
      $region24: #{tpu_custom_call.1} parent=11 // pred_fallthru
        _
      // Predicated region
      $region25: #{tpu_custom_call.1} parent=11 // pred_check
        %p187 = pneg %p107
      $region26: #{tpu_custom_call.1} parent=11 // pred_check_branch
        %189 = sbr.rel (%p187) target = $region28
      $region27: #{tpu_custom_call.1} parent=11 // pred_region
        _
      $region28: #{tpu_custom_call.1} parent=11 // pred_fallthru
        _
    $region12: #{tpu_custom_call.1} parent=5 // pred_fallthru
      _
    %p190 = scmp.lt.s32.totalorder %s11, 2
    // Predicated region
    $region29: #{tpu_custom_call.1} parent=5 // pred_check
      %p191 = pneg %p190
    $region30: #{tpu_custom_call.1} parent=5 // pred_check_branch
      %193 = sbr.rel (%p191) target = $region32
    $region31: #{tpu_custom_call.1} parent=5 // pred_region
      // Predicated region
      $region33: #{tpu_custom_call.1} parent=31 // pred_check
        %p194 = pneg %p129
      $region34: #{tpu_custom_call.1} parent=31 // pred_check_branch
        %196 = sbr.rel (%p194) target = $region36
      $region35: #{tpu_custom_call.1} parent=31 // pred_region
        %s197 = smul.u32 16, %s19
        %p198 = scmp.lt.s32.totalorder %s18, 1
        %s199 = scalar_select %p198, %s18, 1
        %p200 = scmp.lt.s32.totalorder %s197, 15
        %s201 = scalar_select %p200, %s197, 15
        %s202 = smul.addr %s201, 2
        %s203 = smul.addr %s199, 32
        %s204 = sadd.s32 %s202, %s203
        %s205 = smul.addr %s204, 8
        %s206 = scalar_lea.vmem %s4, %s205
        %s207 = smul.u32 16, %s19
      $region36: #{tpu_custom_call.1} parent=31 // pred_fallthru
        _
    $region32: #{tpu_custom_call.1} parent=5 // pred_fallthru
      _
    %p208 = scmp.le.s32.totalorder 1, %s11
    %p209 = scmp.lt.s32.totalorder %s11, 3
    %p210 = pnand %p208, %p209
    %p211 = pneg %p210
    // Predicated region
    $region37: #{tpu_custom_call.1} parent=5 // pred_check
      _
    $region38: #{tpu_custom_call.1} parent=5 // pred_check_branch
      %213 = sbr.rel (%p210) target = $region40
    $region39: #{tpu_custom_call.1} parent=5 // pred_region
      %s214 = ssub.s32 %s11, 1
      %p215 = pneg %p44
      %p216 = pneg %p41
      %p217 = pneg %p65
      %p218 = pneg %p62
      %p219 = pneg %p86
      %p220 = pneg %p83
      %p221 = pneg %p107
      %p222 = pneg %p104
      %s223 = smul.u32 16, %s21
      %p224 = scmp.lt.s32.totalorder %s20, 1
      %s225 = scalar_select %p224, %s20, 1
      %p226 = scmp.lt.s32.totalorder %s223, 15
      %s227 = scalar_select %p226, %s223, 15
      %s228 = smul.addr %s227, 2
      %s229 = smul.addr %s225, 32
      %s230 = sadd.s32 %s228, %s229
      %s231 = smul.addr %s230, 8
      %s232 = scalar_lea.vmem %s4, %s231
      %p233 = pneg %p135
      %p234 = pneg %p132
      %p235 = pneg %p163
      %p236 = pneg %p160
      %s237 = smul.u32 16, %s21
      %p238 = scmp.lt.s32.totalorder %s20, 1
      %s239 = scalar_select %p238, %s20, 1
      %p240 = scmp.lt.s32.totalorder %s237, 15
      %s241 = scalar_select %p240, %s237, 15
      %s242 = smul.addr %s241, 2
      %s243 = smul.addr %s239, 32
      %s244 = sadd.s32 %s242, %s243
      %s245 = smul.addr %s244, 8
      %s246 = scalar_lea.vmem %s5, %s245
      %s247 = smul.u32 16, %s21
      %p248 = scmp.lt.s32.totalorder %s20, 1
      %s249 = scalar_select %p248, %s20, 1
      %p250 = scmp.lt.s32.totalorder %s247, 15
      %s251 = scalar_select %p250, %s247, 15
      %s252 = smul.addr %s251, 2
      %s253 = smul.addr %s249, 32
      %s254 = sadd.s32 %s252, %s253
      %s255 = smul.addr %s254, 8
      %s256 = scalar_lea.vmem %s4, %s255
      %s257 = smul.u32 16, %s21
      %s258 = smul.u32 16, %s21
      %p259 = scmp.lt.s32.totalorder %s20, 1
      %s260 = scalar_select %p259, %s20, 1
      %p261 = scmp.lt.s32.totalorder %s258, 15
      %s262 = scalar_select %p261, %s258, 15
      %s263 = smul.addr %s262, 2
      %s264 = smul.addr %s260, 32
      %s265 = sadd.s32 %s263, %s264
      %s266 = smul.addr %s265, 8
      %s267 = scalar_lea.vmem %s5, %s266
      %s268 = smul.u32 16, %s21
      %v269 = vld [vmem:[%s256] sm:$0xff]
      %v270 = vld [vmem:[%s256 + $0x8] sm:$0xff]
      %v271 = vld [vmem:[%s256 + $0x10] sm:$0xff]
      %v272 = vld [vmem:[%s256 + $0x18] sm:$0xff]
      %v273 = vld [vmem:[%s256 + $0x20] sm:$0xff]
      %v274 = vld [vmem:[%s256 + $0x28] sm:$0xff]
      %v275 = vld [vmem:[%s256 + $0x30] sm:$0xff]
      %v276 = vld [vmem:[%s256 + $0x38] sm:$0xff]
      %v277 = vld [vmem:[%s256 + $0x40] sm:$0xff]
      %v278 = vld [vmem:[%s256 + $0x48] sm:$0xff]
      %v279 = vld [vmem:[%s256 + $0x50] sm:$0xff]
      %v280 = vld [vmem:[%s256 + $0x58] sm:$0xff]
      %v281 = vld [vmem:[%s256 + $0x60] sm:$0xff]
      %v282 = vld [vmem:[%s256 + $0x68] sm:$0xff]
      %v283 = vld [vmem:[%s256 + $0x70] sm:$0xff]
      %v284 = vld [vmem:[%s256 + $0x78] sm:$0xff]
      %v285 = vld [vmem:[%s256 + $0x80] sm:$0xff]
      %v286 = vld [vmem:[%s256 + $0x88] sm:$0xff]
      %v287 = vld [vmem:[%s256 + $0x90] sm:$0xff]
      %v288 = vld [vmem:[%s256 + $0x98] sm:$0xff]
      %v289 = vld [vmem:[%s256 + $0xa0] sm:$0xff]
      %v290 = vld [vmem:[%s256 + $0xa8] sm:$0xff]
      %v291 = vld [vmem:[%s256 + $0xb0] sm:$0xff]
      %v292 = vld [vmem:[%s256 + $0xb8] sm:$0xff]
      %v293 = vld [vmem:[%s256 + $0xc0] sm:$0xff]
      %v294 = vld [vmem:[%s256 + $0xc8] sm:$0xff]
      %v295 = vld [vmem:[%s256 + $0xd0] sm:$0xff]
      %v296 = vld [vmem:[%s256 + $0xd8] sm:$0xff]
      %v297 = vld [vmem:[%s256 + $0xe0] sm:$0xff]
      %v298 = vld [vmem:[%s256 + $0xe8] sm:$0xff]
      %v299 = vld [vmem:[%s256 + $0xf0] sm:$0xff]
      %v300 = vld [vmem:[%s256 + $0xf8] sm:$0xff]
      %v301 = vld [vmem:[%s0] sm:$0xf]
      %v302 = vld [vmem:[%s1] sm:$0x1]
      %v304 = vlaneseq
      %v305 = vshrl.u32 %v304, 7
      %v306 = vsub.s32 0, %v305
      %v307 = vrot.slane %v302, %v306
      %vm309 = vcmask 31744
      %v311 = vsel %vm309, %v269, 0
      %v314 = vsel %vm309, %v270, 0
      %v317 = vsel %vm309, %v271, 0
      %v320 = vsel %vm309, %v272, 0
      %v323 = vsel %vm309, %v273, 0
      %v326 = vsel %vm309, %v274, 0
      %v329 = vsel %vm309, %v275, 0
      %v332 = vsel %vm309, %v276, 0
      %v335 = vsel %vm309, %v277, 0
      %v338 = vsel %vm309, %v278, 0
      %v341 = vsel %vm309, %v279, 0
      %v344 = vsel %vm309, %v280, 0
      %v347 = vsel %vm309, %v281, 0
      %v350 = vsel %vm309, %v282, 0
      %v353 = vsel %vm309, %v283, 0
      %v356 = vsel %vm309, %v284, 0
      %v359 = vsel %vm309, %v285, 0
      %v362 = vsel %vm309, %v286, 0
      %v365 = vsel %vm309, %v287, 0
      %v368 = vsel %vm309, %v288, 0
      %v371 = vsel %vm309, %v289, 0
      %v374 = vsel %vm309, %v290, 0
      %v377 = vsel %vm309, %v291, 0
      %v380 = vsel %vm309, %v292, 0
      %v383 = vsel %vm309, %v293, 0
      %v386 = vsel %vm309, %v294, 0
      %v389 = vsel %vm309, %v295, 0
      %v392 = vsel %vm309, %v296, 0
      %v395 = vsel %vm309, %v297, 0
      %v398 = vsel %vm309, %v298, 0
      %v401 = vsel %vm309, %v299, 0
      %v404 = vsel %vm309, %v300, 0
      %vm406 = vcmask 1043456
      %v408 = vsel %vm406, %v301, 0
      %410 = vmatprep.subr.mxu0 0.0
      %v411 = vand.u32 %v408, 4294901760
      %412 = vmatpush1.msra.mxu0 %v411
      %413 = vmatprep.subr.mxu0 0.0
      %414 = vmatpush1.msra.mxu0 0.0
      %415 = vmatprep.subr.mxu0 0.0
      %416 = vmatpush1.msra.mxu0 0.0
      %417 = vmatprep.subr.mxu0 0.0
      %418 = vmatpush1.msra.mxu0 0.0
      %419 = vmatprep.subr.mxu0 0.0
      %420 = vmatpush1.msra.mxu0 0.0
      %421 = vmatprep.subr.mxu0 0.0
      %422 = vmatpush1.msra.mxu0 0.0
      %423 = vmatprep.subr.mxu0 0.0
      %424 = vmatpush1.msra.mxu0 0.0
      %425 = vmatprep.subr.mxu0 0.0
      %426 = vmatpush1.msra.mxu0 0.0
      %427 = vmatprep.subr.mxu0 0.0
      %428 = vmatpush1.msra.mxu0 0.0
      %429 = vmatprep.subr.mxu0 0.0
      %430 = vmatpush1.msra.mxu0 0.0
      %431 = vmatprep.subr.mxu0 0.0
      %432 = vmatpush1.msra.mxu0 0.0
      %433 = vmatprep.subr.mxu0 0.0
      %434 = vmatpush1.msra.mxu0 0.0
      %435 = vmatprep.subr.mxu0 0.0
      %436 = vmatpush1.msra.mxu0 0.0
      %437 = vmatprep.subr.mxu0 0.0
      %438 = vmatpush1.msra.mxu0 0.0
      %439 = vmatprep.subr.mxu0 0.0
      %440 = vmatpush1.msra.mxu0 0.0
      %441 = vmatprep.subr.mxu0 0.0
      %442 = vmatpush1.msra.mxu0 0.0
      %443 = vmatprep.subr.mxu0 0.0
      %444 = vmatpush1.msra.mxu0 0.0
      %445 = vmatprep.subr.mxu0 0.0
      %446 = vmatpush1.msra.mxu0 0.0
      %447 = vmatprep.subr.mxu0 0.0
      %448 = vmatpush1.msra.mxu0 0.0
      %449 = vmatprep.subr.mxu0 0.0
      %450 = vmatpush1.msra.mxu0 0.0
      %451 = vmatprep.subr.mxu0 0.0
      %452 = vmatpush1.msra.mxu0 0.0
      %453 = vmatprep.subr.mxu0 0.0
      %454 = vmatpush1.msra.mxu0 0.0
      %455 = vmatprep.subr.mxu0 0.0
      %456 = vmatpush1.msra.mxu0 0.0
      %457 = vmatprep.subr.mxu0 0.0
      %458 = vmatpush1.msra.mxu0 0.0
      %459 = vmatprep.subr.mxu0 0.0
      %460 = vmatpush1.msra.mxu0 0.0
      %461 = vmatprep.subr.mxu0 0.0
      %462 = vmatpush1.msra.mxu0 0.0
      %463 = vmatprep.subr.mxu0 0.0
      %464 = vmatpush1.msra.mxu0 0.0
      %465 = vmatprep.subr.mxu0 0.0
      %466 = vmatpush1.msra.mxu0 0.0
      %467 = vmatprep.subr.mxu0 0.0
      %468 = vmatpush1.msra.mxu0 0.0
      %469 = vmatprep.subr.mxu0 0.0
      %470 = vmatpush1.msra.mxu0 0.0
      %471 = vmatprep.subr.mxu0 0.0
      %472 = vmatpush1.msra.mxu0 0.0
      %473 = vmatprep.subr.mxu0 0.0
      %474 = vmatpush1.msra.mxu0 0.0
      %475 = vmatprep.mubr.f32.mxu0 0.0
      %v476 = vand.u32 %v311, 4294901760
      %v477 = vsub.f32 %v311, %v476
      %v478 = vand.u32 %v477, 4294901760
      %v479 = vsub.f32 %v477, %v478
      %v480 = vand.u32 %v479, 4294901760
      %481 = vmatmul.mubr.f32.gmra.mrb[0].mxu0 %v480
      %v482 = vpop.f32.mrb[0].mxu0
      %v483 = vadd.f32 %v307, %v482
      %v484 = vpop.f32.mrb[0].mxu0
      %485 = vmatprep.mubr.f32.mxu0 0.0
      %v486 = vand.u32 %v314, 4294901760
      %v487 = vsub.f32 %v314, %v486
      %v488 = vand.u32 %v487, 4294901760
      %v489 = vsub.f32 %v487, %v488
      %v490 = vand.u32 %v489, 4294901760
      %491 = vmatmul.mubr.f32.gmra.mrb[0].mxu0 %v490
      %v492 = vpop.f32.mrb[0].mxu0
      %v493 = vadd.f32 %v307, %v492
      %v494 = vpop.f32.mrb[0].mxu0
      %495 = vmatprep.mubr.f32.mxu0 0.0
      %v496 = vand.u32 %v317, 4294901760
      %v497 = vsub.f32 %v317, %v496
      %v498 = vand.u32 %v497, 4294901760
      %v499 = vsub.f32 %v497, %v498
      %v500 = vand.u32 %v499, 4294901760
      %501 = vmatmul.mubr.f32.gmra.mrb[0].mxu0 %v500
      %v502 = vpop.f32.mrb[0].mxu0
      %v503 = vadd.f32 %v307, %v502
      %v504 = vpop.f32.mrb[0].mxu0
      %505 = vmatprep.mubr.f32.mxu0 0.0
      %v506 = vand.u32 %v320, 4294901760
      %v507 = vsub.f32 %v320, %v506
      %v508 = vand.u32 %v507, 4294901760
      %v509 = vsub.f32 %v507, %v508
      %v510 = vand.u32 %v509, 4294901760
      %511 = vmatmul.mubr.f32.gmra.mrb[0].mxu0 %v510
      %v512 = vpop.f32.mrb[0].mxu0
      %v513 = vadd.f32 %v307, %v512
      %v514 = vpop.f32.mrb[0].mxu0
      %515 = vmatprep.mubr.f32.mxu0 0.0
      %v516 = vand.u32 %v323, 4294901760
      %v517 = vsub.f32 %v323, %v516
      %v518 = vand.u32 %v517, 4294901760
      %v519 = vsub.f32 %v517, %v518
      %v520 = vand.u32 %v519, 4294901760
      %521 = vmatmul.mubr.f32.gmra.mrb[0].mxu0 %v520
      %v522 = vpop.f32.mrb[0].mxu0
      %v523 = vadd.f32 %v307, %v522
      %v524 = vpop.f32.mrb[0].mxu0
      %525 = vmatprep.mubr.f32.mxu0 0.0
      %v526 = vand.u32 %v326, 4294901760
      %v527 = vsub.f32 %v326, %v526
      %v528 = vand.u32 %v527, 4294901760
      %v529 = vsub.f32 %v527, %v528
      %v530 = vand.u32 %v529, 4294901760
      %531 = vmatmul.mubr.f32.gmra.mrb[0].mxu0 %v530
      %v532 = vpop.f32.mrb[0].mxu0
      %v533 = vadd.f32 %v307, %v532
      %v534 = vpop.f32.mrb[0].mxu0
      %535 = vmatprep.mubr.f32.mxu0 0.0
      %v536 = vand.u32 %v329, 4294901760
      %v537 = vsub.f32 %v329, %v536
      %v538 = vand.u32 %v537, 4294901760
      %v539 = vsub.f32 %v537, %v538
      %v540 = vand.u32 %v539, 4294901760
      %541 = vmatmul.mubr.f32.gmra.mrb[0].mxu0 %v540
      %v542 = vpop.f32.mrb[0].mxu0
      %v543 = vadd.f32 %v307, %v542
      %v544 = vpop.f32.mrb[0].mxu0
      %545 = vmatprep.mubr.f32.mxu0 0.0
      %v546 = vand.u32 %v332, 4294901760
      %v547 = vsub.f32 %v332, %v546
      %v548 = vand.u32 %v547, 4294901760
      %v549 = vsub.f32 %v547, %v548
      %v550 = vand.u32 %v549, 4294901760
      %551 = vmatmul.mubr.f32.gmra.mrb[0].mxu0 %v550
      %v552 = vpop.f32.mrb[0].mxu0
      %v553 = vadd.f32 %v307, %v552
      %v554 = vpop.f32.mrb[0].mxu0
      %555 = vmatprep.mubr.f32.mxu0 0.0
      %v556 = vand.u32 %v335, 4294901760
      %v557 = vsub.f32 %v335, %v556
      %v558 = vand.u32 %v557, 4294901760
      %v559 = vsub.f32 %v557, %v558
      %v560 = vand.u32 %v559, 4294901760
      %561 = vmatmul.mubr.f32.gmra.mrb[0].mxu0 %v560
      %v562 = vpop.f32.mrb[0].mxu0
      %v563 = vadd.f32 %v307, %v562
      %v564 = vpop.f32.mrb[0].mxu0
      %565 = vmatprep.mubr.f32.mxu0 0.0
      %v566 = vand.u32 %v338, 4294901760
      %v567 = vsub.f32 %v338, %v566
      %v568 = vand.u32 %v567, 4294901760
      %v569 = vsub.f32 %v567, %v568
      %v570 = vand.u32 %v569, 4294901760
      %571 = vmatmul.mubr.f32.gmra.mrb[0].mxu0 %v570
      %v572 = vpop.f32.mrb[0].mxu0
      %v573 = vadd.f32 %v307, %v572
      %v574 = vpop.f32.mrb[0].mxu0
      %575 = vmatprep.mubr.f32.mxu0 0.0
      %v576 = vand.u32 %v341, 4294901760
      %v577 = vsub.f32 %v341, %v576
      %v578 = vand.u32 %v577, 4294901760
      %v579 = vsub.f32 %v577, %v578
      %v580 = vand.u32 %v579, 4294901760
      %581 = vmatmul.mubr.f32.gmra.mrb[0].mxu0 %v580
      %v582 = vpop.f32.mrb[0].mxu0
      %v583 = vadd.f32 %v307, %v582
      %v584 = vpop.f32.mrb[0].mxu0
      %585 = vmatprep.mubr.f32.mxu0 0.0
      %v586 = vand.u32 %v344, 4294901760
      %v587 = vsub.f32 %v344, %v586
      %v588 = vand.u32 %v587, 4294901760
      %v589 = vsub.f32 %v587, %v588
      %v590 = vand.u32 %v589, 4294901760
      %591 = vmatmul.mubr.f32.gmra.mrb[0].mxu0 %v590
      %v592 = vpop.f32.mrb[0].mxu0
      %v593 = vadd.f32 %v307, %v592
      %v594 = vpop.f32.mrb[0].mxu0
      %595 = vmatprep.mubr.f32.mxu0 0.0
      %v596 = vand.u32 %v347, 4294901760
      %v597 = vsub.f32 %v347, %v596
      %v598 = vand.u32 %v597, 4294901760
      %v599 = vsub.f32 %v597, %v598
      %v600 = vand.u32 %v599, 4294901760
      %601 = vmatmul.mubr.f32.gmra.mrb[0].mxu0 %v600
      %v602 = vpop.f32.mrb[0].mxu0
      %v603 = vadd.f32 %v307, %v602
      %v604 = vpop.f32.mrb[0].mxu0
      %605 = vmatprep.mubr.f32.mxu0 0.0
      %v606 = vand.u32 %v350, 4294901760
      %v607 = vsub.f32 %v350, %v606
      %v608 = vand.u32 %v607, 4294901760
      %v609 = vsub.f32 %v607, %v608
      %v610 = vand.u32 %v609, 4294901760
      %611 = vmatmul.mubr.f32.gmra.mrb[0].mxu0 %v610
      %v612 = vpop.f32.mrb[0].mxu0
      %v613 = vadd.f32 %v307, %v612
      %v614 = vpop.f32.mrb[0].mxu0
      %615 = vmatprep.mubr.f32.mxu0 0.0
      %v616 = vand.u32 %v353, 4294901760
      %v617 = vsub.f32 %v353, %v616
      %v618 = vand.u32 %v617, 4294901760
      %v619 = vsub.f32 %v617, %v618
      %v620 = vand.u32 %v619, 4294901760
      %621 = vmatmul.mubr.f32.gmra.mrb[0].mxu0 %v620
      %v622 = vpop.f32.mrb[0].mxu0
      %v623 = vadd.f32 %v307, %v622
      %v624 = vpop.f32.mrb[0].mxu0
      %625 = vmatprep.mubr.f32.mxu0 0.0
      %v626 = vand.u32 %v356, 4294901760
      %v627 = vsub.f32 %v356, %v626
      %v628 = vand.u32 %v627, 4294901760
      %v629 = vsub.f32 %v627, %v628
      %v630 = vand.u32 %v629, 4294901760
      %631 = vmatmul.mubr.f32.gmra.mrb[0].mxu0 %v630
      %v632 = vpop.f32.mrb[0].mxu0
      %v633 = vadd.f32 %v307, %v632
      %v634 = vpop.f32.mrb[0].mxu0
      %635 = vmatprep.mubr.f32.mxu0 0.0
      %v636 = vand.u32 %v359, 4294901760
      %v637 = vsub.f32 %v359, %v636
      %v638 = vand.u32 %v637, 4294901760
      %v639 = vsub.f32 %v637, %v638
      %v640 = vand.u32 %v639, 4294901760
      %641 = vmatmul.mubr.f32.gmra.mrb[0].mxu0 %v640
      %v642 = vpop.f32.mrb[0].mxu0
      %v643 = vadd.f32 %v307, %v642
      %v644 = vpop.f32.mrb[0].mxu0
      %645 = vmatprep.mubr.f32.mxu0 0.0
      %v646 = vand.u32 %v362, 4294901760
      %v647 = vsub.f32 %v362, %v646
      %v648 = vand.u32 %v647, 4294901760
      %v649 = vsub.f32 %v647, %v648
      %v650 = vand.u32 %v649, 4294901760
      %651 = vmatmul.mubr.f32.gmra.mrb[0].mxu0 %v650
      %v652 = vpop.f32.mrb[0].mxu0
      %v653 = vadd.f32 %v307, %v652
      %v654 = vpop.f32.mrb[0].mxu0
      %655 = vmatprep.mubr.f32.mxu0 0.0
      %v656 = vand.u32 %v365, 4294901760
      %v657 = vsub.f32 %v365, %v656
      %v658 = vand.u32 %v657, 4294901760
      %v659 = vsub.f32 %v657, %v658
      %v660 = vand.u32 %v659, 4294901760
      %661 = vmatmul.mubr.f32.gmra.mrb[0].mxu0 %v660
      %v662 = vpop.f32.mrb[0].mxu0
      %v663 = vadd.f32 %v307, %v662
      %v664 = vpop.f32.mrb[0].mxu0
      %665 = vmatprep.mubr.f32.mxu0 0.0
      %v666 = vand.u32 %v368, 4294901760
      %v667 = vsub.f32 %v368, %v666
      %v668 = vand.u32 %v667, 4294901760
      %v669 = vsub.f32 %v667, %v668
      %v670 = vand.u32 %v669, 4294901760
      %671 = vmatmul.mubr.f32.gmra.mrb[0].mxu0 %v670
      %v672 = vpop.f32.mrb[0].mxu0
      %v673 = vadd.f32 %v307, %v672
      %v674 = vpop.f32.mrb[0].mxu0
      %675 = vmatprep.mubr.f32.mxu0 0.0
      %v676 = vand.u32 %v371, 4294901760
      %v677 = vsub.f32 %v371, %v676
      %v678 = vand.u32 %v677, 4294901760
      %v679 = vsub.f32 %v677, %v678
      %v680 = vand.u32 %v679, 4294901760
      %681 = vmatmul.mubr.f32.gmra.mrb[0].mxu0 %v680
      %v682 = vpop.f32.mrb[0].mxu0
      %v683 = vadd.f32 %v307, %v682
      %v684 = vpop.f32.mrb[0].mxu0
      %685 = vmatprep.mubr.f32.mxu0 0.0
      %v686 = vand.u32 %v374, 4294901760
      %v687 = vsub.f32 %v374, %v686
      %v688 = vand.u32 %v687, 4294901760
      %v689 = vsub.f32 %v687, %v688
      %v690 = vand.u32 %v689, 4294901760
      %691 = vmatmul.mubr.f32.gmra.mrb[0].mxu0 %v690
      %v692 = vpop.f32.mrb[0].mxu0
      %v693 = vadd.f32 %v307, %v692
      %v694 = vpop.f32.mrb[0].mxu0
      %695 = vmatprep.mubr.f32.mxu0 0.0
      %v696 = vand.u32 %v377, 4294901760
      %v697 = vsub.f32 %v377, %v696
      %v698 = vand.u32 %v697, 4294901760
      %v699 = vsub.f32 %v697, %v698
      %v700 = vand.u32 %v699, 4294901760
      %701 = vmatmul.mubr.f32.gmra.mrb[0].mxu0 %v700
      %v702 = vpop.f32.mrb[0].mxu0
      %v703 = vadd.f32 %v307, %v702
      %v704 = vpop.f32.mrb[0].mxu0
      %705 = vmatprep.mubr.f32.mxu0 0.0
      %v706 = vand.u32 %v380, 4294901760
      %v707 = vsub.f32 %v380, %v706
      %v708 = vand.u32 %v707, 4294901760
      %v709 = vsub.f32 %v707, %v708
      %v710 = vand.u32 %v709, 4294901760
      %711 = vmatmul.mubr.f32.gmra.mrb[0].mxu0 %v710
      %v712 = vpop.f32.mrb[0].mxu0
      %v713 = vadd.f32 %v307, %v712
      %v714 = vpop.f32.mrb[0].mxu0
      %715 = vmatprep.mubr.f32.mxu0 0.0
      %v716 = vand.u32 %v383, 4294901760
      %v717 = vsub.f32 %v383, %v716
      %v718 = vand.u32 %v717, 4294901760
      %v719 = vsub.f32 %v717, %v718
      %v720 = vand.u32 %v719, 4294901760
      %721 = vmatmul.mubr.f32.gmra.mrb[0].mxu0 %v720
      %v722 = vpop.f32.mrb[0].mxu0
      %v723 = vadd.f32 %v307, %v722
      %v724 = vpop.f32.mrb[0].mxu0
      %725 = vmatprep.mubr.f32.mxu0 0.0
      %v726 = vand.u32 %v386, 4294901760
      %v727 = vsub.f32 %v386, %v726
      %v728 = vand.u32 %v727, 4294901760
      %v729 = vsub.f32 %v727, %v728
      %v730 = vand.u32 %v729, 4294901760
      %731 = vmatmul.mubr.f32.gmra.mrb[0].mxu0 %v730
      %v732 = vpop.f32.mrb[0].mxu0
      %v733 = vadd.f32 %v307, %v732
      %v734 = vpop.f32.mrb[0].mxu0
      %735 = vmatprep.mubr.f32.mxu0 0.0
      %v736 = vand.u32 %v389, 4294901760
      %v737 = vsub.f32 %v389, %v736
      %v738 = vand.u32 %v737, 4294901760
      %v739 = vsub.f32 %v737, %v738
      %v740 = vand.u32 %v739, 4294901760
      %741 = vmatmul.mubr.f32.gmra.mrb[0].mxu0 %v740
      %v742 = vpop.f32.mrb[0].mxu0
      %v743 = vadd.f32 %v307, %v742
      %v744 = vpop.f32.mrb[0].mxu0
      %745 = vmatprep.mubr.f32.mxu0 0.0
      %v746 = vand.u32 %v392, 4294901760
      %v747 = vsub.f32 %v392, %v746
      %v748 = vand.u32 %v747, 4294901760
      %v749 = vsub.f32 %v747, %v748
      %v750 = vand.u32 %v749, 4294901760
      %751 = vmatmul.mubr.f32.gmra.mrb[0].mxu0 %v750
      %v752 = vpop.f32.mrb[0].mxu0
      %v753 = vadd.f32 %v307, %v752
      %v754 = vpop.f32.mrb[0].mxu0
      %755 = vmatprep.mubr.f32.mxu0 0.0
      %v756 = vand.u32 %v395, 4294901760
      %v757 = vsub.f32 %v395, %v756
      %v758 = vand.u32 %v757, 4294901760
      %v759 = vsub.f32 %v757, %v758
      %v760 = vand.u32 %v759, 4294901760
      %761 = vmatmul.mubr.f32.gmra.mrb[0].mxu0 %v760
      %v762 = vpop.f32.mrb[0].mxu0
      %v763 = vadd.f32 %v307, %v762
      %v764 = vpop.f32.mrb[0].mxu0
      %765 = vmatprep.mubr.f32.mxu0 0.0
      %v766 = vand.u32 %v398, 4294901760
      %v767 = vsub.f32 %v398, %v766
      %v768 = vand.u32 %v767, 4294901760
      %v769 = vsub.f32 %v767, %v768
      %v770 = vand.u32 %v769, 4294901760
      %771 = vmatmul.mubr.f32.gmra.mrb[0].mxu0 %v770
      %v772 = vpop.f32.mrb[0].mxu0
      %v773 = vadd.f32 %v307, %v772
      %v774 = vpop.f32.mrb[0].mxu0
      %775 = vmatprep.mubr.f32.mxu0 0.0
      %v776 = vand.u32 %v401, 4294901760
      %v777 = vsub.f32 %v401, %v776
      %v778 = vand.u32 %v777, 4294901760
      %v779 = vsub.f32 %v777, %v778
      %v780 = vand.u32 %v779, 4294901760
      %781 = vmatmul.mubr.f32.gmra.mrb[0].mxu0 %v780
      %v782 = vpop.f32.mrb[0].mxu0
      %v783 = vadd.f32 %v307, %v782
      %v784 = vpop.f32.mrb[0].mxu0
      %785 = vmatprep.mubr.f32.mxu0 0.0
      %v786 = vand.u32 %v404, 4294901760
      %v787 = vsub.f32 %v404, %v786
      %v788 = vand.u32 %v787, 4294901760
      %v789 = vsub.f32 %v787, %v788
      %v790 = vand.u32 %v789, 4294901760
      %791 = vmatmul.mubr.f32.gmra.mrb[0].mxu0 %v790
      %v792 = vpop.f32.mrb[0].mxu0
      %v793 = vadd.f32 %v307, %v792
      %v794 = vpop.f32.mrb[0].mxu0
      %795 = vdwg.mxu0
      %796 = vmatprep.subr.mxu0 0.0
      %v797 = vand.u32 %v408, 4294901760
      %v798 = vsub.f32 %v408, %v797
      %v799 = vand.u32 %v798, 4294901760
      %v800 = vsub.f32 %v798, %v799
      %v801 = vand.u32 %v800, 4294901760
      %802 = vmatpush1.msra.mxu0 %v801
      %803 = vmatprep.subr.mxu0 0.0
      %804 = vmatpush1.msra.mxu0 0.0
      %805 = vmatprep.subr.mxu0 0.0
      %806 = vmatpush1.msra.mxu0 0.0
      %807 = vmatprep.subr.mxu0 0.0
      %808 = vmatpush1.msra.mxu0 0.0
      %809 = vmatprep.subr.mxu0 0.0
      %810 = vmatpush1.msra.mxu0 0.0
      %811 = vmatprep.subr.mxu0 0.0
      %812 = vmatpush1.msra.mxu0 0.0
      %813 = vmatprep.subr.mxu0 0.0
      %814 = vmatpush1.msra.mxu0 0.0
      %815 = vmatprep.subr.mxu0 0.0
      %816 = vmatpush1.msra.mxu0 0.0
      %817 = vmatprep.subr.mxu0 0.0
      %818 = vmatpush1.msra.mxu0 0.0
      %819 = vmatprep.subr.mxu0 0.0
      %820 = vmatpush1.msra.mxu0 0.0
      %821 = vmatprep.subr.mxu0 0.0
      %822 = vmatpush1.msra.mxu0 0.0
      %823 = vmatprep.subr.mxu0 0.0
      %824 = vmatpush1.msra.mxu0 0.0
      %825 = vmatprep.subr.mxu0 0.0
      %826 = vmatpush1.msra.mxu0 0.0
      %827 = vmatprep.subr.mxu0 0.0
      %828 = vmatpush1.msra.mxu0 0.0
      %829 = vmatprep.subr.mxu0 0.0
      %830 = vmatpush1.msra.mxu0 0.0
      %831 = vmatprep.subr.mxu0 0.0
      %832 = vmatpush1.msra.mxu0 0.0
      %833 = vmatprep.subr.mxu0 0.0
      %834 = vmatpush1.msra.mxu0 0.0
      %835 = vmatprep.subr.mxu0 0.0
      %836 = vmatpush1.msra.mxu0 0.0
      %837 = vmatprep.subr.mxu0 0.0
      %838 = vmatpush1.msra.mxu0 0.0
      %839 = vmatprep.subr.mxu0 0.0
      %840 = vmatpush1.msra.mxu0 0.0
      %841 = vmatprep.subr.mxu0 0.0
      %842 = vmatpush1.msra.mxu0 0.0
      %843 = vmatprep.subr.mxu0 0.0
      %844 = vmatpush1.msra.mxu0 0.0
      %845 = vmatprep.subr.mxu0 0.0
      %846 = vmatpush1.msra.mxu0 0.0
      %847 = vmatprep.subr.mxu0 0.0
      %848 = vmatpush1.msra.mxu0 0.0
      %849 = vmatprep.subr.mxu0 0.0
      %850 = vmatpush1.msra.mxu0 0.0
      %851 = vmatprep.subr.mxu0 0.0
      %852 = vmatpush1.msra.mxu0 0.0
      %853 = vmatprep.subr.mxu0 0.0
      %854 = vmatpush1.msra.mxu0 0.0
      %855 = vmatprep.subr.mxu0 0.0
      %856 = vmatpush1.msra.mxu0 0.0
      %857 = vmatprep.subr.mxu0 0.0
      %858 = vmatpush1.msra.mxu0 0.0
      %859 = vmatprep.subr.mxu0 0.0
      %860 = vmatpush1.msra.mxu0 0.0
      %861 = vmatprep.subr.mxu0 0.0
      %862 = vmatpush1.msra.mxu0 0.0
      %863 = vmatprep.subr.mxu0 0.0
      %864 = vmatpush1.msra.mxu0 0.0
      %865 = vmatprep.mubr.f32.mxu0 0.0
      %v866 = vand.u32 %v311, 4294901760
      %867 = vmatmul.mubr.f32.gmra.mrb[0].mxu0 %v866
      %v868 = vpop.f32.mrb[0].mxu0
      %v869 = vadd.f32 %v483, %v868
      %v870 = vpop.f32.mrb[0].mxu0
      %871 = vmatprep.mubr.f32.mxu0 0.0
      %v872 = vand.u32 %v314, 4294901760
      %873 = vmatmul.mubr.f32.gmra.mrb[0].mxu0 %v872
      %v874 = vpop.f32.mrb[0].mxu0
      %v875 = vadd.f32 %v493, %v874
      %v876 = vpop.f32.mrb[0].mxu0
      %877 = vmatprep.mubr.f32.mxu0 0.0
      %v878 = vand.u32 %v317, 4294901760
      %879 = vmatmul.mubr.f32.gmra.mrb[0].mxu0 %v878
      %v880 = vpop.f32.mrb[0].mxu0
      %v881 = vadd.f32 %v503, %v880
      %v882 = vpop.f32.mrb[0].mxu0
      %883 = vmatprep.mubr.f32.mxu0 0.0
      %v884 = vand.u32 %v320, 4294901760
      %885 = vmatmul.mubr.f32.gmra.mrb[0].mxu0 %v884
      %v886 = vpop.f32.mrb[0].mxu0
      %v887 = vadd.f32 %v513, %v886
      %v888 = vpop.f32.mrb[0].mxu0
      %889 = vmatprep.mubr.f32.mxu0 0.0
      %v890 = vand.u32 %v323, 4294901760
      %891 = vmatmul.mubr.f32.gmra.mrb[0].mxu0 %v890
      %v892 = vpop.f32.mrb[0].mxu0
      %v893 = vadd.f32 %v523, %v892
      %v894 = vpop.f32.mrb[0].mxu0
      %895 = vmatprep.mubr.f32.mxu0 0.0
      %v896 = vand.u32 %v326, 4294901760
      %897 = vmatmul.mubr.f32.gmra.mrb[0].mxu0 %v896
      %v898 = vpop.f32.mrb[0].mxu0
      %v899 = vadd.f32 %v533, %v898
      %v900 = vpop.f32.mrb[0].mxu0
      %901 = vmatprep.mubr.f32.mxu0 0.0
      %v902 = vand.u32 %v329, 4294901760
      %903 = vmatmul.mubr.f32.gmra.mrb[0].mxu0 %v902
      %v904 = vpop.f32.mrb[0].mxu0
      %v905 = vadd.f32 %v543, %v904
      %v906 = vpop.f32.mrb[0].mxu0
      %907 = vmatprep.mubr.f32.mxu0 0.0
      %v908 = vand.u32 %v332, 4294901760
      %909 = vmatmul.mubr.f32.gmra.mrb[0].mxu0 %v908
      %v910 = vpop.f32.mrb[0].mxu0
      %v911 = vadd.f32 %v553, %v910
      %v912 = vpop.f32.mrb[0].mxu0
      %913 = vmatprep.mubr.f32.mxu0 0.0
      %v914 = vand.u32 %v335, 4294901760
      %915 = vmatmul.mubr.f32.gmra.mrb[0].mxu0 %v914
      %v916 = vpop.f32.mrb[0].mxu0
      %v917 = vadd.f32 %v563, %v916
      %v918 = vpop.f32.mrb[0].mxu0
      %919 = vmatprep.mubr.f32.mxu0 0.0
      %v920 = vand.u32 %v338, 4294901760
      %921 = vmatmul.mubr.f32.gmra.mrb[0].mxu0 %v920
      %v922 = vpop.f32.mrb[0].mxu0
      %v923 = vadd.f32 %v573, %v922
      %v924 = vpop.f32.mrb[0].mxu0
      %925 = vmatprep.mubr.f32.mxu0 0.0
      %v926 = vand.u32 %v341, 4294901760
      %927 = vmatmul.mubr.f32.gmra.mrb[0].mxu0 %v926
      %v928 = vpop.f32.mrb[0].mxu0
      %v929 = vadd.f32 %v583, %v928
      %v930 = vpop.f32.mrb[0].mxu0
      %931 = vmatprep.mubr.f32.mxu0 0.0
      %v932 = vand.u32 %v344, 4294901760
      %933 = vmatmul.mubr.f32.gmra.mrb[0].mxu0 %v932
      %v934 = vpop.f32.mrb[0].mxu0
      %v935 = vadd.f32 %v593, %v934
      %v936 = vpop.f32.mrb[0].mxu0
      %937 = vmatprep.mubr.f32.mxu0 0.0
      %v938 = vand.u32 %v347, 4294901760
      %939 = vmatmul.mubr.f32.gmra.mrb[0].mxu0 %v938
      %v940 = vpop.f32.mrb[0].mxu0
      %v941 = vadd.f32 %v603, %v940
      %v942 = vpop.f32.mrb[0].mxu0
      %943 = vmatprep.mubr.f32.mxu0 0.0
      %v944 = vand.u32 %v350, 4294901760
      %945 = vmatmul.mubr.f32.gmra.mrb[0].mxu0 %v944
      %v946 = vpop.f32.mrb[0].mxu0
      %v947 = vadd.f32 %v613, %v946
      %v948 = vpop.f32.mrb[0].mxu0
      %949 = vmatprep.mubr.f32.mxu0 0.0
      %v950 = vand.u32 %v353, 4294901760
      %951 = vmatmul.mubr.f32.gmra.mrb[0].mxu0 %v950
      %v952 = vpop.f32.mrb[0].mxu0
      %v953 = vadd.f32 %v623, %v952
      %v954 = vpop.f32.mrb[0].mxu0
      %955 = vmatprep.mubr.f32.mxu0 0.0
      %v956 = vand.u32 %v356, 4294901760
      %957 = vmatmul.mubr.f32.gmra.mrb[0].mxu0 %v956
      %v958 = vpop.f32.mrb[0].mxu0
      %v959 = vadd.f32 %v633, %v958
      %v960 = vpop.f32.mrb[0].mxu0
      %961 = vmatprep.mubr.f32.mxu0 0.0
      %v962 = vand.u32 %v359, 4294901760
      %963 = vmatmul.mubr.f32.gmra.mrb[0].mxu0 %v962
      %v964 = vpop.f32.mrb[0].mxu0
      %v965 = vadd.f32 %v643, %v964
      %v966 = vpop.f32.mrb[0].mxu0
      %967 = vmatprep.mubr.f32.mxu0 0.0
      %v968 = vand.u32 %v362, 4294901760
      %969 = vmatmul.mubr.f32.gmra.mrb[0].mxu0 %v968
      %v970 = vpop.f32.mrb[0].mxu0
      %v971 = vadd.f32 %v653, %v970
      %v972 = vpop.f32.mrb[0].mxu0
      %973 = vmatprep.mubr.f32.mxu0 0.0
      %v974 = vand.u32 %v365, 4294901760
      %975 = vmatmul.mubr.f32.gmra.mrb[0].mxu0 %v974
      %v976 = vpop.f32.mrb[0].mxu0
      %v977 = vadd.f32 %v663, %v976
      %v978 = vpop.f32.mrb[0].mxu0
      %979 = vmatprep.mubr.f32.mxu0 0.0
      %v980 = vand.u32 %v368, 4294901760
      %981 = vmatmul.mubr.f32.gmra.mrb[0].mxu0 %v980
      %v982 = vpop.f32.mrb[0].mxu0
      %v983 = vadd.f32 %v673, %v982
      %v984 = vpop.f32.mrb[0].mxu0
      %985 = vmatprep.mubr.f32.mxu0 0.0
      %v986 = vand.u32 %v371, 4294901760
      %987 = vmatmul.mubr.f32.gmra.mrb[0].mxu0 %v986
      %v988 = vpop.f32.mrb[0].mxu0
      %v989 = vadd.f32 %v683, %v988
      %v990 = vpop.f32.mrb[0].mxu0
      %991 = vmatprep.mubr.f32.mxu0 0.0
      %v992 = vand.u32 %v374, 4294901760
      %993 = vmatmul.mubr.f32.gmra.mrb[0].mxu0 %v992
      %v994 = vpop.f32.mrb[0].mxu0
      %v995 = vadd.f32 %v693, %v994
      %v996 = vpop.f32.mrb[0].mxu0
      %997 = vmatprep.mubr.f32.mxu0 0.0
      %v998 = vand.u32 %v377, 4294901760
      %999 = vmatmul.mubr.f32.gmra.mrb[0].mxu0 %v998
      %v1000 = vpop.f32.mrb[0].mxu0
      %v1001 = vadd.f32 %v703, %v1000
      %v1002 = vpop.f32.mrb[0].mxu0
      %1003 = vmatprep.mubr.f32.mxu0 0.0
      %v1004 = vand.u32 %v380, 4294901760
      %1005 = vmatmul.mubr.f32.gmra.mrb[0].mxu0 %v1004
      %v1006 = vpop.f32.mrb[0].mxu0
      %v1007 = vadd.f32 %v713, %v1006
      %v1008 = vpop.f32.mrb[0].mxu0
      %1009 = vmatprep.mubr.f32.mxu0 0.0
      %v1010 = vand.u32 %v383, 4294901760
      %1011 = vmatmul.mubr.f32.gmra.mrb[0].mxu0 %v1010
      %v1012 = vpop.f32.mrb[0].mxu0
      %v1013 = vadd.f32 %v723, %v1012
      %v1014 = vpop.f32.mrb[0].mxu0
      %1015 = vmatprep.mubr.f32.mxu0 0.0
      %v1016 = vand.u32 %v386, 4294901760
      %1017 = vmatmul.mubr.f32.gmra.mrb[0].mxu0 %v1016
      %v1018 = vpop.f32.mrb[0].mxu0
      %v1019 = vadd.f32 %v733, %v1018
      %v1020 = vpop.f32.mrb[0].mxu0
      %1021 = vmatprep.mubr.f32.mxu0 0.0
      %v1022 = vand.u32 %v389, 4294901760
      %1023 = vmatmul.mubr.f32.gmra.mrb[0].mxu0 %v1022
      %v1024 = vpop.f32.mrb[0].mxu0
      %v1025 = vadd.f32 %v743, %v1024
      %v1026 = vpop.f32.mrb[0].mxu0
      %1027 = vmatprep.mubr.f32.mxu0 0.0
      %v1028 = vand.u32 %v392, 4294901760
      %1029 = vmatmul.mubr.f32.gmra.mrb[0].mxu0 %v1028
      %v1030 = vpop.f32.mrb[0].mxu0
      %v1031 = vadd.f32 %v753, %v1030
      %v1032 = vpop.f32.mrb[0].mxu0
      %1033 = vmatprep.mubr.f32.mxu0 0.0
      %v1034 = vand.u32 %v395, 4294901760
      %1035 = vmatmul.mubr.f32.gmra.mrb[0].mxu0 %v1034
      %v1036 = vpop.f32.mrb[0].mxu0
      %v1037 = vadd.f32 %v763, %v1036
      %v1038 = vpop.f32.mrb[0].mxu0
      %1039 = vmatprep.mubr.f32.mxu0 0.0
      %v1040 = vand.u32 %v398, 4294901760
      %1041 = vmatmul.mubr.f32.gmra.mrb[0].mxu0 %v1040
      %v1042 = vpop.f32.mrb[0].mxu0
      %v1043 = vadd.f32 %v773, %v1042
      %v1044 = vpop.f32.mrb[0].mxu0
      %1045 = vmatprep.mubr.f32.mxu0 0.0
      %v1046 = vand.u32 %v401, 4294901760
      %1047 = vmatmul.mubr.f32.gmra.mrb[0].mxu0 %v1046
      %v1048 = vpop.f32.mrb[0].mxu0
      %v1049 = vadd.f32 %v783, %v1048
      %v1050 = vpop.f32.mrb[0].mxu0
      %1051 = vmatprep.mubr.f32.mxu0 0.0
      %v1052 = vand.u32 %v404, 4294901760
      %1053 = vmatmul.mubr.f32.gmra.mrb[0].mxu0 %v1052
      %v1054 = vpop.f32.mrb[0].mxu0
      %v1055 = vadd.f32 %v793, %v1054
      %v1056 = vpop.f32.mrb[0].mxu0
      %1057 = vdwg.mxu0
      %1058 = vmatprep.subr.mxu0 0.0
      %v1059 = vand.u32 %v408, 4294901760
      %v1060 = vsub.f32 %v408, %v1059
      %1061 = vmatpush1.msra.mxu0 %v1060
      %1062 = vmatprep.subr.mxu0 0.0
      %1063 = vmatpush1.msra.mxu0 0.0
      %1064 = vmatprep.subr.mxu0 0.0
      %1065 = vmatpush1.msra.mxu0 0.0
      %1066 = vmatprep.subr.mxu0 0.0
      %1067 = vmatpush1.msra.mxu0 0.0
      %1068 = vmatprep.subr.mxu0 0.0
      %1069 = vmatpush1.msra.mxu0 0.0
      %1070 = vmatprep.subr.mxu0 0.0
      %1071 = vmatpush1.msra.mxu0 0.0
      %1072 = vmatprep.subr.mxu0 0.0
      %1073 = vmatpush1.msra.mxu0 0.0
      %1074 = vmatprep.subr.mxu0 0.0
      %1075 = vmatpush1.msra.mxu0 0.0
      %1076 = vmatprep.subr.mxu0 0.0
      %1077 = vmatpush1.msra.mxu0 0.0
      %1078 = vmatprep.subr.mxu0 0.0
      %1079 = vmatpush1.msra.mxu0 0.0
      %1080 = vmatprep.subr.mxu0 0.0
      %1081 = vmatpush1.msra.mxu0 0.0
      %1082 = vmatprep.subr.mxu0 0.0
      %1083 = vmatpush1.msra.mxu0 0.0
      %1084 = vmatprep.subr.mxu0 0.0
      %1085 = vmatpush1.msra.mxu0 0.0
      %1086 = vmatprep.subr.mxu0 0.0
      %1087 = vmatpush1.msra.mxu0 0.0
      %1088 = vmatprep.subr.mxu0 0.0
      %1089 = vmatpush1.msra.mxu0 0.0
      %1090 = vmatprep.subr.mxu0 0.0
      %1091 = vmatpush1.msra.mxu0 0.0
      %1092 = vmatprep.subr.mxu0 0.0
      %1093 = vmatpush1.msra.mxu0 0.0
      %1094 = vmatprep.subr.mxu0 0.0
      %1095 = vmatpush1.msra.mxu0 0.0
      %1096 = vmatprep.subr.mxu0 0.0
      %1097 = vmatpush1.msra.mxu0 0.0
      %1098 = vmatprep.subr.mxu0 0.0
      %1099 = vmatpush1.msra.mxu0 0.0
      %1100 = vmatprep.subr.mxu0 0.0
      %1101 = vmatpush1.msra.mxu0 0.0
      %1102 = vmatprep.subr.mxu0 0.0
      %1103 = vmatpush1.msra.mxu0 0.0
      %1104 = vmatprep.subr.mxu0 0.0
      %1105 = vmatpush1.msra.mxu0 0.0
      %1106 = vmatprep.subr.mxu0 0.0
      %1107 = vmatpush1.msra.mxu0 0.0
      %1108 = vmatprep.subr.mxu0 0.0
      %1109 = vmatpush1.msra.mxu0 0.0
      %1110 = vmatprep.subr.mxu0 0.0
      %1111 = vmatpush1.msra.mxu0 0.0
      %1112 = vmatprep.subr.mxu0 0.0
      %1113 = vmatpush1.msra.mxu0 0.0
      %1114 = vmatprep.subr.mxu0 0.0
      %1115 = vmatpush1.msra.mxu0 0.0
      %1116 = vmatprep.subr.mxu0 0.0
      %1117 = vmatpush1.msra.mxu0 0.0
      %1118 = vmatprep.subr.mxu0 0.0
      %1119 = vmatpush1.msra.mxu0 0.0
      %1120 = vmatprep.subr.mxu0 0.0
      %1121 = vmatpush1.msra.mxu0 0.0
      %1122 = vmatprep.subr.mxu0 0.0
      %1123 = vmatpush1.msra.mxu0 0.0
      %1124 = vmatprep.mubr.f32.mxu0 0.0
      %v1125 = vand.u32 %v311, 4294901760
      %v1126 = vsub.f32 %v311, %v1125
      %1127 = vmatmul.mubr.f32.gmra.mrb[0].mxu0 %v1126
      %v1128 = vpop.f32.mrb[0].mxu0
      %v1129 = vadd.f32 %v869, %v1128
      %v1130 = vpop.f32.mrb[0].mxu0
      %1131 = vmatprep.mubr.f32.mxu0 0.0
      %v1132 = vand.u32 %v314, 4294901760
      %v1133 = vsub.f32 %v314, %v1132
      %1134 = vmatmul.mubr.f32.gmra.mrb[0].mxu0 %v1133
      %v1135 = vpop.f32.mrb[0].mxu0
      %v1136 = vadd.f32 %v875, %v1135
      %v1137 = vpop.f32.mrb[0].mxu0
      %1138 = vmatprep.mubr.f32.mxu0 0.0
      %v1139 = vand.u32 %v317, 4294901760
      %v1140 = vsub.f32 %v317, %v1139
      %1141 = vmatmul.mubr.f32.gmra.mrb[0].mxu0 %v1140
      %v1142 = vpop.f32.mrb[0].mxu0
      %v1143 = vadd.f32 %v881, %v1142
      %v1144 = vpop.f32.mrb[0].mxu0
      %1145 = vmatprep.mubr.f32.mxu0 0.0
      %v1146 = vand.u32 %v320, 4294901760
      %v1147 = vsub.f32 %v320, %v1146
      %1148 = vmatmul.mubr.f32.gmra.mrb[0].mxu0 %v1147
      %v1149 = vpop.f32.mrb[0].mxu0
      %v1150 = vadd.f32 %v887, %v1149
      %v1151 = vpop.f32.mrb[0].mxu0
      %1152 = vmatprep.mubr.f32.mxu0 0.0
      %v1153 = vand.u32 %v323, 4294901760
      %v1154 = vsub.f32 %v323, %v1153
      %1155 = vmatmul.mubr.f32.gmra.mrb[0].mxu0 %v1154
      %v1156 = vpop.f32.mrb[0].mxu0
      %v1157 = vadd.f32 %v893, %v1156
      %v1158 = vpop.f32.mrb[0].mxu0
      %1159 = vmatprep.mubr.f32.mxu0 0.0
      %v1160 = vand.u32 %v326, 4294901760
      %v1161 = vsub.f32 %v326, %v1160
      %1162 = vmatmul.mubr.f32.gmra.mrb[0].mxu0 %v1161
      %v1163 = vpop.f32.mrb[0].mxu0
      %v1164 = vadd.f32 %v899, %v1163
      %v1165 = vpop.f32.mrb[0].mxu0
      %1166 = vmatprep.mubr.f32.mxu0 0.0
      %v1167 = vand.u32 %v329, 4294901760
      %v1168 = vsub.f32 %v329, %v1167
      %1169 = vmatmul.mubr.f32.gmra.mrb[0].mxu0 %v1168
      %v1170 = vpop.f32.mrb[0].mxu0
      %v1171 = vadd.f32 %v905, %v1170
      %v1172 = vpop.f32.mrb[0].mxu0
      %1173 = vmatprep.mubr.f32.mxu0 0.0
      %v1174 = vand.u32 %v332, 4294901760
      %v1175 = vsub.f32 %v332, %v1174
      %1176 = vmatmul.mubr.f32.gmra.mrb[0].mxu0 %v1175
      %v1177 = vpop.f32.mrb[0].mxu0
      %v1178 = vadd.f32 %v911, %v1177
      %v1179 = vpop.f32.mrb[0].mxu0
      %1180 = vmatprep.mubr.f32.mxu0 0.0
      %v1181 = vand.u32 %v335, 4294901760
      %v1182 = vsub.f32 %v335, %v1181
      %1183 = vmatmul.mubr.f32.gmra.mrb[0].mxu0 %v1182
      %v1184 = vpop.f32.mrb[0].mxu0
      %v1185 = vadd.f32 %v917, %v1184
      %v1186 = vpop.f32.mrb[0].mxu0
      %1187 = vmatprep.mubr.f32.mxu0 0.0
      %v1188 = vand.u32 %v338, 4294901760
      %v1189 = vsub.f32 %v338, %v1188
      %1190 = vmatmul.mubr.f32.gmra.mrb[0].mxu0 %v1189
      %v1191 = vpop.f32.mrb[0].mxu0
      %v1192 = vadd.f32 %v923, %v1191
      %v1193 = vpop.f32.mrb[0].mxu0
      %1194 = vmatprep.mubr.f32.mxu0 0.0
      %v1195 = vand.u32 %v341, 4294901760
      %v1196 = vsub.f32 %v341, %v1195
      %1197 = vmatmul.mubr.f32.gmra.mrb[0].mxu0 %v1196
      %v1198 = vpop.f32.mrb[0].mxu0
      %v1199 = vadd.f32 %v929, %v1198
      %v1200 = vpop.f32.mrb[0].mxu0
      %1201 = vmatprep.mubr.f32.mxu0 0.0
      %v1202 = vand.u32 %v344, 4294901760
      %v1203 = vsub.f32 %v344, %v1202
      %1204 = vmatmul.mubr.f32.gmra.mrb[0].mxu0 %v1203
      %v1205 = vpop.f32.mrb[0].mxu0
      %v1206 = vadd.f32 %v935, %v1205
      %v1207 = vpop.f32.mrb[0].mxu0
      %1208 = vmatprep.mubr.f32.mxu0 0.0
      %v1209 = vand.u32 %v347, 4294901760
      %v1210 = vsub.f32 %v347, %v1209
      %1211 = vmatmul.mubr.f32.gmra.mrb[0].mxu0 %v1210
      %v1212 = vpop.f32.mrb[0].mxu0
      %v1213 = vadd.f32 %v941, %v1212
      %v1214 = vpop.f32.mrb[0].mxu0
      %1215 = vmatprep.mubr.f32.mxu0 0.0
      %v1216 = vand.u32 %v350, 4294901760
      %v1217 = vsub.f32 %v350, %v1216
      %1218 = vmatmul.mubr.f32.gmra.mrb[0].mxu0 %v1217
      %v1219 = vpop.f32.mrb[0].mxu0
      %v1220 = vadd.f32 %v947, %v1219
      %v1221 = vpop.f32.mrb[0].mxu0
      %1222 = vmatprep.mubr.f32.mxu0 0.0
      %v1223 = vand.u32 %v353, 4294901760
      %v1224 = vsub.f32 %v353, %v1223
      %1225 = vmatmul.mubr.f32.gmra.mrb[0].mxu0 %v1224
      %v1226 = vpop.f32.mrb[0].mxu0
      %v1227 = vadd.f32 %v953, %v1226
      %v1228 = vpop.f32.mrb[0].mxu0
      %1229 = vmatprep.mubr.f32.mxu0 0.0
      %v1230 = vand.u32 %v356, 4294901760
      %v1231 = vsub.f32 %v356, %v1230
      %1232 = vmatmul.mubr.f32.gmra.mrb[0].mxu0 %v1231
      %v1233 = vpop.f32.mrb[0].mxu0
      %v1234 = vadd.f32 %v959, %v1233
      %v1235 = vpop.f32.mrb[0].mxu0
      %1236 = vmatprep.mubr.f32.mxu0 0.0
      %v1237 = vand.u32 %v359, 4294901760
      %v1238 = vsub.f32 %v359, %v1237
      %1239 = vmatmul.mubr.f32.gmra.mrb[0].mxu0 %v1238
      %v1240 = vpop.f32.mrb[0].mxu0
      %v1241 = vadd.f32 %v965, %v1240
      %v1242 = vpop.f32.mrb[0].mxu0
      %1243 = vmatprep.mubr.f32.mxu0 0.0
      %v1244 = vand.u32 %v362, 4294901760
      %v1245 = vsub.f32 %v362, %v1244
      %1246 = vmatmul.mubr.f32.gmra.mrb[0].mxu0 %v1245
      %v1247 = vpop.f32.mrb[0].mxu0
      %v1248 = vadd.f32 %v971, %v1247
      %v1249 = vpop.f32.mrb[0].mxu0
      %1250 = vmatprep.mubr.f32.mxu0 0.0
      %v1251 = vand.u32 %v365, 4294901760
      %v1252 = vsub.f32 %v365, %v1251
      %1253 = vmatmul.mubr.f32.gmra.mrb[0].mxu0 %v1252
      %v1254 = vpop.f32.mrb[0].mxu0
      %v1255 = vadd.f32 %v977, %v1254
      %v1256 = vpop.f32.mrb[0].mxu0
      %1257 = vmatprep.mubr.f32.mxu0 0.0
      %v1258 = vand.u32 %v368, 4294901760
      %v1259 = vsub.f32 %v368, %v1258
      %1260 = vmatmul.mubr.f32.gmra.mrb[0].mxu0 %v1259
      %v1261 = vpop.f32.mrb[0].mxu0
      %v1262 = vadd.f32 %v983, %v1261
      %v1263 = vpop.f32.mrb[0].mxu0
      %1264 = vmatprep.mubr.f32.mxu0 0.0
      %v1265 = vand.u32 %v371, 4294901760
      %v1266 = vsub.f32 %v371, %v1265
      %1267 = vmatmul.mubr.f32.gmra.mrb[0].mxu0 %v1266
      %v1268 = vpop.f32.mrb[0].mxu0
      %v1269 = vadd.f32 %v989, %v1268
      %v1270 = vpop.f32.mrb[0].mxu0
      %1271 = vmatprep.mubr.f32.mxu0 0.0
      %v1272 = vand.u32 %v374, 4294901760
      %v1273 = vsub.f32 %v374, %v1272
      %1274 = vmatmul.mubr.f32.gmra.mrb[0].mxu0 %v1273
      %v1275 = vpop.f32.mrb[0].mxu0
      %v1276 = vadd.f32 %v995, %v1275
      %v1277 = vpop.f32.mrb[0].mxu0
      %1278 = vmatprep.mubr.f32.mxu0 0.0
      %v1279 = vand.u32 %v377, 4294901760
      %v1280 = vsub.f32 %v377, %v1279
      %1281 = vmatmul.mubr.f32.gmra.mrb[0].mxu0 %v1280
      %v1282 = vpop.f32.mrb[0].mxu0
      %v1283 = vadd.f32 %v1001, %v1282
      %v1284 = vpop.f32.mrb[0].mxu0
      %1285 = vmatprep.mubr.f32.mxu0 0.0
      %v1286 = vand.u32 %v380, 4294901760
      %v1287 = vsub.f32 %v380, %v1286
      %1288 = vmatmul.mubr.f32.gmra.mrb[0].mxu0 %v1287
      %v1289 = vpop.f32.mrb[0].mxu0
      %v1290 = vadd.f32 %v1007, %v1289
      %v1291 = vpop.f32.mrb[0].mxu0
      %1292 = vmatprep.mubr.f32.mxu0 0.0
      %v1293 = vand.u32 %v383, 4294901760
      %v1294 = vsub.f32 %v383, %v1293
      %1295 = vmatmul.mubr.f32.gmra.mrb[0].mxu0 %v1294
      %v1296 = vpop.f32.mrb[0].mxu0
      %v1297 = vadd.f32 %v1013, %v1296
      %v1298 = vpop.f32.mrb[0].mxu0
      %1299 = vmatprep.mubr.f32.mxu0 0.0
      %v1300 = vand.u32 %v386, 4294901760
      %v1301 = vsub.f32 %v386, %v1300
      %1302 = vmatmul.mubr.f32.gmra.mrb[0].mxu0 %v1301
      %v1303 = vpop.f32.mrb[0].mxu0
      %v1304 = vadd.f32 %v1019, %v1303
      %v1305 = vpop.f32.mrb[0].mxu0
      %1306 = vmatprep.mubr.f32.mxu0 0.0
      %v1307 = vand.u32 %v389, 4294901760
      %v1308 = vsub.f32 %v389, %v1307
      %1309 = vmatmul.mubr.f32.gmra.mrb[0].mxu0 %v1308
      %v1310 = vpop.f32.mrb[0].mxu0
      %v1311 = vadd.f32 %v1025, %v1310
      %v1312 = vpop.f32.mrb[0].mxu0
      %1313 = vmatprep.mubr.f32.mxu0 0.0
      %v1314 = vand.u32 %v392, 4294901760
      %v1315 = vsub.f32 %v392, %v1314
      %1316 = vmatmul.mubr.f32.gmra.mrb[0].mxu0 %v1315
      %v1317 = vpop.f32.mrb[0].mxu0
      %v1318 = vadd.f32 %v1031, %v1317
      %v1319 = vpop.f32.mrb[0].mxu0
      %1320 = vmatprep.mubr.f32.mxu0 0.0
      %v1321 = vand.u32 %v395, 4294901760
      %v1322 = vsub.f32 %v395, %v1321
      %1323 = vmatmul.mubr.f32.gmra.mrb[0].mxu0 %v1322
      %v1324 = vpop.f32.mrb[0].mxu0
      %v1325 = vadd.f32 %v1037, %v1324
      %v1326 = vpop.f32.mrb[0].mxu0
      %1327 = vmatprep.mubr.f32.mxu0 0.0
      %v1328 = vand.u32 %v398, 4294901760
      %v1329 = vsub.f32 %v398, %v1328
      %1330 = vmatmul.mubr.f32.gmra.mrb[0].mxu0 %v1329
      %v1331 = vpop.f32.mrb[0].mxu0
      %v1332 = vadd.f32 %v1043, %v1331
      %v1333 = vpop.f32.mrb[0].mxu0
      %1334 = vmatprep.mubr.f32.mxu0 0.0
      %v1335 = vand.u32 %v401, 4294901760
      %v1336 = vsub.f32 %v401, %v1335
      %1337 = vmatmul.mubr.f32.gmra.mrb[0].mxu0 %v1336
      %v1338 = vpop.f32.mrb[0].mxu0
      %v1339 = vadd.f32 %v1049, %v1338
      %v1340 = vpop.f32.mrb[0].mxu0
      %1341 = vmatprep.mubr.f32.mxu0 0.0
      %v1342 = vand.u32 %v404, 4294901760
      %v1343 = vsub.f32 %v404, %v1342
      %1344 = vmatmul.mubr.f32.gmra.mrb[0].mxu0 %v1343
      %v1345 = vpop.f32.mrb[0].mxu0
      %v1346 = vadd.f32 %v1055, %v1345
      %v1347 = vpop.f32.mrb[0].mxu0
      %1348 = vdwg.mxu0
      %1349 = vmatprep.subr.mxu0 0.0
      %v1350 = vand.u32 %v408, 4294901760
      %1351 = vmatpush1.msra.mxu0 %v1350
      %1352 = vmatprep.subr.mxu0 0.0
      %1353 = vmatpush1.msra.mxu0 0.0
      %1354 = vmatprep.subr.mxu0 0.0
      %1355 = vmatpush1.msra.mxu0 0.0
      %1356 = vmatprep.subr.mxu0 0.0
      %1357 = vmatpush1.msra.mxu0 0.0
      %1358 = vmatprep.subr.mxu0 0.0
      %1359 = vmatpush1.msra.mxu0 0.0
      %1360 = vmatprep.subr.mxu0 0.0
      %1361 = vmatpush1.msra.mxu0 0.0
      %1362 = vmatprep.subr.mxu0 0.0
      %1363 = vmatpush1.msra.mxu0 0.0
      %1364 = vmatprep.subr.mxu0 0.0
      %1365 = vmatpush1.msra.mxu0 0.0
      %1366 = vmatprep.subr.mxu0 0.0
      %1367 = vmatpush1.msra.mxu0 0.0
      %1368 = vmatprep.subr.mxu0 0.0
      %1369 = vmatpush1.msra.mxu0 0.0
      %1370 = vmatprep.subr.mxu0 0.0
      %1371 = vmatpush1.msra.mxu0 0.0
      %1372 = vmatprep.subr.mxu0 0.0
      %1373 = vmatpush1.msra.mxu0 0.0
      %1374 = vmatprep.subr.mxu0 0.0
      %1375 = vmatpush1.msra.mxu0 0.0
      %1376 = vmatprep.subr.mxu0 0.0
      %1377 = vmatpush1.msra.mxu0 0.0
      %1378 = vmatprep.subr.mxu0 0.0
      %1379 = vmatpush1.msra.mxu0 0.0
      %1380 = vmatprep.subr.mxu0 0.0
      %1381 = vmatpush1.msra.mxu0 0.0
      %1382 = vmatprep.subr.mxu0 0.0
      %1383 = vmatpush1.msra.mxu0 0.0
      %1384 = vmatprep.subr.mxu0 0.0
      %1385 = vmatpush1.msra.mxu0 0.0
      %1386 = vmatprep.subr.mxu0 0.0
      %1387 = vmatpush1.msra.mxu0 0.0
      %1388 = vmatprep.subr.mxu0 0.0
      %1389 = vmatpush1.msra.mxu0 0.0
      %1390 = vmatprep.subr.mxu0 0.0
      %1391 = vmatpush1.msra.mxu0 0.0
      %1392 = vmatprep.subr.mxu0 0.0
      %1393 = vmatpush1.msra.mxu0 0.0
      %1394 = vmatprep.subr.mxu0 0.0
      %1395 = vmatpush1.msra.mxu0 0.0
      %1396 = vmatprep.subr.mxu0 0.0
      %1397 = vmatpush1.msra.mxu0 0.0
      %1398 = vmatprep.subr.mxu0 0.0
      %1399 = vmatpush1.msra.mxu0 0.0
      %1400 = vmatprep.subr.mxu0 0.0
      %1401 = vmatpush1.msra.mxu0 0.0
      %1402 = vmatprep.subr.mxu0 0.0
      %1403 = vmatpush1.msra.mxu0 0.0
      %1404 = vmatprep.subr.mxu0 0.0
      %1405 = vmatpush1.msra.mxu0 0.0
      %1406 = vmatprep.subr.mxu0 0.0
      %1407 = vmatpush1.msra.mxu0 0.0
      %1408 = vmatprep.subr.mxu0 0.0
      %1409 = vmatpush1.msra.mxu0 0.0
      %1410 = vmatprep.subr.mxu0 0.0
      %1411 = vmatpush1.msra.mxu0 0.0
      %1412 = vmatprep.subr.mxu0 0.0
      %1413 = vmatpush1.msra.mxu0 0.0
      %1414 = vmatprep.mubr.f32.mxu0 0.0
      %v1415 = vand.u32 %v311, 4294901760
      %v1416 = vsub.f32 %v311, %v1415
      %v1417 = vand.u32 %v1416, 4294901760
      %1418 = vmatmul.mubr.f32.gmra.mrb[0].mxu0 %v1417
      %v1419 = vpop.f32.mrb[0].mxu0
      %v1420 = vadd.f32 %v1129, %v1419
      %v1421 = vpop.f32.mrb[0].mxu0
      %1422 = vmatprep.mubr.f32.mxu0 0.0
      %v1423 = vand.u32 %v314, 4294901760
      %v1424 = vsub.f32 %v314, %v1423
      %v1425 = vand.u32 %v1424, 4294901760
      %1426 = vmatmul.mubr.f32.gmra.mrb[0].mxu0 %v1425
      %v1427 = vpop.f32.mrb[0].mxu0
      %v1428 = vadd.f32 %v1136, %v1427
      %v1429 = vpop.f32.mrb[0].mxu0
      %1430 = vmatprep.mubr.f32.mxu0 0.0
      %v1431 = vand.u32 %v317, 4294901760
      %v1432 = vsub.f32 %v317, %v1431
      %v1433 = vand.u32 %v1432, 4294901760
      %1434 = vmatmul.mubr.f32.gmra.mrb[0].mxu0 %v1433
      %v1435 = vpop.f32.mrb[0].mxu0
      %v1436 = vadd.f32 %v1143, %v1435
      %v1437 = vpop.f32.mrb[0].mxu0
      %1438 = vmatprep.mubr.f32.mxu0 0.0
      %v1439 = vand.u32 %v320, 4294901760
      %v1440 = vsub.f32 %v320, %v1439
      %v1441 = vand.u32 %v1440, 4294901760
      %1442 = vmatmul.mubr.f32.gmra.mrb[0].mxu0 %v1441
      %v1443 = vpop.f32.mrb[0].mxu0
      %v1444 = vadd.f32 %v1150, %v1443
      %v1445 = vpop.f32.mrb[0].mxu0
      %1446 = vmatprep.mubr.f32.mxu0 0.0
      %v1447 = vand.u32 %v323, 4294901760
      %v1448 = vsub.f32 %v323, %v1447
      %v1449 = vand.u32 %v1448, 4294901760
      %1450 = vmatmul.mubr.f32.gmra.mrb[0].mxu0 %v1449
      %v1451 = vpop.f32.mrb[0].mxu0
      %v1452 = vadd.f32 %v1157, %v1451
      %v1453 = vpop.f32.mrb[0].mxu0
      %1454 = vmatprep.mubr.f32.mxu0 0.0
      %v1455 = vand.u32 %v326, 4294901760
      %v1456 = vsub.f32 %v326, %v1455
      %v1457 = vand.u32 %v1456, 4294901760
      %1458 = vmatmul.mubr.f32.gmra.mrb[0].mxu0 %v1457
      %v1459 = vpop.f32.mrb[0].mxu0
      %v1460 = vadd.f32 %v1164, %v1459
      %v1461 = vpop.f32.mrb[0].mxu0
      %1462 = vmatprep.mubr.f32.mxu0 0.0
      %v1463 = vand.u32 %v329, 4294901760
      %v1464 = vsub.f32 %v329, %v1463
      %v1465 = vand.u32 %v1464, 4294901760
      %1466 = vmatmul.mubr.f32.gmra.mrb[0].mxu0 %v1465
      %v1467 = vpop.f32.mrb[0].mxu0
      %v1468 = vadd.f32 %v1171, %v1467
      %v1469 = vpop.f32.mrb[0].mxu0
      %1470 = vmatprep.mubr.f32.mxu0 0.0
      %v1471 = vand.u32 %v332, 4294901760
      %v1472 = vsub.f32 %v332, %v1471
      %v1473 = vand.u32 %v1472, 4294901760
      %1474 = vmatmul.mubr.f32.gmra.mrb[0].mxu0 %v1473
      %v1475 = vpop.f32.mrb[0].mxu0
      %v1476 = vadd.f32 %v1178, %v1475
      %v1477 = vpop.f32.mrb[0].mxu0
      %1478 = vmatprep.mubr.f32.mxu0 0.0
      %v1479 = vand.u32 %v335, 4294901760
      %v1480 = vsub.f32 %v335, %v1479
      %v1481 = vand.u32 %v1480, 4294901760
      %1482 = vmatmul.mubr.f32.gmra.mrb[0].mxu0 %v1481
      %v1483 = vpop.f32.mrb[0].mxu0
      %v1484 = vadd.f32 %v1185, %v1483
      %v1485 = vpop.f32.mrb[0].mxu0
      %1486 = vmatprep.mubr.f32.mxu0 0.0
      %v1487 = vand.u32 %v338, 4294901760
      %v1488 = vsub.f32 %v338, %v1487
      %v1489 = vand.u32 %v1488, 4294901760
      %1490 = vmatmul.mubr.f32.gmra.mrb[0].mxu0 %v1489
      %v1491 = vpop.f32.mrb[0].mxu0
      %v1492 = vadd.f32 %v1192, %v1491
      %v1493 = vpop.f32.mrb[0].mxu0
      %1494 = vmatprep.mubr.f32.mxu0 0.0
      %v1495 = vand.u32 %v341, 4294901760
      %v1496 = vsub.f32 %v341, %v1495
      %v1497 = vand.u32 %v1496, 4294901760
      %1498 = vmatmul.mubr.f32.gmra.mrb[0].mxu0 %v1497
      %v1499 = vpop.f32.mrb[0].mxu0
      %v1500 = vadd.f32 %v1199, %v1499
      %v1501 = vpop.f32.mrb[0].mxu0
      %1502 = vmatprep.mubr.f32.mxu0 0.0
      %v1503 = vand.u32 %v344, 4294901760
      %v1504 = vsub.f32 %v344, %v1503
      %v1505 = vand.u32 %v1504, 4294901760
      %1506 = vmatmul.mubr.f32.gmra.mrb[0].mxu0 %v1505
      %v1507 = vpop.f32.mrb[0].mxu0
      %v1508 = vadd.f32 %v1206, %v1507
      %v1509 = vpop.f32.mrb[0].mxu0
      %1510 = vmatprep.mubr.f32.mxu0 0.0
      %v1511 = vand.u32 %v347, 4294901760
      %v1512 = vsub.f32 %v347, %v1511
      %v1513 = vand.u32 %v1512, 4294901760
      %1514 = vmatmul.mubr.f32.gmra.mrb[0].mxu0 %v1513
      %v1515 = vpop.f32.mrb[0].mxu0
      %v1516 = vadd.f32 %v1213, %v1515
      %v1517 = vpop.f32.mrb[0].mxu0
      %1518 = vmatprep.mubr.f32.mxu0 0.0
      %v1519 = vand.u32 %v350, 4294901760
      %v1520 = vsub.f32 %v350, %v1519
      %v1521 = vand.u32 %v1520, 4294901760
      %1522 = vmatmul.mubr.f32.gmra.mrb[0].mxu0 %v1521
      %v1523 = vpop.f32.mrb[0].mxu0
      %v1524 = vadd.f32 %v1220, %v1523
      %v1525 = vpop.f32.mrb[0].mxu0
      %1526 = vmatprep.mubr.f32.mxu0 0.0
      %v1527 = vand.u32 %v353, 4294901760
      %v1528 = vsub.f32 %v353, %v1527
      %v1529 = vand.u32 %v1528, 4294901760
      %1530 = vmatmul.mubr.f32.gmra.mrb[0].mxu0 %v1529
      %v1531 = vpop.f32.mrb[0].mxu0
      %v1532 = vadd.f32 %v1227, %v1531
      %v1533 = vpop.f32.mrb[0].mxu0
      %1534 = vmatprep.mubr.f32.mxu0 0.0
      %v1535 = vand.u32 %v356, 4294901760
      %v1536 = vsub.f32 %v356, %v1535
      %v1537 = vand.u32 %v1536, 4294901760
      %1538 = vmatmul.mubr.f32.gmra.mrb[0].mxu0 %v1537
      %v1539 = vpop.f32.mrb[0].mxu0
      %v1540 = vadd.f32 %v1234, %v1539
      %v1541 = vpop.f32.mrb[0].mxu0
      %1542 = vmatprep.mubr.f32.mxu0 0.0
      %v1543 = vand.u32 %v359, 4294901760
      %v1544 = vsub.f32 %v359, %v1543
      %v1545 = vand.u32 %v1544, 4294901760
      %1546 = vmatmul.mubr.f32.gmra.mrb[0].mxu0 %v1545
      %v1547 = vpop.f32.mrb[0].mxu0
      %v1548 = vadd.f32 %v1241, %v1547
      %v1549 = vpop.f32.mrb[0].mxu0
      %1550 = vmatprep.mubr.f32.mxu0 0.0
      %v1551 = vand.u32 %v362, 4294901760
      %v1552 = vsub.f32 %v362, %v1551
      %v1553 = vand.u32 %v1552, 4294901760
      %1554 = vmatmul.mubr.f32.gmra.mrb[0].mxu0 %v1553
      %v1555 = vpop.f32.mrb[0].mxu0
      %v1556 = vadd.f32 %v1248, %v1555
      %v1557 = vpop.f32.mrb[0].mxu0
      %1558 = vmatprep.mubr.f32.mxu0 0.0
      %v1559 = vand.u32 %v365, 4294901760
      %v1560 = vsub.f32 %v365, %v1559
      %v1561 = vand.u32 %v1560, 4294901760
      %1562 = vmatmul.mubr.f32.gmra.mrb[0].mxu0 %v1561
      %v1563 = vpop.f32.mrb[0].mxu0
      %v1564 = vadd.f32 %v1255, %v1563
      %v1565 = vpop.f32.mrb[0].mxu0
      %1566 = vmatprep.mubr.f32.mxu0 0.0
      %v1567 = vand.u32 %v368, 4294901760
      %v1568 = vsub.f32 %v368, %v1567
      %v1569 = vand.u32 %v1568, 4294901760
      %1570 = vmatmul.mubr.f32.gmra.mrb[0].mxu0 %v1569
      %v1571 = vpop.f32.mrb[0].mxu0
      %v1572 = vadd.f32 %v1262, %v1571
      %v1573 = vpop.f32.mrb[0].mxu0
      %1574 = vmatprep.mubr.f32.mxu0 0.0
      %v1575 = vand.u32 %v371, 4294901760
      %v1576 = vsub.f32 %v371, %v1575
      %v1577 = vand.u32 %v1576, 4294901760
      %1578 = vmatmul.mubr.f32.gmra.mrb[0].mxu0 %v1577
      %v1579 = vpop.f32.mrb[0].mxu0
      %v1580 = vadd.f32 %v1269, %v1579
      %v1581 = vpop.f32.mrb[0].mxu0
      %1582 = vmatprep.mubr.f32.mxu0 0.0
      %v1583 = vand.u32 %v374, 4294901760
      %v1584 = vsub.f32 %v374, %v1583
      %v1585 = vand.u32 %v1584, 4294901760
      %1586 = vmatmul.mubr.f32.gmra.mrb[0].mxu0 %v1585
      %v1587 = vpop.f32.mrb[0].mxu0
      %v1588 = vadd.f32 %v1276, %v1587
      %v1589 = vpop.f32.mrb[0].mxu0
      %1590 = vmatprep.mubr.f32.mxu0 0.0
      %v1591 = vand.u32 %v377, 4294901760
      %v1592 = vsub.f32 %v377, %v1591
      %v1593 = vand.u32 %v1592, 4294901760
      %1594 = vmatmul.mubr.f32.gmra.mrb[0].mxu0 %v1593
      %v1595 = vpop.f32.mrb[0].mxu0
      %v1596 = vadd.f32 %v1283, %v1595
      %v1597 = vpop.f32.mrb[0].mxu0
      %1598 = vmatprep.mubr.f32.mxu0 0.0
      %v1599 = vand.u32 %v380, 4294901760
      %v1600 = vsub.f32 %v380, %v1599
      %v1601 = vand.u32 %v1600, 4294901760
      %1602 = vmatmul.mubr.f32.gmra.mrb[0].mxu0 %v1601
      %v1603 = vpop.f32.mrb[0].mxu0
      %v1604 = vadd.f32 %v1290, %v1603
      %v1605 = vpop.f32.mrb[0].mxu0
      %1606 = vmatprep.mubr.f32.mxu0 0.0
      %v1607 = vand.u32 %v383, 4294901760
      %v1608 = vsub.f32 %v383, %v1607
      %v1609 = vand.u32 %v1608, 4294901760
      %1610 = vmatmul.mubr.f32.gmra.mrb[0].mxu0 %v1609
      %v1611 = vpop.f32.mrb[0].mxu0
      %v1612 = vadd.f32 %v1297, %v1611
      %v1613 = vpop.f32.mrb[0].mxu0
      %1614 = vmatprep.mubr.f32.mxu0 0.0
      %v1615 = vand.u32 %v386, 4294901760
      %v1616 = vsub.f32 %v386, %v1615
      %v1617 = vand.u32 %v1616, 4294901760
      %1618 = vmatmul.mubr.f32.gmra.mrb[0].mxu0 %v1617
      %v1619 = vpop.f32.mrb[0].mxu0
      %v1620 = vadd.f32 %v1304, %v1619
      %v1621 = vpop.f32.mrb[0].mxu0
      %1622 = vmatprep.mubr.f32.mxu0 0.0
      %v1623 = vand.u32 %v389, 4294901760
      %v1624 = vsub.f32 %v389, %v1623
      %v1625 = vand.u32 %v1624, 4294901760
      %1626 = vmatmul.mubr.f32.gmra.mrb[0].mxu0 %v1625
      %v1627 = vpop.f32.mrb[0].mxu0
      %v1628 = vadd.f32 %v1311, %v1627
      %v1629 = vpop.f32.mrb[0].mxu0
      %1630 = vmatprep.mubr.f32.mxu0 0.0
      %v1631 = vand.u32 %v392, 4294901760
      %v1632 = vsub.f32 %v392, %v1631
      %v1633 = vand.u32 %v1632, 4294901760
      %1634 = vmatmul.mubr.f32.gmra.mrb[0].mxu0 %v1633
      %v1635 = vpop.f32.mrb[0].mxu0
      %v1636 = vadd.f32 %v1318, %v1635
      %v1637 = vpop.f32.mrb[0].mxu0
      %1638 = vmatprep.mubr.f32.mxu0 0.0
      %v1639 = vand.u32 %v395, 4294901760
      %v1640 = vsub.f32 %v395, %v1639
      %v1641 = vand.u32 %v1640, 4294901760
      %1642 = vmatmul.mubr.f32.gmra.mrb[0].mxu0 %v1641
      %v1643 = vpop.f32.mrb[0].mxu0
      %v1644 = vadd.f32 %v1325, %v1643
      %v1645 = vpop.f32.mrb[0].mxu0
      %1646 = vmatprep.mubr.f32.mxu0 0.0
      %v1647 = vand.u32 %v398, 4294901760
      %v1648 = vsub.f32 %v398, %v1647
      %v1649 = vand.u32 %v1648, 4294901760
      %1650 = vmatmul.mubr.f32.gmra.mrb[0].mxu0 %v1649
      %v1651 = vpop.f32.mrb[0].mxu0
      %v1652 = vadd.f32 %v1332, %v1651
      %v1653 = vpop.f32.mrb[0].mxu0
      %1654 = vmatprep.mubr.f32.mxu0 0.0
      %v1655 = vand.u32 %v401, 4294901760
      %v1656 = vsub.f32 %v401, %v1655
      %v1657 = vand.u32 %v1656, 4294901760
      %1658 = vmatmul.mubr.f32.gmra.mrb[0].mxu0 %v1657
      %v1659 = vpop.f32.mrb[0].mxu0
      %v1660 = vadd.f32 %v1339, %v1659
      %v1661 = vpop.f32.mrb[0].mxu0
      %1662 = vmatprep.mubr.f32.mxu0 0.0
      %v1663 = vand.u32 %v404, 4294901760
      %v1664 = vsub.f32 %v404, %v1663
      %v1665 = vand.u32 %v1664, 4294901760
      %1666 = vmatmul.mubr.f32.gmra.mrb[0].mxu0 %v1665
      %v1667 = vpop.f32.mrb[0].mxu0
      %v1668 = vadd.f32 %v1346, %v1667
      %v1669 = vpop.f32.mrb[0].mxu0
      %1670 = vdwg.mxu0
      %1671 = vmatprep.subr.mxu0 0.0
      %v1672 = vand.u32 %v408, 4294901760
      %v1673 = vsub.f32 %v408, %v1672
      %v1674 = vand.u32 %v1673, 4294901760
      %1675 = vmatpush1.msra.mxu0 %v1674
      %1676 = vmatprep.subr.mxu0 0.0
      %1677 = vmatpush1.msra.mxu0 0.0
      %1678 = vmatprep.subr.mxu0 0.0
      %1679 = vmatpush1.msra.mxu0 0.0
      %1680 = vmatprep.subr.mxu0 0.0
      %1681 = vmatpush1.msra.mxu0 0.0
      %1682 = vmatprep.subr.mxu0 0.0
      %1683 = vmatpush1.msra.mxu0 0.0
      %1684 = vmatprep.subr.mxu0 0.0
      %1685 = vmatpush1.msra.mxu0 0.0
      %1686 = vmatprep.subr.mxu0 0.0
      %1687 = vmatpush1.msra.mxu0 0.0
      %1688 = vmatprep.subr.mxu0 0.0
      %1689 = vmatpush1.msra.mxu0 0.0
      %1690 = vmatprep.subr.mxu0 0.0
      %1691 = vmatpush1.msra.mxu0 0.0
      %1692 = vmatprep.subr.mxu0 0.0
      %1693 = vmatpush1.msra.mxu0 0.0
      %1694 = vmatprep.subr.mxu0 0.0
      %1695 = vmatpush1.msra.mxu0 0.0
      %1696 = vmatprep.subr.mxu0 0.0
      %1697 = vmatpush1.msra.mxu0 0.0
      %1698 = vmatprep.subr.mxu0 0.0
      %1699 = vmatpush1.msra.mxu0 0.0
      %1700 = vmatprep.subr.mxu0 0.0
      %1701 = vmatpush1.msra.mxu0 0.0
      %1702 = vmatprep.subr.mxu0 0.0
      %1703 = vmatpush1.msra.mxu0 0.0
      %1704 = vmatprep.subr.mxu0 0.0
      %1705 = vmatpush1.msra.mxu0 0.0
      %1706 = vmatprep.subr.mxu0 0.0
      %1707 = vmatpush1.msra.mxu0 0.0
      %1708 = vmatprep.subr.mxu0 0.0
      %1709 = vmatpush1.msra.mxu0 0.0
      %1710 = vmatprep.subr.mxu0 0.0
      %1711 = vmatpush1.msra.mxu0 0.0
      %1712 = vmatprep.subr.mxu0 0.0
      %1713 = vmatpush1.msra.mxu0 0.0
      %1714 = vmatprep.subr.mxu0 0.0
      %1715 = vmatpush1.msra.mxu0 0.0
      %1716 = vmatprep.subr.mxu0 0.0
      %1717 = vmatpush1.msra.mxu0 0.0
      %1718 = vmatprep.subr.mxu0 0.0
      %1719 = vmatpush1.msra.mxu0 0.0
      %1720 = vmatprep.subr.mxu0 0.0
      %1721 = vmatpush1.msra.mxu0 0.0
      %1722 = vmatprep.subr.mxu0 0.0
      %1723 = vmatpush1.msra.mxu0 0.0
      %1724 = vmatprep.subr.mxu0 0.0
      %1725 = vmatpush1.msra.mxu0 0.0
      %1726 = vmatprep.subr.mxu0 0.0
      %1727 = vmatpush1.msra.mxu0 0.0
      %1728 = vmatprep.subr.mxu0 0.0
      %1729 = vmatpush1.msra.mxu0 0.0
      %1730 = vmatprep.subr.mxu0 0.0
      %1731 = vmatpush1.msra.mxu0 0.0
      %1732 = vmatprep.subr.mxu0 0.0
      %1733 = vmatpush1.msra.mxu0 0.0
      %1734 = vmatprep.subr.mxu0 0.0
      %1735 = vmatpush1.msra.mxu0 0.0
      %1736 = vmatprep.subr.mxu0 0.0
      %1737 = vmatpush1.msra.mxu0 0.0
      %1738 = vmatprep.mubr.f32.mxu0 0.0
      %v1739 = vand.u32 %v311, 4294901760
      %1740 = vmatmul.mubr.f32.gmra.mrb[0].mxu0 %v1739
      %v1741 = vpop.f32.mrb[0].mxu0
      %v1742 = vadd.f32 %v1420, %v1741
      %v1743 = vpop.f32.mrb[0].mxu0
      %1744 = vmatprep.mubr.f32.mxu0 0.0
      %v1745 = vand.u32 %v314, 4294901760
      %1746 = vmatmul.mubr.f32.gmra.mrb[0].mxu0 %v1745
      %v1747 = vpop.f32.mrb[0].mxu0
      %v1748 = vadd.f32 %v1428, %v1747
      %v1749 = vpop.f32.mrb[0].mxu0
      %1750 = vmatprep.mubr.f32.mxu0 0.0
      %v1751 = vand.u32 %v317, 4294901760
      %1752 = vmatmul.mubr.f32.gmra.mrb[0].mxu0 %v1751
      %v1753 = vpop.f32.mrb[0].mxu0
      %v1754 = vadd.f32 %v1436, %v1753
      %v1755 = vpop.f32.mrb[0].mxu0
      %1756 = vmatprep.mubr.f32.mxu0 0.0
      %v1757 = vand.u32 %v320, 4294901760
      %1758 = vmatmul.mubr.f32.gmra.mrb[0].mxu0 %v1757
      %v1759 = vpop.f32.mrb[0].mxu0
      %v1760 = vadd.f32 %v1444, %v1759
      %v1761 = vpop.f32.mrb[0].mxu0
      %1762 = vmatprep.mubr.f32.mxu0 0.0
      %v1763 = vand.u32 %v323, 4294901760
      %1764 = vmatmul.mubr.f32.gmra.mrb[0].mxu0 %v1763
      %v1765 = vpop.f32.mrb[0].mxu0
      %v1766 = vadd.f32 %v1452, %v1765
      %v1767 = vpop.f32.mrb[0].mxu0
      %1768 = vmatprep.mubr.f32.mxu0 0.0
      %v1769 = vand.u32 %v326, 4294901760
      %1770 = vmatmul.mubr.f32.gmra.mrb[0].mxu0 %v1769
      %v1771 = vpop.f32.mrb[0].mxu0
      %v1772 = vadd.f32 %v1460, %v1771
      %v1773 = vpop.f32.mrb[0].mxu0
      %1774 = vmatprep.mubr.f32.mxu0 0.0
      %v1775 = vand.u32 %v329, 4294901760
      %1776 = vmatmul.mubr.f32.gmra.mrb[0].mxu0 %v1775
      %v1777 = vpop.f32.mrb[0].mxu0
      %v1778 = vadd.f32 %v1468, %v1777
      %v1779 = vpop.f32.mrb[0].mxu0
      %1780 = vmatprep.mubr.f32.mxu0 0.0
      %v1781 = vand.u32 %v332, 4294901760
      %1782 = vmatmul.mubr.f32.gmra.mrb[0].mxu0 %v1781
      %v1783 = vpop.f32.mrb[0].mxu0
      %v1784 = vadd.f32 %v1476, %v1783
      %v1785 = vpop.f32.mrb[0].mxu0
      %1786 = vmatprep.mubr.f32.mxu0 0.0
      %v1787 = vand.u32 %v335, 4294901760
      %1788 = vmatmul.mubr.f32.gmra.mrb[0].mxu0 %v1787
      %v1789 = vpop.f32.mrb[0].mxu0
      %v1790 = vadd.f32 %v1484, %v1789
      %v1791 = vpop.f32.mrb[0].mxu0
      %1792 = vmatprep.mubr.f32.mxu0 0.0
      %v1793 = vand.u32 %v338, 4294901760
      %1794 = vmatmul.mubr.f32.gmra.mrb[0].mxu0 %v1793
      %v1795 = vpop.f32.mrb[0].mxu0
      %v1796 = vadd.f32 %v1492, %v1795
      %v1797 = vpop.f32.mrb[0].mxu0
      %1798 = vmatprep.mubr.f32.mxu0 0.0
      %v1799 = vand.u32 %v341, 4294901760
      %1800 = vmatmul.mubr.f32.gmra.mrb[0].mxu0 %v1799
      %v1801 = vpop.f32.mrb[0].mxu0
      %v1802 = vadd.f32 %v1500, %v1801
      %v1803 = vpop.f32.mrb[0].mxu0
      %1804 = vmatprep.mubr.f32.mxu0 0.0
      %v1805 = vand.u32 %v344, 4294901760
      %1806 = vmatmul.mubr.f32.gmra.mrb[0].mxu0 %v1805
      %v1807 = vpop.f32.mrb[0].mxu0
      %v1808 = vadd.f32 %v1508, %v1807
      %v1809 = vpop.f32.mrb[0].mxu0
      %1810 = vmatprep.mubr.f32.mxu0 0.0
      %v1811 = vand.u32 %v347, 4294901760
      %1812 = vmatmul.mubr.f32.gmra.mrb[0].mxu0 %v1811
      %v1813 = vpop.f32.mrb[0].mxu0
      %v1814 = vadd.f32 %v1516, %v1813
      %v1815 = vpop.f32.mrb[0].mxu0
      %1816 = vmatprep.mubr.f32.mxu0 0.0
      %v1817 = vand.u32 %v350, 4294901760
      %1818 = vmatmul.mubr.f32.gmra.mrb[0].mxu0 %v1817
      %v1819 = vpop.f32.mrb[0].mxu0
      %v1820 = vadd.f32 %v1524, %v1819
      %v1821 = vpop.f32.mrb[0].mxu0
      %1822 = vmatprep.mubr.f32.mxu0 0.0
      %v1823 = vand.u32 %v353, 4294901760
      %1824 = vmatmul.mubr.f32.gmra.mrb[0].mxu0 %v1823
      %v1825 = vpop.f32.mrb[0].mxu0
      %v1826 = vadd.f32 %v1532, %v1825
      %v1827 = vpop.f32.mrb[0].mxu0
      %1828 = vmatprep.mubr.f32.mxu0 0.0
      %v1829 = vand.u32 %v356, 4294901760
      %1830 = vmatmul.mubr.f32.gmra.mrb[0].mxu0 %v1829
      %v1831 = vpop.f32.mrb[0].mxu0
      %v1832 = vadd.f32 %v1540, %v1831
      %v1833 = vpop.f32.mrb[0].mxu0
      %1834 = vmatprep.mubr.f32.mxu0 0.0
      %v1835 = vand.u32 %v359, 4294901760
      %1836 = vmatmul.mubr.f32.gmra.mrb[0].mxu0 %v1835
      %v1837 = vpop.f32.mrb[0].mxu0
      %v1838 = vadd.f32 %v1548, %v1837
      %v1839 = vpop.f32.mrb[0].mxu0
      %1840 = vmatprep.mubr.f32.mxu0 0.0
      %v1841 = vand.u32 %v362, 4294901760
      %1842 = vmatmul.mubr.f32.gmra.mrb[0].mxu0 %v1841
      %v1843 = vpop.f32.mrb[0].mxu0
      %v1844 = vadd.f32 %v1556, %v1843
      %v1845 = vpop.f32.mrb[0].mxu0
      %1846 = vmatprep.mubr.f32.mxu0 0.0
      %v1847 = vand.u32 %v365, 4294901760
      %1848 = vmatmul.mubr.f32.gmra.mrb[0].mxu0 %v1847
      %v1849 = vpop.f32.mrb[0].mxu0
      %v1850 = vadd.f32 %v1564, %v1849
      %v1851 = vpop.f32.mrb[0].mxu0
      %1852 = vmatprep.mubr.f32.mxu0 0.0
      %v1853 = vand.u32 %v368, 4294901760
      %1854 = vmatmul.mubr.f32.gmra.mrb[0].mxu0 %v1853
      %v1855 = vpop.f32.mrb[0].mxu0
      %v1856 = vadd.f32 %v1572, %v1855
      %v1857 = vpop.f32.mrb[0].mxu0
      %1858 = vmatprep.mubr.f32.mxu0 0.0
      %v1859 = vand.u32 %v371, 4294901760
      %1860 = vmatmul.mubr.f32.gmra.mrb[0].mxu0 %v1859
      %v1861 = vpop.f32.mrb[0].mxu0
      %v1862 = vadd.f32 %v1580, %v1861
      %v1863 = vpop.f32.mrb[0].mxu0
      %1864 = vmatprep.mubr.f32.mxu0 0.0
      %v1865 = vand.u32 %v374, 4294901760
      %1866 = vmatmul.mubr.f32.gmra.mrb[0].mxu0 %v1865
      %v1867 = vpop.f32.mrb[0].mxu0
      %v1868 = vadd.f32 %v1588, %v1867
      %v1869 = vpop.f32.mrb[0].mxu0
      %1870 = vmatprep.mubr.f32.mxu0 0.0
      %v1871 = vand.u32 %v377, 4294901760
      %1872 = vmatmul.mubr.f32.gmra.mrb[0].mxu0 %v1871
      %v1873 = vpop.f32.mrb[0].mxu0
      %v1874 = vadd.f32 %v1596, %v1873
      %v1875 = vpop.f32.mrb[0].mxu0
      %1876 = vmatprep.mubr.f32.mxu0 0.0
      %v1877 = vand.u32 %v380, 4294901760
      %1878 = vmatmul.mubr.f32.gmra.mrb[0].mxu0 %v1877
      %v1879 = vpop.f32.mrb[0].mxu0
      %v1880 = vadd.f32 %v1604, %v1879
      %v1881 = vpop.f32.mrb[0].mxu0
      %1882 = vmatprep.mubr.f32.mxu0 0.0
      %v1883 = vand.u32 %v383, 4294901760
      %1884 = vmatmul.mubr.f32.gmra.mrb[0].mxu0 %v1883
      %v1885 = vpop.f32.mrb[0].mxu0
      %v1886 = vadd.f32 %v1612, %v1885
      %v1887 = vpop.f32.mrb[0].mxu0
      %1888 = vmatprep.mubr.f32.mxu0 0.0
      %v1889 = vand.u32 %v386, 4294901760
      %1890 = vmatmul.mubr.f32.gmra.mrb[0].mxu0 %v1889
      %v1891 = vpop.f32.mrb[0].mxu0
      %v1892 = vadd.f32 %v1620, %v1891
      %v1893 = vpop.f32.mrb[0].mxu0
      %1894 = vmatprep.mubr.f32.mxu0 0.0
      %v1895 = vand.u32 %v389, 4294901760
      %1896 = vmatmul.mubr.f32.gmra.mrb[0].mxu0 %v1895
      %v1897 = vpop.f32.mrb[0].mxu0
      %v1898 = vadd.f32 %v1628, %v1897
      %v1899 = vpop.f32.mrb[0].mxu0
      %1900 = vmatprep.mubr.f32.mxu0 0.0
      %v1901 = vand.u32 %v392, 4294901760
      %1902 = vmatmul.mubr.f32.gmra.mrb[0].mxu0 %v1901
      %v1903 = vpop.f32.mrb[0].mxu0
      %v1904 = vadd.f32 %v1636, %v1903
      %v1905 = vpop.f32.mrb[0].mxu0
      %1906 = vmatprep.mubr.f32.mxu0 0.0
      %v1907 = vand.u32 %v395, 4294901760
      %1908 = vmatmul.mubr.f32.gmra.mrb[0].mxu0 %v1907
      %v1909 = vpop.f32.mrb[0].mxu0
      %v1910 = vadd.f32 %v1644, %v1909
      %v1911 = vpop.f32.mrb[0].mxu0
      %1912 = vmatprep.mubr.f32.mxu0 0.0
      %v1913 = vand.u32 %v398, 4294901760
      %1914 = vmatmul.mubr.f32.gmra.mrb[0].mxu0 %v1913
      %v1915 = vpop.f32.mrb[0].mxu0
      %v1916 = vadd.f32 %v1652, %v1915
      %v1917 = vpop.f32.mrb[0].mxu0
      %1918 = vmatprep.mubr.f32.mxu0 0.0
      %v1919 = vand.u32 %v401, 4294901760
      %1920 = vmatmul.mubr.f32.gmra.mrb[0].mxu0 %v1919
      %v1921 = vpop.f32.mrb[0].mxu0
      %v1922 = vadd.f32 %v1660, %v1921
      %v1923 = vpop.f32.mrb[0].mxu0
      %1924 = vmatprep.mubr.f32.mxu0 0.0
      %v1925 = vand.u32 %v404, 4294901760
      %1926 = vmatmul.mubr.f32.gmra.mrb[0].mxu0 %v1925
      %v1927 = vpop.f32.mrb[0].mxu0
      %v1928 = vadd.f32 %v1668, %v1927
      %v1929 = vpop.f32.mrb[0].mxu0
      %1930 = vdwg.mxu0
      %1931 = vmatprep.subr.mxu0 0.0
      %v1932 = vand.u32 %v408, 4294901760
      %1933 = vmatpush1.msra.mxu0 %v1932
      %1934 = vmatprep.subr.mxu0 0.0
      %1935 = vmatpush1.msra.mxu0 0.0
      %1936 = vmatprep.subr.mxu0 0.0
      %1937 = vmatpush1.msra.mxu0 0.0
      %1938 = vmatprep.subr.mxu0 0.0
      %1939 = vmatpush1.msra.mxu0 0.0
      %1940 = vmatprep.subr.mxu0 0.0
      %1941 = vmatpush1.msra.mxu0 0.0
      %1942 = vmatprep.subr.mxu0 0.0
      %1943 = vmatpush1.msra.mxu0 0.0
      %1944 = vmatprep.subr.mxu0 0.0
      %1945 = vmatpush1.msra.mxu0 0.0
      %1946 = vmatprep.subr.mxu0 0.0
      %1947 = vmatpush1.msra.mxu0 0.0
      %1948 = vmatprep.subr.mxu0 0.0
      %1949 = vmatpush1.msra.mxu0 0.0
      %1950 = vmatprep.subr.mxu0 0.0
      %1951 = vmatpush1.msra.mxu0 0.0
      %1952 = vmatprep.subr.mxu0 0.0
      %1953 = vmatpush1.msra.mxu0 0.0
      %1954 = vmatprep.subr.mxu0 0.0
      %1955 = vmatpush1.msra.mxu0 0.0
      %1956 = vmatprep.subr.mxu0 0.0
      %1957 = vmatpush1.msra.mxu0 0.0
      %1958 = vmatprep.subr.mxu0 0.0
      %1959 = vmatpush1.msra.mxu0 0.0
      %1960 = vmatprep.subr.mxu0 0.0
      %1961 = vmatpush1.msra.mxu0 0.0
      %1962 = vmatprep.subr.mxu0 0.0
      %1963 = vmatpush1.msra.mxu0 0.0
      %1964 = vmatprep.subr.mxu0 0.0
      %1965 = vmatpush1.msra.mxu0 0.0
      %1966 = vmatprep.subr.mxu0 0.0
      %1967 = vmatpush1.msra.mxu0 0.0
      %1968 = vmatprep.subr.mxu0 0.0
      %1969 = vmatpush1.msra.mxu0 0.0
      %1970 = vmatprep.subr.mxu0 0.0
      %1971 = vmatpush1.msra.mxu0 0.0
      %1972 = vmatprep.subr.mxu0 0.0
      %1973 = vmatpush1.msra.mxu0 0.0
      %1974 = vmatprep.subr.mxu0 0.0
      %1975 = vmatpush1.msra.mxu0 0.0
      %1976 = vmatprep.subr.mxu0 0.0
      %1977 = vmatpush1.msra.mxu0 0.0
      %1978 = vmatprep.subr.mxu0 0.0
      %1979 = vmatpush1.msra.mxu0 0.0
      %1980 = vmatprep.subr.mxu0 0.0
      %1981 = vmatpush1.msra.mxu0 0.0
      %1982 = vmatprep.subr.mxu0 0.0
      %1983 = vmatpush1.msra.mxu0 0.0
      %1984 = vmatprep.subr.mxu0 0.0
      %1985 = vmatpush1.msra.mxu0 0.0
      %1986 = vmatprep.subr.mxu0 0.0
      %1987 = vmatpush1.msra.mxu0 0.0
      %1988 = vmatprep.subr.mxu0 0.0
      %1989 = vmatpush1.msra.mxu0 0.0
      %1990 = vmatprep.subr.mxu0 0.0
      %1991 = vmatpush1.msra.mxu0 0.0
      %1992 = vmatprep.subr.mxu0 0.0
      %1993 = vmatpush1.msra.mxu0 0.0
      %1994 = vmatprep.subr.mxu0 0.0
      %1995 = vmatpush1.msra.mxu0 0.0
      %1996 = vmatprep.mubr.f32.mxu0 0.0
      %v1997 = vand.u32 %v311, 4294901760
      %1998 = vmatmul.mubr.f32.gmra.mrb[0].mxu0 %v1997
      %v1999 = vpop.f32.mrb[0].mxu0
      %v2000 = vadd.f32 %v1742, %v1999
      %v2001 = vpop.f32.mrb[0].mxu0
      %2002 = vmatprep.mubr.f32.mxu0 0.0
      %v2003 = vand.u32 %v314, 4294901760
      %2004 = vmatmul.mubr.f32.gmra.mrb[0].mxu0 %v2003
      %v2005 = vpop.f32.mrb[0].mxu0
      %v2006 = vadd.f32 %v1748, %v2005
      %v2007 = vpop.f32.mrb[0].mxu0
      %2008 = vmatprep.mubr.f32.mxu0 0.0
      %v2009 = vand.u32 %v317, 4294901760
      %2010 = vmatmul.mubr.f32.gmra.mrb[0].mxu0 %v2009
      %v2011 = vpop.f32.mrb[0].mxu0
      %v2012 = vadd.f32 %v1754, %v2011
      %v2013 = vpop.f32.mrb[0].mxu0
      %2014 = vmatprep.mubr.f32.mxu0 0.0
      %v2015 = vand.u32 %v320, 4294901760
      %2016 = vmatmul.mubr.f32.gmra.mrb[0].mxu0 %v2015
      %v2017 = vpop.f32.mrb[0].mxu0
      %v2018 = vadd.f32 %v1760, %v2017
      %v2019 = vpop.f32.mrb[0].mxu0
      %2020 = vmatprep.mubr.f32.mxu0 0.0
      %v2021 = vand.u32 %v323, 4294901760
      %2022 = vmatmul.mubr.f32.gmra.mrb[0].mxu0 %v2021
      %v2023 = vpop.f32.mrb[0].mxu0
      %v2024 = vadd.f32 %v1766, %v2023
      %v2025 = vpop.f32.mrb[0].mxu0
      %2026 = vmatprep.mubr.f32.mxu0 0.0
      %v2027 = vand.u32 %v326, 4294901760
      %2028 = vmatmul.mubr.f32.gmra.mrb[0].mxu0 %v2027
      %v2029 = vpop.f32.mrb[0].mxu0
      %v2030 = vadd.f32 %v1772, %v2029
      %v2031 = vpop.f32.mrb[0].mxu0
      %2032 = vmatprep.mubr.f32.mxu0 0.0
      %v2033 = vand.u32 %v329, 4294901760
      %2034 = vmatmul.mubr.f32.gmra.mrb[0].mxu0 %v2033
      %v2035 = vpop.f32.mrb[0].mxu0
      %v2036 = vadd.f32 %v1778, %v2035
      %v2037 = vpop.f32.mrb[0].mxu0
      %2038 = vmatprep.mubr.f32.mxu0 0.0
      %v2039 = vand.u32 %v332, 4294901760
      %2040 = vmatmul.mubr.f32.gmra.mrb[0].mxu0 %v2039
      %v2041 = vpop.f32.mrb[0].mxu0
      %v2042 = vadd.f32 %v1784, %v2041
      %v2043 = vpop.f32.mrb[0].mxu0
      %2044 = vmatprep.mubr.f32.mxu0 0.0
      %v2045 = vand.u32 %v335, 4294901760
      %2046 = vmatmul.mubr.f32.gmra.mrb[0].mxu0 %v2045
      %v2047 = vpop.f32.mrb[0].mxu0
      %v2048 = vadd.f32 %v1790, %v2047
      %v2049 = vpop.f32.mrb[0].mxu0
      %2050 = vmatprep.mubr.f32.mxu0 0.0
      %v2051 = vand.u32 %v338, 4294901760
      %2052 = vmatmul.mubr.f32.gmra.mrb[0].mxu0 %v2051
      %v2053 = vpop.f32.mrb[0].mxu0
      %v2054 = vadd.f32 %v1796, %v2053
      %v2055 = vpop.f32.mrb[0].mxu0
      %2056 = vmatprep.mubr.f32.mxu0 0.0
      %v2057 = vand.u32 %v341, 4294901760
      %2058 = vmatmul.mubr.f32.gmra.mrb[0].mxu0 %v2057
      %v2059 = vpop.f32.mrb[0].mxu0
      %v2060 = vadd.f32 %v1802, %v2059
      %v2061 = vpop.f32.mrb[0].mxu0
      %2062 = vmatprep.mubr.f32.mxu0 0.0
      %v2063 = vand.u32 %v344, 4294901760
      %2064 = vmatmul.mubr.f32.gmra.mrb[0].mxu0 %v2063
      %v2065 = vpop.f32.mrb[0].mxu0
      %v2066 = vadd.f32 %v1808, %v2065
      %v2067 = vpop.f32.mrb[0].mxu0
      %2068 = vmatprep.mubr.f32.mxu0 0.0
      %v2069 = vand.u32 %v347, 4294901760
      %2070 = vmatmul.mubr.f32.gmra.mrb[0].mxu0 %v2069
      %v2071 = vpop.f32.mrb[0].mxu0
      %v2072 = vadd.f32 %v1814, %v2071
      %v2073 = vpop.f32.mrb[0].mxu0
      %2074 = vmatprep.mubr.f32.mxu0 0.0
      %v2075 = vand.u32 %v350, 4294901760
      %2076 = vmatmul.mubr.f32.gmra.mrb[0].mxu0 %v2075
      %v2077 = vpop.f32.mrb[0].mxu0
      %v2078 = vadd.f32 %v1820, %v2077
      %v2079 = vpop.f32.mrb[0].mxu0
      %2080 = vmatprep.mubr.f32.mxu0 0.0
      %v2081 = vand.u32 %v353, 4294901760
      %2082 = vmatmul.mubr.f32.gmra.mrb[0].mxu0 %v2081
      %v2083 = vpop.f32.mrb[0].mxu0
      %v2084 = vadd.f32 %v1826, %v2083
      %v2085 = vpop.f32.mrb[0].mxu0
      %2086 = vmatprep.mubr.f32.mxu0 0.0
      %v2087 = vand.u32 %v356, 4294901760
      %2088 = vmatmul.mubr.f32.gmra.mrb[0].mxu0 %v2087
      %v2089 = vpop.f32.mrb[0].mxu0
      %v2090 = vadd.f32 %v1832, %v2089
      %v2091 = vpop.f32.mrb[0].mxu0
      %2092 = vmatprep.mubr.f32.mxu0 0.0
      %v2093 = vand.u32 %v359, 4294901760
      %2094 = vmatmul.mubr.f32.gmra.mrb[0].mxu0 %v2093
      %v2095 = vpop.f32.mrb[0].mxu0
      %v2096 = vadd.f32 %v1838, %v2095
      %v2097 = vpop.f32.mrb[0].mxu0
      %2098 = vmatprep.mubr.f32.mxu0 0.0
      %v2099 = vand.u32 %v362, 4294901760
      %2100 = vmatmul.mubr.f32.gmra.mrb[0].mxu0 %v2099
      %v2101 = vpop.f32.mrb[0].mxu0
      %v2102 = vadd.f32 %v1844, %v2101
      %v2103 = vpop.f32.mrb[0].mxu0
      %2104 = vmatprep.mubr.f32.mxu0 0.0
      %v2105 = vand.u32 %v365, 4294901760
      %2106 = vmatmul.mubr.f32.gmra.mrb[0].mxu0 %v2105
      %v2107 = vpop.f32.mrb[0].mxu0
      %v2108 = vadd.f32 %v1850, %v2107
      %v2109 = vpop.f32.mrb[0].mxu0
      %2110 = vmatprep.mubr.f32.mxu0 0.0
      %v2111 = vand.u32 %v368, 4294901760
      %2112 = vmatmul.mubr.f32.gmra.mrb[0].mxu0 %v2111
      %v2113 = vpop.f32.mrb[0].mxu0
      %v2114 = vadd.f32 %v1856, %v2113
      %v2115 = vpop.f32.mrb[0].mxu0
      %2116 = vmatprep.mubr.f32.mxu0 0.0
      %v2117 = vand.u32 %v371, 4294901760
      %2118 = vmatmul.mubr.f32.gmra.mrb[0].mxu0 %v2117
      %v2119 = vpop.f32.mrb[0].mxu0
      %v2120 = vadd.f32 %v1862, %v2119
      %v2121 = vpop.f32.mrb[0].mxu0
      %2122 = vmatprep.mubr.f32.mxu0 0.0
      %v2123 = vand.u32 %v374, 4294901760
      %2124 = vmatmul.mubr.f32.gmra.mrb[0].mxu0 %v2123
      %v2125 = vpop.f32.mrb[0].mxu0
      %v2126 = vadd.f32 %v1868, %v2125
      %v2127 = vpop.f32.mrb[0].mxu0
      %2128 = vmatprep.mubr.f32.mxu0 0.0
      %v2129 = vand.u32 %v377, 4294901760
      %2130 = vmatmul.mubr.f32.gmra.mrb[0].mxu0 %v2129
      %v2131 = vpop.f32.mrb[0].mxu0
      %v2132 = vadd.f32 %v1874, %v2131
      %v2133 = vpop.f32.mrb[0].mxu0
      %2134 = vmatprep.mubr.f32.mxu0 0.0
      %v2135 = vand.u32 %v380, 4294901760
      %2136 = vmatmul.mubr.f32.gmra.mrb[0].mxu0 %v2135
      %v2137 = vpop.f32.mrb[0].mxu0
      %v2138 = vadd.f32 %v1880, %v2137
      %v2139 = vpop.f32.mrb[0].mxu0
      %2140 = vmatprep.mubr.f32.mxu0 0.0
      %v2141 = vand.u32 %v383, 4294901760
      %2142 = vmatmul.mubr.f32.gmra.mrb[0].mxu0 %v2141
      %v2143 = vpop.f32.mrb[0].mxu0
      %v2144 = vadd.f32 %v1886, %v2143
      %v2145 = vpop.f32.mrb[0].mxu0
      %2146 = vmatprep.mubr.f32.mxu0 0.0
      %v2147 = vand.u32 %v386, 4294901760
      %2148 = vmatmul.mubr.f32.gmra.mrb[0].mxu0 %v2147
      %v2149 = vpop.f32.mrb[0].mxu0
      %v2150 = vadd.f32 %v1892, %v2149
      %v2151 = vpop.f32.mrb[0].mxu0
      %2152 = vmatprep.mubr.f32.mxu0 0.0
      %v2153 = vand.u32 %v389, 4294901760
      %2154 = vmatmul.mubr.f32.gmra.mrb[0].mxu0 %v2153
      %v2155 = vpop.f32.mrb[0].mxu0
      %v2156 = vadd.f32 %v1898, %v2155
      %v2157 = vpop.f32.mrb[0].mxu0
      %2158 = vmatprep.mubr.f32.mxu0 0.0
      %v2159 = vand.u32 %v392, 4294901760
      %2160 = vmatmul.mubr.f32.gmra.mrb[0].mxu0 %v2159
      %v2161 = vpop.f32.mrb[0].mxu0
      %v2162 = vadd.f32 %v1904, %v2161
      %v2163 = vpop.f32.mrb[0].mxu0
      %2164 = vmatprep.mubr.f32.mxu0 0.0
      %v2165 = vand.u32 %v395, 4294901760
      %2166 = vmatmul.mubr.f32.gmra.mrb[0].mxu0 %v2165
      %v2167 = vpop.f32.mrb[0].mxu0
      %v2168 = vadd.f32 %v1910, %v2167
      %v2169 = vpop.f32.mrb[0].mxu0
      %2170 = vmatprep.mubr.f32.mxu0 0.0
      %v2171 = vand.u32 %v398, 4294901760
      %2172 = vmatmul.mubr.f32.gmra.mrb[0].mxu0 %v2171
      %v2173 = vpop.f32.mrb[0].mxu0
      %v2174 = vadd.f32 %v1916, %v2173
      %v2175 = vpop.f32.mrb[0].mxu0
      %2176 = vmatprep.mubr.f32.mxu0 0.0
      %v2177 = vand.u32 %v401, 4294901760
      %2178 = vmatmul.mubr.f32.gmra.mrb[0].mxu0 %v2177
      %v2179 = vpop.f32.mrb[0].mxu0
      %v2180 = vadd.f32 %v1922, %v2179
      %v2181 = vpop.f32.mrb[0].mxu0
      %2182 = vmatprep.mubr.f32.mxu0 0.0
      %v2183 = vand.u32 %v404, 4294901760
      %2184 = vmatmul.mubr.f32.gmra.mrb[0].mxu0 %v2183
      %v2185 = vpop.f32.mrb[0].mxu0
      %v2186 = vadd.f32 %v1928, %v2185
      %v2187 = vpop.f32.mrb[0].mxu0
      %2188 = vdwg.mxu0
      %vm2189 = vcmask 64512
      %v2190 = vsel %vm2189, %v2000, -inf
      %v2191 = vsel %vm2189, %v2006, -inf
      %v2192 = vmax.f32 %v2190, %v2191
      %v2193 = vrot.slane %v2192, 4
      %v2194 = vmax.f32 %v2192, %v2193
      %v2195 = vrot.slane %v2194, 2
      %v2196 = vmax.f32 %v2194, %v2195
      %v2197 = vrot.slane %v2196, 1
      %v2198 = vmax.f32 %v2196, %v2197
      %v2199 = vsel %vm2189, %v2012, -inf
      %v2200 = vsel %vm2189, %v2018, -inf
      %v2201 = vmax.f32 %v2199, %v2200
      %v2202 = vrot.slane %v2201, 4
      %v2203 = vmax.f32 %v2201, %v2202
      %v2204 = vrot.slane %v2203, 2
      %v2205 = vmax.f32 %v2203, %v2204
      %v2206 = vrot.slane %v2205, 1
      %v2207 = vmax.f32 %v2205, %v2206
      %v2208 = vsel %vm2189, %v2024, -inf
      %v2209 = vsel %vm2189, %v2030, -inf
      %v2210 = vmax.f32 %v2208, %v2209
      %v2211 = vrot.slane %v2210, 4
      %v2212 = vmax.f32 %v2210, %v2211
      %v2213 = vrot.slane %v2212, 2
      %v2214 = vmax.f32 %v2212, %v2213
      %v2215 = vrot.slane %v2214, 1
      %v2216 = vmax.f32 %v2214, %v2215
      %v2217 = vsel %vm2189, %v2036, -inf
      %v2218 = vsel %vm2189, %v2042, -inf
      %v2219 = vmax.f32 %v2217, %v2218
      %v2220 = vrot.slane %v2219, 4
      %v2221 = vmax.f32 %v2219, %v2220
      %v2222 = vrot.slane %v2221, 2
      %v2223 = vmax.f32 %v2221, %v2222
      %v2224 = vrot.slane %v2223, 1
      %v2225 = vmax.f32 %v2223, %v2224
      %v2226 = vsel %vm2189, %v2048, -inf
      %v2227 = vsel %vm2189, %v2054, -inf
      %v2228 = vmax.f32 %v2226, %v2227
      %v2229 = vrot.slane %v2228, 4
      %v2230 = vmax.f32 %v2228, %v2229
      %v2231 = vrot.slane %v2230, 2
      %v2232 = vmax.f32 %v2230, %v2231
      %v2233 = vrot.slane %v2232, 1
      %v2234 = vmax.f32 %v2232, %v2233
      %v2235 = vsel %vm2189, %v2060, -inf
      %v2236 = vsel %vm2189, %v2066, -inf
      %v2237 = vmax.f32 %v2235, %v2236
      %v2238 = vrot.slane %v2237, 4
      %v2239 = vmax.f32 %v2237, %v2238
      %v2240 = vrot.slane %v2239, 2
      %v2241 = vmax.f32 %v2239, %v2240
      %v2242 = vrot.slane %v2241, 1
      %v2243 = vmax.f32 %v2241, %v2242
      %v2244 = vsel %vm2189, %v2072, -inf
      %v2245 = vsel %vm2189, %v2078, -inf
      %v2246 = vmax.f32 %v2244, %v2245
      %v2247 = vrot.slane %v2246, 4
      %v2248 = vmax.f32 %v2246, %v2247
      %v2249 = vrot.slane %v2248, 2
      %v2250 = vmax.f32 %v2248, %v2249
      %v2251 = vrot.slane %v2250, 1
      %v2252 = vmax.f32 %v2250, %v2251
      %v2253 = vsel %vm2189, %v2084, -inf
      %v2254 = vsel %vm2189, %v2090, -inf
      %v2255 = vmax.f32 %v2253, %v2254
      %v2256 = vrot.slane %v2255, 4
      %v2257 = vmax.f32 %v2255, %v2256
      %v2258 = vrot.slane %v2257, 2
      %v2259 = vmax.f32 %v2257, %v2258
      %v2260 = vrot.slane %v2259, 1
      %v2261 = vmax.f32 %v2259, %v2260
      %v2262 = vsel %vm2189, %v2096, -inf
      %v2263 = vsel %vm2189, %v2102, -inf
      %v2264 = vmax.f32 %v2262, %v2263
      %v2265 = vrot.slane %v2264, 4
      %v2266 = vmax.f32 %v2264, %v2265
      %v2267 = vrot.slane %v2266, 2
      %v2268 = vmax.f32 %v2266, %v2267
      %v2269 = vrot.slane %v2268, 1
      %v2270 = vmax.f32 %v2268, %v2269
      %v2271 = vsel %vm2189, %v2108, -inf
      %v2272 = vsel %vm2189, %v2114, -inf
      %v2273 = vmax.f32 %v2271, %v2272
      %v2274 = vrot.slane %v2273, 4
      %v2275 = vmax.f32 %v2273, %v2274
      %v2276 = vrot.slane %v2275, 2
      %v2277 = vmax.f32 %v2275, %v2276
      %v2278 = vrot.slane %v2277, 1
      %v2279 = vmax.f32 %v2277, %v2278
      %v2280 = vsel %vm2189, %v2120, -inf
      %v2281 = vsel %vm2189, %v2126, -inf
      %v2282 = vmax.f32 %v2280, %v2281
      %v2283 = vrot.slane %v2282, 4
      %v2284 = vmax.f32 %v2282, %v2283
      %v2285 = vrot.slane %v2284, 2
      %v2286 = vmax.f32 %v2284, %v2285
      %v2287 = vrot.slane %v2286, 1
      %v2288 = vmax.f32 %v2286, %v2287
      %v2289 = vsel %vm2189, %v2132, -inf
      %v2290 = vsel %vm2189, %v2138, -inf
      %v2291 = vmax.f32 %v2289, %v2290
      %v2292 = vrot.slane %v2291, 4
      %v2293 = vmax.f32 %v2291, %v2292
      %v2294 = vrot.slane %v2293, 2
      %v2295 = vmax.f32 %v2293, %v2294
      %v2296 = vrot.slane %v2295, 1
      %v2297 = vmax.f32 %v2295, %v2296
      %v2298 = vsel %vm2189, %v2144, -inf
      %v2299 = vsel %vm2189, %v2150, -inf
      %v2300 = vmax.f32 %v2298, %v2299
      %v2301 = vrot.slane %v2300, 4
      %v2302 = vmax.f32 %v2300, %v2301
      %v2303 = vrot.slane %v2302, 2
      %v2304 = vmax.f32 %v2302, %v2303
      %v2305 = vrot.slane %v2304, 1
      %v2306 = vmax.f32 %v2304, %v2305
      %v2307 = vsel %vm2189, %v2156, -inf
      %v2308 = vsel %vm2189, %v2162, -inf
      %v2309 = vmax.f32 %v2307, %v2308
      %v2310 = vrot.slane %v2309, 4
      %v2311 = vmax.f32 %v2309, %v2310
      %v2312 = vrot.slane %v2311, 2
      %v2313 = vmax.f32 %v2311, %v2312
      %v2314 = vrot.slane %v2313, 1
      %v2315 = vmax.f32 %v2313, %v2314
      %v2316 = vsel %vm2189, %v2168, -inf
      %v2317 = vsel %vm2189, %v2174, -inf
      %v2318 = vmax.f32 %v2316, %v2317
      %v2319 = vrot.slane %v2318, 4
      %v2320 = vmax.f32 %v2318, %v2319
      %v2321 = vrot.slane %v2320, 2
      %v2322 = vmax.f32 %v2320, %v2321
      %v2323 = vrot.slane %v2322, 1
      %v2324 = vmax.f32 %v2322, %v2323
      %v2325 = vsel %vm2189, %v2180, -inf
      %v2326 = vsel %vm2189, %v2186, -inf
      %v2327 = vmax.f32 %v2325, %v2326
      %v2328 = vrot.slane %v2327, 4
      %v2329 = vmax.f32 %v2327, %v2328
      %v2330 = vrot.slane %v2329, 2
      %v2331 = vmax.f32 %v2329, %v2330
      %v2332 = vrot.slane %v2331, 1
      %v2333 = vmax.f32 %v2331, %v2332
      %v2334 = vsub.f32 %v2000, %v2198
      %v2335 = vsub.f32 %v2006, %v2198
      %v2336 = vsub.f32 %v2012, %v2207
      %v2337 = vsub.f32 %v2018, %v2207
      %v2338 = vsub.f32 %v2024, %v2216
      %v2339 = vsub.f32 %v2030, %v2216
      %v2340 = vsub.f32 %v2036, %v2225
      %v2341 = vsub.f32 %v2042, %v2225
      %v2342 = vsub.f32 %v2048, %v2234
      %v2343 = vsub.f32 %v2054, %v2234
      %v2344 = vsub.f32 %v2060, %v2243
      %v2345 = vsub.f32 %v2066, %v2243
      %v2346 = vsub.f32 %v2072, %v2252
      %v2347 = vsub.f32 %v2078, %v2252
      %v2348 = vsub.f32 %v2084, %v2261
      %v2349 = vsub.f32 %v2090, %v2261
      %v2350 = vsub.f32 %v2096, %v2270
      %v2351 = vsub.f32 %v2102, %v2270
      %v2352 = vsub.f32 %v2108, %v2279
      %v2353 = vsub.f32 %v2114, %v2279
      %v2354 = vsub.f32 %v2120, %v2288
      %v2355 = vsub.f32 %v2126, %v2288
      %v2356 = vsub.f32 %v2132, %v2297
      %v2357 = vsub.f32 %v2138, %v2297
      %v2358 = vsub.f32 %v2144, %v2306
      %v2359 = vsub.f32 %v2150, %v2306
      %v2360 = vsub.f32 %v2156, %v2315
      %v2361 = vsub.f32 %v2162, %v2315
      %v2362 = vsub.f32 %v2168, %v2324
      %v2363 = vsub.f32 %v2174, %v2324
      %v2364 = vsub.f32 %v2180, %v2333
      %v2365 = vsub.f32 %v2186, %v2333
      %v2366 = vmul.f32 %v2334, 1.442695
      %v2367 = vpow.pop %v2366
      %v2368 = vmul.f32 %v2335, 1.442695
      %v2369 = vpow.pop %v2368
      %v2370 = vmul.f32 %v2336, 1.442695
      %v2371 = vpow.pop %v2370
      %v2372 = vmul.f32 %v2337, 1.442695
      %v2373 = vpow.pop %v2372
      %v2374 = vmul.f32 %v2338, 1.442695
      %v2375 = vpow.pop %v2374
      %v2376 = vmul.f32 %v2339, 1.442695
      %v2377 = vpow.pop %v2376
      %v2378 = vmul.f32 %v2340, 1.442695
      %v2379 = vpow.pop %v2378
      %v2380 = vmul.f32 %v2341, 1.442695
      %v2381 = vpow.pop %v2380
      %v2382 = vmul.f32 %v2342, 1.442695
      %v2383 = vpow.pop %v2382
      %v2384 = vmul.f32 %v2343, 1.442695
      %v2385 = vpow.pop %v2384
      %v2386 = vmul.f32 %v2344, 1.442695
      %v2387 = vpow.pop %v2386
      %v2388 = vmul.f32 %v2345, 1.442695
      %v2389 = vpow.pop %v2388
      %v2390 = vmul.f32 %v2346, 1.442695
      %v2391 = vpow.pop %v2390
      %v2392 = vmul.f32 %v2347, 1.442695
      %v2393 = vpow.pop %v2392
      %v2394 = vmul.f32 %v2348, 1.442695
      %v2395 = vpow.pop %v2394
      %v2396 = vmul.f32 %v2349, 1.442695
      %v2397 = vpow.pop %v2396
      %v2398 = vmul.f32 %v2350, 1.442695
      %v2399 = vpow.pop %v2398
      %v2400 = vmul.f32 %v2351, 1.442695
      %v2401 = vpow.pop %v2400
      %v2402 = vmul.f32 %v2352, 1.442695
      %v2403 = vpow.pop %v2402
      %v2404 = vmul.f32 %v2353, 1.442695
      %v2405 = vpow.pop %v2404
      %v2406 = vmul.f32 %v2354, 1.442695
      %v2407 = vpow.pop %v2406
      %v2408 = vmul.f32 %v2355, 1.442695
      %v2409 = vpow.pop %v2408
      %v2410 = vmul.f32 %v2356, 1.442695
      %v2411 = vpow.pop %v2410
      %v2412 = vmul.f32 %v2357, 1.442695
      %v2413 = vpow.pop %v2412
      %v2414 = vmul.f32 %v2358, 1.442695
      %v2415 = vpow.pop %v2414
      %v2416 = vmul.f32 %v2359, 1.442695
      %v2417 = vpow.pop %v2416
      %v2418 = vmul.f32 %v2360, 1.442695
      %v2419 = vpow.pop %v2418
      %v2420 = vmul.f32 %v2361, 1.442695
      %v2421 = vpow.pop %v2420
      %v2422 = vmul.f32 %v2362, 1.442695
      %v2423 = vpow.pop %v2422
      %v2424 = vmul.f32 %v2363, 1.442695
      %v2425 = vpow.pop %v2424
      %v2426 = vmul.f32 %v2364, 1.442695
      %v2427 = vpow.pop %v2426
      %v2428 = vmul.f32 %v2365, 1.442695
      %v2429 = vpow.pop %v2428
      %v2430 = vsel %vm2189, %v2367, 0.0
      %v2431 = vsel %vm2189, %v2369, 0.0
      %v2432 = vadd.f32 %v2430, %v2431
      %v2433 = vrot.slane %v2432, 4
      %v2434 = vadd.f32 %v2432, %v2433
      %v2435 = vrot.slane %v2434, 2
      %v2436 = vadd.f32 %v2434, %v2435
      %v2437 = vrot.slane %v2436, 1
      %v2438 = vadd.f32 %v2436, %v2437
      %v2439 = vsel %vm2189, %v2371, 0.0
      %v2440 = vsel %vm2189, %v2373, 0.0
      %v2441 = vadd.f32 %v2439, %v2440
      %v2442 = vrot.slane %v2441, 4
      %v2443 = vadd.f32 %v2441, %v2442
      %v2444 = vrot.slane %v2443, 2
      %v2445 = vadd.f32 %v2443, %v2444
      %v2446 = vrot.slane %v2445, 1
      %v2447 = vadd.f32 %v2445, %v2446
      %v2448 = vsel %vm2189, %v2375, 0.0
      %v2449 = vsel %vm2189, %v2377, 0.0
      %v2450 = vadd.f32 %v2448, %v2449
      %v2451 = vrot.slane %v2450, 4
      %v2452 = vadd.f32 %v2450, %v2451
      %v2453 = vrot.slane %v2452, 2
      %v2454 = vadd.f32 %v2452, %v2453
      %v2455 = vrot.slane %v2454, 1
      %v2456 = vadd.f32 %v2454, %v2455
      %v2457 = vsel %vm2189, %v2379, 0.0
      %v2458 = vsel %vm2189, %v2381, 0.0
      %v2459 = vadd.f32 %v2457, %v2458
      %v2460 = vrot.slane %v2459, 4
      %v2461 = vadd.f32 %v2459, %v2460
      %v2462 = vrot.slane %v2461, 2
      %v2463 = vadd.f32 %v2461, %v2462
      %v2464 = vrot.slane %v2463, 1
      %v2465 = vadd.f32 %v2463, %v2464
      %v2466 = vsel %vm2189, %v2383, 0.0
      %v2467 = vsel %vm2189, %v2385, 0.0
      %v2468 = vadd.f32 %v2466, %v2467
      %v2469 = vrot.slane %v2468, 4
      %v2470 = vadd.f32 %v2468, %v2469
      %v2471 = vrot.slane %v2470, 2
      %v2472 = vadd.f32 %v2470, %v2471
      %v2473 = vrot.slane %v2472, 1
      %v2474 = vadd.f32 %v2472, %v2473
      %v2475 = vsel %vm2189, %v2387, 0.0
      %v2476 = vsel %vm2189, %v2389, 0.0
      %v2477 = vadd.f32 %v2475, %v2476
      %v2478 = vrot.slane %v2477, 4
      %v2479 = vadd.f32 %v2477, %v2478
      %v2480 = vrot.slane %v2479, 2
      %v2481 = vadd.f32 %v2479, %v2480
      %v2482 = vrot.slane %v2481, 1
      %v2483 = vadd.f32 %v2481, %v2482
      %v2484 = vsel %vm2189, %v2391, 0.0
      %v2485 = vsel %vm2189, %v2393, 0.0
      %v2486 = vadd.f32 %v2484, %v2485
      %v2487 = vrot.slane %v2486, 4
      %v2488 = vadd.f32 %v2486, %v2487
      %v2489 = vrot.slane %v2488, 2
      %v2490 = vadd.f32 %v2488, %v2489
      %v2491 = vrot.slane %v2490, 1
      %v2492 = vadd.f32 %v2490, %v2491
      %v2493 = vsel %vm2189, %v2395, 0.0
      %v2494 = vsel %vm2189, %v2397, 0.0
      %v2495 = vadd.f32 %v2493, %v2494
      %v2496 = vrot.slane %v2495, 4
      %v2497 = vadd.f32 %v2495, %v2496
      %v2498 = vrot.slane %v2497, 2
      %v2499 = vadd.f32 %v2497, %v2498
      %v2500 = vrot.slane %v2499, 1
      %v2501 = vadd.f32 %v2499, %v2500
      %v2502 = vsel %vm2189, %v2399, 0.0
      %v2503 = vsel %vm2189, %v2401, 0.0
      %v2504 = vadd.f32 %v2502, %v2503
      %v2505 = vrot.slane %v2504, 4
      %v2506 = vadd.f32 %v2504, %v2505
      %v2507 = vrot.slane %v2506, 2
      %v2508 = vadd.f32 %v2506, %v2507
      %v2509 = vrot.slane %v2508, 1
      %v2510 = vadd.f32 %v2508, %v2509
      %v2511 = vsel %vm2189, %v2403, 0.0
      %v2512 = vsel %vm2189, %v2405, 0.0
      %v2513 = vadd.f32 %v2511, %v2512
      %v2514 = vrot.slane %v2513, 4
      %v2515 = vadd.f32 %v2513, %v2514
      %v2516 = vrot.slane %v2515, 2
      %v2517 = vadd.f32 %v2515, %v2516
      %v2518 = vrot.slane %v2517, 1
      %v2519 = vadd.f32 %v2517, %v2518
      %v2520 = vsel %vm2189, %v2407, 0.0
      %v2521 = vsel %vm2189, %v2409, 0.0
      %v2522 = vadd.f32 %v2520, %v2521
      %v2523 = vrot.slane %v2522, 4
      %v2524 = vadd.f32 %v2522, %v2523
      %v2525 = vrot.slane %v2524, 2
      %v2526 = vadd.f32 %v2524, %v2525
      %v2527 = vrot.slane %v2526, 1
      %v2528 = vadd.f32 %v2526, %v2527
      %v2529 = vsel %vm2189, %v2411, 0.0
      %v2530 = vsel %vm2189, %v2413, 0.0
      %v2531 = vadd.f32 %v2529, %v2530
      %v2532 = vrot.slane %v2531, 4
      %v2533 = vadd.f32 %v2531, %v2532
      %v2534 = vrot.slane %v2533, 2
      %v2535 = vadd.f32 %v2533, %v2534
      %v2536 = vrot.slane %v2535, 1
      %v2537 = vadd.f32 %v2535, %v2536
      %v2538 = vsel %vm2189, %v2415, 0.0
      %v2539 = vsel %vm2189, %v2417, 0.0
      %v2540 = vadd.f32 %v2538, %v2539
      %v2541 = vrot.slane %v2540, 4
      %v2542 = vadd.f32 %v2540, %v2541
      %v2543 = vrot.slane %v2542, 2
      %v2544 = vadd.f32 %v2542, %v2543
      %v2545 = vrot.slane %v2544, 1
      %v2546 = vadd.f32 %v2544, %v2545
      %v2547 = vsel %vm2189, %v2419, 0.0
      %v2548 = vsel %vm2189, %v2421, 0.0
      %v2549 = vadd.f32 %v2547, %v2548
      %v2550 = vrot.slane %v2549, 4
      %v2551 = vadd.f32 %v2549, %v2550
      %v2552 = vrot.slane %v2551, 2
      %v2553 = vadd.f32 %v2551, %v2552
      %v2554 = vrot.slane %v2553, 1
      %v2555 = vadd.f32 %v2553, %v2554
      %v2556 = vsel %vm2189, %v2423, 0.0
      %v2557 = vsel %vm2189, %v2425, 0.0
      %v2558 = vadd.f32 %v2556, %v2557
      %v2559 = vrot.slane %v2558, 4
      %v2560 = vadd.f32 %v2558, %v2559
      %v2561 = vrot.slane %v2560, 2
      %v2562 = vadd.f32 %v2560, %v2561
      %v2563 = vrot.slane %v2562, 1
      %v2564 = vadd.f32 %v2562, %v2563
      %v2565 = vsel %vm2189, %v2427, 0.0
      %v2566 = vsel %vm2189, %v2429, 0.0
      %v2567 = vadd.f32 %v2565, %v2566
      %v2568 = vrot.slane %v2567, 4
      %v2569 = vadd.f32 %v2567, %v2568
      %v2570 = vrot.slane %v2569, 2
      %v2571 = vadd.f32 %v2569, %v2570
      %v2572 = vrot.slane %v2571, 1
      %v2573 = vadd.f32 %v2571, %v2572
      %v2574 = vrcp.pop %v2438
      %v2575 = vrcp.pop %v2447
      %v2576 = vrcp.pop %v2456
      %v2577 = vrcp.pop %v2465
      %v2578 = vrcp.pop %v2474
      %v2579 = vrcp.pop %v2483
      %v2580 = vrcp.pop %v2492
      %v2581 = vrcp.pop %v2501
      %v2582 = vrcp.pop %v2510
      %v2583 = vrcp.pop %v2519
      %v2584 = vrcp.pop %v2528
      %v2585 = vrcp.pop %v2537
      %v2586 = vrcp.pop %v2546
      %v2587 = vrcp.pop %v2555
      %v2588 = vrcp.pop %v2564
      %v2589 = vrcp.pop %v2573
      %v2590 = vmul.f32 %v2367, %v2574
      %v2591 = vmul.f32 %v2369, %v2574
      %v2592 = vmul.f32 %v2371, %v2575
      %v2593 = vmul.f32 %v2373, %v2575
      %v2594 = vmul.f32 %v2375, %v2576
      %v2595 = vmul.f32 %v2377, %v2576
      %v2596 = vmul.f32 %v2379, %v2577
      %v2597 = vmul.f32 %v2381, %v2577
      %v2598 = vmul.f32 %v2383, %v2578
      %v2599 = vmul.f32 %v2385, %v2578
      %v2600 = vmul.f32 %v2387, %v2579
      %v2601 = vmul.f32 %v2389, %v2579
      %v2602 = vmul.f32 %v2391, %v2580
      %v2603 = vmul.f32 %v2393, %v2580
      %v2604 = vmul.f32 %v2395, %v2581
      %v2605 = vmul.f32 %v2397, %v2581
      %v2606 = vmul.f32 %v2399, %v2582
      %v2607 = vmul.f32 %v2401, %v2582
      %v2608 = vmul.f32 %v2403, %v2583
      %v2609 = vmul.f32 %v2405, %v2583
      %v2610 = vmul.f32 %v2407, %v2584
      %v2611 = vmul.f32 %v2409, %v2584
      %v2612 = vmul.f32 %v2411, %v2585
      %v2613 = vmul.f32 %v2413, %v2585
      %v2614 = vmul.f32 %v2415, %v2586
      %v2615 = vmul.f32 %v2417, %v2586
      %v2616 = vmul.f32 %v2419, %v2587
      %v2617 = vmul.f32 %v2421, %v2587
      %v2618 = vmul.f32 %v2423, %v2588
      %v2619 = vmul.f32 %v2425, %v2588
      %v2620 = vmul.f32 %v2427, %v2589
      %v2621 = vmul.f32 %v2429, %v2589
      %v2622 = vsel %vm2189, %v2590, 0.0
      %2623 = vadd.xlane.f32.xlu0 %v2622
      %v2624 = vpop.xlane.xlu0 %2623
      %v2625 = vsel %vm2189, %v2591, 0.0
      %2626 = vadd.xlane.f32.xlu0 %v2625
      %v2627 = vpop.xlane.xlu0 %2626
      %v2628 = vsel %vm2189, %v2592, 0.0
      %2629 = vadd.xlane.f32.xlu0 %v2628
      %v2630 = vpop.xlane.xlu0 %2629
      %v2631 = vsel %vm2189, %v2593, 0.0
      %2632 = vadd.xlane.f32.xlu0 %v2631
      %v2633 = vpop.xlane.xlu0 %2632
      %v2634 = vsel %vm2189, %v2594, 0.0
      %2635 = vadd.xlane.f32.xlu0 %v2634
      %v2636 = vpop.xlane.xlu0 %2635
      %v2637 = vsel %vm2189, %v2595, 0.0
      %2638 = vadd.xlane.f32.xlu0 %v2637
      %v2639 = vpop.xlane.xlu0 %2638
      %v2640 = vsel %vm2189, %v2596, 0.0
      %2641 = vadd.xlane.f32.xlu0 %v2640
      %v2642 = vpop.xlane.xlu0 %2641
      %v2643 = vsel %vm2189, %v2597, 0.0
      %2644 = vadd.xlane.f32.xlu0 %v2643
      %v2645 = vpop.xlane.xlu0 %2644
      %v2646 = vsel %vm2189, %v2598, 0.0
      %2647 = vadd.xlane.f32.xlu0 %v2646
      %v2648 = vpop.xlane.xlu0 %2647
      %v2649 = vsel %vm2189, %v2599, 0.0
      %2650 = vadd.xlane.f32.xlu0 %v2649
      %v2651 = vpop.xlane.xlu0 %2650
      %v2652 = vsel %vm2189, %v2600, 0.0
      %2653 = vadd.xlane.f32.xlu0 %v2652
      %v2654 = vpop.xlane.xlu0 %2653
      %v2655 = vsel %vm2189, %v2601, 0.0
      %2656 = vadd.xlane.f32.xlu0 %v2655
      %v2657 = vpop.xlane.xlu0 %2656
      %v2658 = vsel %vm2189, %v2602, 0.0
      %2659 = vadd.xlane.f32.xlu0 %v2658
      %v2660 = vpop.xlane.xlu0 %2659
      %v2661 = vsel %vm2189, %v2603, 0.0
      %2662 = vadd.xlane.f32.xlu0 %v2661
      %v2663 = vpop.xlane.xlu0 %2662
      %v2664 = vsel %vm2189, %v2604, 0.0
      %2665 = vadd.xlane.f32.xlu0 %v2664
      %v2666 = vpop.xlane.xlu0 %2665
      %v2667 = vsel %vm2189, %v2605, 0.0
      %2668 = vadd.xlane.f32.xlu0 %v2667
      %v2669 = vpop.xlane.xlu0 %2668
      %v2670 = vsel %vm2189, %v2606, 0.0
      %2671 = vadd.xlane.f32.xlu0 %v2670
      %v2672 = vpop.xlane.xlu0 %2671
      %v2673 = vsel %vm2189, %v2607, 0.0
      %2674 = vadd.xlane.f32.xlu0 %v2673
      %v2675 = vpop.xlane.xlu0 %2674
      %v2676 = vsel %vm2189, %v2608, 0.0
      %2677 = vadd.xlane.f32.xlu0 %v2676
      %v2678 = vpop.xlane.xlu0 %2677
      %v2679 = vsel %vm2189, %v2609, 0.0
      %2680 = vadd.xlane.f32.xlu0 %v2679
      %v2681 = vpop.xlane.xlu0 %2680
      %v2682 = vsel %vm2189, %v2610, 0.0
      %2683 = vadd.xlane.f32.xlu0 %v2682
      %v2684 = vpop.xlane.xlu0 %2683
      %v2685 = vsel %vm2189, %v2611, 0.0
      %2686 = vadd.xlane.f32.xlu0 %v2685
      %v2687 = vpop.xlane.xlu0 %2686
      %v2688 = vsel %vm2189, %v2612, 0.0
      %2689 = vadd.xlane.f32.xlu0 %v2688
      %v2690 = vpop.xlane.xlu0 %2689
      %v2691 = vsel %vm2189, %v2613, 0.0
      %2692 = vadd.xlane.f32.xlu0 %v2691
      %v2693 = vpop.xlane.xlu0 %2692
      %v2694 = vsel %vm2189, %v2614, 0.0
      %2695 = vadd.xlane.f32.xlu0 %v2694
      %v2696 = vpop.xlane.xlu0 %2695
      %v2697 = vsel %vm2189, %v2615, 0.0
      %2698 = vadd.xlane.f32.xlu0 %v2697
      %v2699 = vpop.xlane.xlu0 %2698
      %v2700 = vsel %vm2189, %v2616, 0.0
      %2701 = vadd.xlane.f32.xlu0 %v2700
      %v2702 = vpop.xlane.xlu0 %2701
      %v2703 = vsel %vm2189, %v2617, 0.0
      %2704 = vadd.xlane.f32.xlu0 %v2703
      %v2705 = vpop.xlane.xlu0 %2704
      %v2706 = vsel %vm2189, %v2618, 0.0
      %2707 = vadd.xlane.f32.xlu0 %v2706
      %v2708 = vpop.xlane.xlu0 %2707
      %v2709 = vsel %vm2189, %v2619, 0.0
      %2710 = vadd.xlane.f32.xlu0 %v2709
      %v2711 = vpop.xlane.xlu0 %2710
      %v2712 = vsel %vm2189, %v2620, 0.0
      %2713 = vadd.xlane.f32.xlu0 %v2712
      %v2714 = vpop.xlane.xlu0 %2713
      %v2715 = vsel %vm2189, %v2621, 0.0
      %2716 = vadd.xlane.f32.xlu0 %v2715
      %v2717 = vpop.xlane.xlu0 %2716
      %v2718 = vmul.f32 %v2000, %v2624
      %v2719 = vmul.f32 %v2006, %v2627
      %v2720 = vmul.f32 %v2012, %v2630
      %v2721 = vmul.f32 %v2018, %v2633
      %v2722 = vmul.f32 %v2024, %v2636
      %v2723 = vmul.f32 %v2030, %v2639
      %v2724 = vmul.f32 %v2036, %v2642
      %v2725 = vmul.f32 %v2042, %v2645
      %v2726 = vmul.f32 %v2048, %v2648
      %v2727 = vmul.f32 %v2054, %v2651
      %v2728 = vmul.f32 %v2060, %v2654
      %v2729 = vmul.f32 %v2066, %v2657
      %v2730 = vmul.f32 %v2072, %v2660
      %v2731 = vmul.f32 %v2078, %v2663
      %v2732 = vmul.f32 %v2084, %v2666
      %v2733 = vmul.f32 %v2090, %v2669
      %v2734 = vmul.f32 %v2096, %v2672
      %v2735 = vmul.f32 %v2102, %v2675
      %v2736 = vmul.f32 %v2108, %v2678
      %v2737 = vmul.f32 %v2114, %v2681
      %v2738 = vmul.f32 %v2120, %v2684
      %v2739 = vmul.f32 %v2126, %v2687
      %v2740 = vmul.f32 %v2132, %v2690
      %v2741 = vmul.f32 %v2138, %v2693
      %v2742 = vmul.f32 %v2144, %v2696
      %v2743 = vmul.f32 %v2150, %v2699
      %v2744 = vmul.f32 %v2156, %v2702
      %v2745 = vmul.f32 %v2162, %v2705
      %v2746 = vmul.f32 %v2168, %v2708
      %v2747 = vmul.f32 %v2174, %v2711
      %v2748 = vmul.f32 %v2180, %v2714
      %v2749 = vmul.f32 %v2186, %v2717
      %v2750 = vld [vmem:[%s2] sm:$0xf]
      %v2751 = vld [vmem:[%s3] sm:$0x1]
      %v2753 = vlaneseq
      %v2754 = vshrl.u32 %v2753, 7
      %v2755 = vsub.s32 0, %v2754
      %v2756 = vrot.slane %v2751, %v2755
      %2790 = vrot.lane.b32.xlu0 %v2718, 120
      %v2791 = vpop.permute.xlu0 %2790
      %2792 = vrot.lane.b32.xlu0 %v2719, 120
      %v2793 = vpop.permute.xlu0 %2792
      %2794 = vrot.lane.b32.xlu0 %v2720, 120
      %v2795 = vpop.permute.xlu0 %2794
      %2796 = vrot.lane.b32.xlu0 %v2721, 120
      %v2797 = vpop.permute.xlu0 %2796
      %2798 = vrot.lane.b32.xlu0 %v2722, 120
      %v2799 = vpop.permute.xlu0 %2798
      %2800 = vrot.lane.b32.xlu0 %v2723, 120
      %v2801 = vpop.permute.xlu0 %2800
      %2802 = vrot.lane.b32.xlu0 %v2724, 120
      %v2803 = vpop.permute.xlu0 %2802
      %2804 = vrot.lane.b32.xlu0 %v2725, 120
      %v2805 = vpop.permute.xlu0 %2804
      %2806 = vrot.lane.b32.xlu0 %v2726, 120
      %v2807 = vpop.permute.xlu0 %2806
      %2808 = vrot.lane.b32.xlu0 %v2727, 120
      %v2809 = vpop.permute.xlu0 %2808
      %2810 = vrot.lane.b32.xlu0 %v2728, 120
      %v2811 = vpop.permute.xlu0 %2810
      %2812 = vrot.lane.b32.xlu0 %v2729, 120
      %v2813 = vpop.permute.xlu0 %2812
      %2814 = vrot.lane.b32.xlu0 %v2730, 120
      %v2815 = vpop.permute.xlu0 %2814
      %2816 = vrot.lane.b32.xlu0 %v2731, 120
      %v2817 = vpop.permute.xlu0 %2816
      %2818 = vrot.lane.b32.xlu0 %v2732, 120
      %v2819 = vpop.permute.xlu0 %2818
      %2820 = vrot.lane.b32.xlu0 %v2733, 120
      %v2821 = vpop.permute.xlu0 %2820
      %2822 = vrot.lane.b32.xlu0 %v2734, 120
      %v2823 = vpop.permute.xlu0 %2822
      %2824 = vrot.lane.b32.xlu0 %v2735, 120
      %v2825 = vpop.permute.xlu0 %2824
      %2826 = vrot.lane.b32.xlu0 %v2736, 120
      %v2827 = vpop.permute.xlu0 %2826
      %2828 = vrot.lane.b32.xlu0 %v2737, 120
      %v2829 = vpop.permute.xlu0 %2828
      %2830 = vrot.lane.b32.xlu0 %v2738, 120
      %v2831 = vpop.permute.xlu0 %2830
      %2832 = vrot.lane.b32.xlu0 %v2739, 120
      %v2833 = vpop.permute.xlu0 %2832
      %2834 = vrot.lane.b32.xlu0 %v2740, 120
      %v2835 = vpop.permute.xlu0 %2834
      %2836 = vrot.lane.b32.xlu0 %v2741, 120
      %v2837 = vpop.permute.xlu0 %2836
      %2838 = vrot.lane.b32.xlu0 %v2742, 120
      %v2839 = vpop.permute.xlu0 %2838
      %2840 = vrot.lane.b32.xlu0 %v2743, 120
      %v2841 = vpop.permute.xlu0 %2840
      %2842 = vrot.lane.b32.xlu0 %v2744, 120
      %v2843 = vpop.permute.xlu0 %2842
      %2844 = vrot.lane.b32.xlu0 %v2745, 120
      %v2845 = vpop.permute.xlu0 %2844
      %2846 = vrot.lane.b32.xlu0 %v2746, 120
      %v2847 = vpop.permute.xlu0 %2846
      %2848 = vrot.lane.b32.xlu0 %v2747, 120
      %v2849 = vpop.permute.xlu0 %2848
      %2850 = vrot.lane.b32.xlu0 %v2748, 120
      %v2851 = vpop.permute.xlu0 %2850
      %2852 = vrot.lane.b32.xlu0 %v2749, 120
      %v2853 = vpop.permute.xlu0 %2852
      %v2854 = vsel %vm309, %v2791, 0
      %v2856 = vsel %vm309, %v2793, 0
      %v2858 = vsel %vm309, %v2795, 0
      %v2860 = vsel %vm309, %v2797, 0
      %v2862 = vsel %vm309, %v2799, 0
      %v2864 = vsel %vm309, %v2801, 0
      %v2866 = vsel %vm309, %v2803, 0
      %v2868 = vsel %vm309, %v2805, 0
      %v2870 = vsel %vm309, %v2807, 0
      %v2872 = vsel %vm309, %v2809, 0
      %v2874 = vsel %vm309, %v2811, 0
      %v2876 = vsel %vm309, %v2813, 0
      %v2878 = vsel %vm309, %v2815, 0
      %v2880 = vsel %vm309, %v2817, 0
      %v2882 = vsel %vm309, %v2819, 0
      %v2884 = vsel %vm309, %v2821, 0
      %v2886 = vsel %vm309, %v2823, 0
      %v2888 = vsel %vm309, %v2825, 0
      %v2890 = vsel %vm309, %v2827, 0
      %v2892 = vsel %vm309, %v2829, 0
      %v2894 = vsel %vm309, %v2831, 0
      %v2896 = vsel %vm309, %v2833, 0
      %v2898 = vsel %vm309, %v2835, 0
      %v2900 = vsel %vm309, %v2837, 0
      %v2902 = vsel %vm309, %v2839, 0
      %v2904 = vsel %vm309, %v2841, 0
      %v2906 = vsel %vm309, %v2843, 0
      %v2908 = vsel %vm309, %v2845, 0
      %v2910 = vsel %vm309, %v2847, 0
      %v2912 = vsel %vm309, %v2849, 0
      %v2914 = vsel %vm309, %v2851, 0
      %v2916 = vsel %vm309, %v2853, 0
      %v2919 = vsel %vm406, %v2750, 0
      %2921 = vmatprep.subr.mxu0 0.0
      %v2922 = vand.u32 %v2919, 4294901760
      %2923 = vmatpush1.msra.mxu0 %v2922
      %2924 = vmatprep.subr.mxu0 0.0
      %2925 = vmatpush1.msra.mxu0 0.0
      %2926 = vmatprep.subr.mxu0 0.0
      %2927 = vmatpush1.msra.mxu0 0.0
      %2928 = vmatprep.subr.mxu0 0.0
      %2929 = vmatpush1.msra.mxu0 0.0
      %2930 = vmatprep.subr.mxu0 0.0
      %2931 = vmatpush1.msra.mxu0 0.0
      %2932 = vmatprep.subr.mxu0 0.0
      %2933 = vmatpush1.msra.mxu0 0.0
      %2934 = vmatprep.subr.mxu0 0.0
      %2935 = vmatpush1.msra.mxu0 0.0
      %2936 = vmatprep.subr.mxu0 0.0
      %2937 = vmatpush1.msra.mxu0 0.0
      %2938 = vmatprep.subr.mxu0 0.0
      %2939 = vmatpush1.msra.mxu0 0.0
      %2940 = vmatprep.subr.mxu0 0.0
      %2941 = vmatpush1.msra.mxu0 0.0
      %2942 = vmatprep.subr.mxu0 0.0
      %2943 = vmatpush1.msra.mxu0 0.0
      %2944 = vmatprep.subr.mxu0 0.0
      %2945 = vmatpush1.msra.mxu0 0.0
      %2946 = vmatprep.subr.mxu0 0.0
      %2947 = vmatpush1.msra.mxu0 0.0
      %2948 = vmatprep.subr.mxu0 0.0
      %2949 = vmatpush1.msra.mxu0 0.0
      %2950 = vmatprep.subr.mxu0 0.0
      %2951 = vmatpush1.msra.mxu0 0.0
      %2952 = vmatprep.subr.mxu0 0.0
      %2953 = vmatpush1.msra.mxu0 0.0
      %2954 = vmatprep.subr.mxu0 0.0
      %2955 = vmatpush1.msra.mxu0 0.0
      %2956 = vmatprep.subr.mxu0 0.0
      %2957 = vmatpush1.msra.mxu0 0.0
      %2958 = vmatprep.subr.mxu0 0.0
      %2959 = vmatpush1.msra.mxu0 0.0
      %2960 = vmatprep.subr.mxu0 0.0
      %2961 = vmatpush1.msra.mxu0 0.0
      %2962 = vmatprep.subr.mxu0 0.0
      %2963 = vmatpush1.msra.mxu0 0.0
      %2964 = vmatprep.subr.mxu0 0.0
      %2965 = vmatpush1.msra.mxu0 0.0
      %2966 = vmatprep.subr.mxu0 0.0
      %2967 = vmatpush1.msra.mxu0 0.0
      %2968 = vmatprep.subr.mxu0 0.0
      %2969 = vmatpush1.msra.mxu0 0.0
      %2970 = vmatprep.subr.mxu0 0.0
      %2971 = vmatpush1.msra.mxu0 0.0
      %2972 = vmatprep.subr.mxu0 0.0
      %2973 = vmatpush1.msra.mxu0 0.0
      %2974 = vmatprep.subr.mxu0 0.0
      %2975 = vmatpush1.msra.mxu0 0.0
      %2976 = vmatprep.subr.mxu0 0.0
      %2977 = vmatpush1.msra.mxu0 0.0
      %2978 = vmatprep.subr.mxu0 0.0
      %2979 = vmatpush1.msra.mxu0 0.0
      %2980 = vmatprep.subr.mxu0 0.0
      %2981 = vmatpush1.msra.mxu0 0.0
      %2982 = vmatprep.subr.mxu0 0.0
      %2983 = vmatpush1.msra.mxu0 0.0
      %2984 = vmatprep.subr.mxu0 0.0
      %2985 = vmatpush1.msra.mxu0 0.0
      %2986 = vmatprep.mubr.f32.mxu0 0.0
      %v2987 = vand.u32 %v2854, 4294901760
      %v2988 = vsub.f32 %v2854, %v2987
      %v2989 = vand.u32 %v2988, 4294901760
      %v2990 = vsub.f32 %v2988, %v2989
      %v2991 = vand.u32 %v2990, 4294901760
      %2992 = vmatmul.mubr.f32.gmra.mrb[0].mxu0 %v2991
      %v2993 = vpop.f32.mrb[0].mxu0
      %v2994 = vadd.f32 %v2756, %v2993
      %v2995 = vpop.f32.mrb[0].mxu0
      %2996 = vmatprep.mubr.f32.mxu0 0.0
      %v2997 = vand.u32 %v2856, 4294901760
      %v2998 = vsub.f32 %v2856, %v2997
      %v2999 = vand.u32 %v2998, 4294901760
      %v3000 = vsub.f32 %v2998, %v2999
      %v3001 = vand.u32 %v3000, 4294901760
      %3002 = vmatmul.mubr.f32.gmra.mrb[0].mxu0 %v3001
      %v3003 = vpop.f32.mrb[0].mxu0
      %v3004 = vadd.f32 %v2756, %v3003
      %v3005 = vpop.f32.mrb[0].mxu0
      %3006 = vmatprep.mubr.f32.mxu0 0.0
      %v3007 = vand.u32 %v2858, 4294901760
      %v3008 = vsub.f32 %v2858, %v3007
      %v3009 = vand.u32 %v3008, 4294901760
      %v3010 = vsub.f32 %v3008, %v3009
      %v3011 = vand.u32 %v3010, 4294901760
      %3012 = vmatmul.mubr.f32.gmra.mrb[0].mxu0 %v3011
      %v3013 = vpop.f32.mrb[0].mxu0
      %v3014 = vadd.f32 %v2756, %v3013
      %v3015 = vpop.f32.mrb[0].mxu0
      %3016 = vmatprep.mubr.f32.mxu0 0.0
      %v3017 = vand.u32 %v2860, 4294901760
      %v3018 = vsub.f32 %v2860, %v3017
      %v3019 = vand.u32 %v3018, 4294901760
      %v3020 = vsub.f32 %v3018, %v3019
      %v3021 = vand.u32 %v3020, 4294901760
      %3022 = vmatmul.mubr.f32.gmra.mrb[0].mxu0 %v3021
      %v3023 = vpop.f32.mrb[0].mxu0
      %v3024 = vadd.f32 %v2756, %v3023
      %v3025 = vpop.f32.mrb[0].mxu0
      %3026 = vmatprep.mubr.f32.mxu0 0.0
      %v3027 = vand.u32 %v2862, 4294901760
      %v3028 = vsub.f32 %v2862, %v3027
      %v3029 = vand.u32 %v3028, 4294901760
      %v3030 = vsub.f32 %v3028, %v3029
      %v3031 = vand.u32 %v3030, 4294901760
      %3032 = vmatmul.mubr.f32.gmra.mrb[0].mxu0 %v3031
      %v3033 = vpop.f32.mrb[0].mxu0
      %v3034 = vadd.f32 %v2756, %v3033
      %v3035 = vpop.f32.mrb[0].mxu0
      %3036 = vmatprep.mubr.f32.mxu0 0.0
      %v3037 = vand.u32 %v2864, 4294901760
      %v3038 = vsub.f32 %v2864, %v3037
      %v3039 = vand.u32 %v3038, 4294901760
      %v3040 = vsub.f32 %v3038, %v3039
      %v3041 = vand.u32 %v3040, 4294901760
      %3042 = vmatmul.mubr.f32.gmra.mrb[0].mxu0 %v3041
      %v3043 = vpop.f32.mrb[0].mxu0
      %v3044 = vadd.f32 %v2756, %v3043
      %v3045 = vpop.f32.mrb[0].mxu0
      %3046 = vmatprep.mubr.f32.mxu0 0.0
      %v3047 = vand.u32 %v2866, 4294901760
      %v3048 = vsub.f32 %v2866, %v3047
      %v3049 = vand.u32 %v3048, 4294901760
      %v3050 = vsub.f32 %v3048, %v3049
      %v3051 = vand.u32 %v3050, 4294901760
      %3052 = vmatmul.mubr.f32.gmra.mrb[0].mxu0 %v3051
      %v3053 = vpop.f32.mrb[0].mxu0
      %v3054 = vadd.f32 %v2756, %v3053
      %v3055 = vpop.f32.mrb[0].mxu0
      %3056 = vmatprep.mubr.f32.mxu0 0.0
      %v3057 = vand.u32 %v2868, 4294901760
      %v3058 = vsub.f32 %v2868, %v3057
      %v3059 = vand.u32 %v3058, 4294901760
      %v3060 = vsub.f32 %v3058, %v3059
      %v3061 = vand.u32 %v3060, 4294901760
      %3062 = vmatmul.mubr.f32.gmra.mrb[0].mxu0 %v3061
      %v3063 = vpop.f32.mrb[0].mxu0
      %v3064 = vadd.f32 %v2756, %v3063
      %v3065 = vpop.f32.mrb[0].mxu0
      %3066 = vmatprep.mubr.f32.mxu0 0.0
      %v3067 = vand.u32 %v2870, 4294901760
      %v3068 = vsub.f32 %v2870, %v3067
      %v3069 = vand.u32 %v3068, 4294901760
      %v3070 = vsub.f32 %v3068, %v3069
      %v3071 = vand.u32 %v3070, 4294901760
      %3072 = vmatmul.mubr.f32.gmra.mrb[0].mxu0 %v3071
      %v3073 = vpop.f32.mrb[0].mxu0
      %v3074 = vadd.f32 %v2756, %v3073
      %v3075 = vpop.f32.mrb[0].mxu0
      %3076 = vmatprep.mubr.f32.mxu0 0.0
      %v3077 = vand.u32 %v2872, 4294901760
      %v3078 = vsub.f32 %v2872, %v3077
      %v3079 = vand.u32 %v3078, 4294901760
      %v3080 = vsub.f32 %v3078, %v3079
      %v3081 = vand.u32 %v3080, 4294901760
      %3082 = vmatmul.mubr.f32.gmra.mrb[0].mxu0 %v3081
      %v3083 = vpop.f32.mrb[0].mxu0
      %v3084 = vadd.f32 %v2756, %v3083
      %v3085 = vpop.f32.mrb[0].mxu0
      %3086 = vmatprep.mubr.f32.mxu0 0.0
      %v3087 = vand.u32 %v2874, 4294901760
      %v3088 = vsub.f32 %v2874, %v3087
      %v3089 = vand.u32 %v3088, 4294901760
      %v3090 = vsub.f32 %v3088, %v3089
      %v3091 = vand.u32 %v3090, 4294901760
      %3092 = vmatmul.mubr.f32.gmra.mrb[0].mxu0 %v3091
      %v3093 = vpop.f32.mrb[0].mxu0
      %v3094 = vadd.f32 %v2756, %v3093
      %v3095 = vpop.f32.mrb[0].mxu0
      %3096 = vmatprep.mubr.f32.mxu0 0.0
      %v3097 = vand.u32 %v2876, 4294901760
      %v3098 = vsub.f32 %v2876, %v3097
      %v3099 = vand.u32 %v3098, 4294901760
      %v3100 = vsub.f32 %v3098, %v3099
      %v3101 = vand.u32 %v3100, 4294901760
      %3102 = vmatmul.mubr.f32.gmra.mrb[0].mxu0 %v3101
      %v3103 = vpop.f32.mrb[0].mxu0
      %v3104 = vadd.f32 %v2756, %v3103
      %v3105 = vpop.f32.mrb[0].mxu0
      %3106 = vmatprep.mubr.f32.mxu0 0.0
      %v3107 = vand.u32 %v2878, 4294901760
      %v3108 = vsub.f32 %v2878, %v3107
      %v3109 = vand.u32 %v3108, 4294901760
      %v3110 = vsub.f32 %v3108, %v3109
      %v3111 = vand.u32 %v3110, 4294901760
      %3112 = vmatmul.mubr.f32.gmra.mrb[0].mxu0 %v3111
      %v3113 = vpop.f32.mrb[0].mxu0
      %v3114 = vadd.f32 %v2756, %v3113
      %v3115 = vpop.f32.mrb[0].mxu0
      %3116 = vmatprep.mubr.f32.mxu0 0.0
      %v3117 = vand.u32 %v2880, 4294901760
      %v3118 = vsub.f32 %v2880, %v3117
      %v3119 = vand.u32 %v3118, 4294901760
      %v3120 = vsub.f32 %v3118, %v3119
      %v3121 = vand.u32 %v3120, 4294901760
      %3122 = vmatmul.mubr.f32.gmra.mrb[0].mxu0 %v3121
      %v3123 = vpop.f32.mrb[0].mxu0
      %v3124 = vadd.f32 %v2756, %v3123
      %v3125 = vpop.f32.mrb[0].mxu0
      %3126 = vmatprep.mubr.f32.mxu0 0.0
      %v3127 = vand.u32 %v2882, 4294901760
      %v3128 = vsub.f32 %v2882, %v3127
      %v3129 = vand.u32 %v3128, 4294901760
      %v3130 = vsub.f32 %v3128, %v3129
      %v3131 = vand.u32 %v3130, 4294901760
      %3132 = vmatmul.mubr.f32.gmra.mrb[0].mxu0 %v3131
      %v3133 = vpop.f32.mrb[0].mxu0
      %v3134 = vadd.f32 %v2756, %v3133
      %v3135 = vpop.f32.mrb[0].mxu0
      %3136 = vmatprep.mubr.f32.mxu0 0.0
      %v3137 = vand.u32 %v2884, 4294901760
      %v3138 = vsub.f32 %v2884, %v3137
      %v3139 = vand.u32 %v3138, 4294901760
      %v3140 = vsub.f32 %v3138, %v3139
      %v3141 = vand.u32 %v3140, 4294901760
      %3142 = vmatmul.mubr.f32.gmra.mrb[0].mxu0 %v3141
      %v3143 = vpop.f32.mrb[0].mxu0
      %v3144 = vadd.f32 %v2756, %v3143
      %v3145 = vpop.f32.mrb[0].mxu0
      %3146 = vmatprep.mubr.f32.mxu0 0.0
      %v3147 = vand.u32 %v2886, 4294901760
      %v3148 = vsub.f32 %v2886, %v3147
      %v3149 = vand.u32 %v3148, 4294901760
      %v3150 = vsub.f32 %v3148, %v3149
      %v3151 = vand.u32 %v3150, 4294901760
      %3152 = vmatmul.mubr.f32.gmra.mrb[0].mxu0 %v3151
      %v3153 = vpop.f32.mrb[0].mxu0
      %v3154 = vadd.f32 %v2756, %v3153
      %v3155 = vpop.f32.mrb[0].mxu0
      %3156 = vmatprep.mubr.f32.mxu0 0.0
      %v3157 = vand.u32 %v2888, 4294901760
      %v3158 = vsub.f32 %v2888, %v3157
      %v3159 = vand.u32 %v3158, 4294901760
      %v3160 = vsub.f32 %v3158, %v3159
      %v3161 = vand.u32 %v3160, 4294901760
      %3162 = vmatmul.mubr.f32.gmra.mrb[0].mxu0 %v3161
      %v3163 = vpop.f32.mrb[0].mxu0
      %v3164 = vadd.f32 %v2756, %v3163
      %v3165 = vpop.f32.mrb[0].mxu0
      %3166 = vmatprep.mubr.f32.mxu0 0.0
      %v3167 = vand.u32 %v2890, 4294901760
      %v3168 = vsub.f32 %v2890, %v3167
      %v3169 = vand.u32 %v3168, 4294901760
      %v3170 = vsub.f32 %v3168, %v3169
      %v3171 = vand.u32 %v3170, 4294901760
      %3172 = vmatmul.mubr.f32.gmra.mrb[0].mxu0 %v3171
      %v3173 = vpop.f32.mrb[0].mxu0
      %v3174 = vadd.f32 %v2756, %v3173
      %v3175 = vpop.f32.mrb[0].mxu0
      %3176 = vmatprep.mubr.f32.mxu0 0.0
      %v3177 = vand.u32 %v2892, 4294901760
      %v3178 = vsub.f32 %v2892, %v3177
      %v3179 = vand.u32 %v3178, 4294901760
      %v3180 = vsub.f32 %v3178, %v3179
      %v3181 = vand.u32 %v3180, 4294901760
      %3182 = vmatmul.mubr.f32.gmra.mrb[0].mxu0 %v3181
      %v3183 = vpop.f32.mrb[0].mxu0
      %v3184 = vadd.f32 %v2756, %v3183
      %v3185 = vpop.f32.mrb[0].mxu0
      %3186 = vmatprep.mubr.f32.mxu0 0.0
      %v3187 = vand.u32 %v2894, 4294901760
      %v3188 = vsub.f32 %v2894, %v3187
      %v3189 = vand.u32 %v3188, 4294901760
      %v3190 = vsub.f32 %v3188, %v3189
      %v3191 = vand.u32 %v3190, 4294901760
      %3192 = vmatmul.mubr.f32.gmra.mrb[0].mxu0 %v3191
      %v3193 = vpop.f32.mrb[0].mxu0
      %v3194 = vadd.f32 %v2756, %v3193
      %v3195 = vpop.f32.mrb[0].mxu0
      %3196 = vmatprep.mubr.f32.mxu0 0.0
      %v3197 = vand.u32 %v2896, 4294901760
      %v3198 = vsub.f32 %v2896, %v3197
      %v3199 = vand.u32 %v3198, 4294901760
      %v3200 = vsub.f32 %v3198, %v3199
      %v3201 = vand.u32 %v3200, 4294901760
      %3202 = vmatmul.mubr.f32.gmra.mrb[0].mxu0 %v3201
      %v3203 = vpop.f32.mrb[0].mxu0
      %v3204 = vadd.f32 %v2756, %v3203
      %v3205 = vpop.f32.mrb[0].mxu0
      %3206 = vmatprep.mubr.f32.mxu0 0.0
      %v3207 = vand.u32 %v2898, 4294901760
      %v3208 = vsub.f32 %v2898, %v3207
      %v3209 = vand.u32 %v3208, 4294901760
      %v3210 = vsub.f32 %v3208, %v3209
      %v3211 = vand.u32 %v3210, 4294901760
      %3212 = vmatmul.mubr.f32.gmra.mrb[0].mxu0 %v3211
      %v3213 = vpop.f32.mrb[0].mxu0
      %v3214 = vadd.f32 %v2756, %v3213
      %v3215 = vpop.f32.mrb[0].mxu0
      %3216 = vmatprep.mubr.f32.mxu0 0.0
      %v3217 = vand.u32 %v2900, 4294901760
      %v3218 = vsub.f32 %v2900, %v3217
      %v3219 = vand.u32 %v3218, 4294901760
      %v3220 = vsub.f32 %v3218, %v3219
      %v3221 = vand.u32 %v3220, 4294901760
      %3222 = vmatmul.mubr.f32.gmra.mrb[0].mxu0 %v3221
      %v3223 = vpop.f32.mrb[0].mxu0
      %v3224 = vadd.f32 %v2756, %v3223
      %v3225 = vpop.f32.mrb[0].mxu0
      %3226 = vmatprep.mubr.f32.mxu0 0.0
      %v3227 = vand.u32 %v2902, 4294901760
      %v3228 = vsub.f32 %v2902, %v3227
      %v3229 = vand.u32 %v3228, 4294901760
      %v3230 = vsub.f32 %v3228, %v3229
      %v3231 = vand.u32 %v3230, 4294901760
      %3232 = vmatmul.mubr.f32.gmra.mrb[0].mxu0 %v3231
      %v3233 = vpop.f32.mrb[0].mxu0
      %v3234 = vadd.f32 %v2756, %v3233
      %v3235 = vpop.f32.mrb[0].mxu0
      %3236 = vmatprep.mubr.f32.mxu0 0.0
      %v3237 = vand.u32 %v2904, 4294901760
      %v3238 = vsub.f32 %v2904, %v3237
      %v3239 = vand.u32 %v3238, 4294901760
      %v3240 = vsub.f32 %v3238, %v3239
      %v3241 = vand.u32 %v3240, 4294901760
      %3242 = vmatmul.mubr.f32.gmra.mrb[0].mxu0 %v3241
      %v3243 = vpop.f32.mrb[0].mxu0
      %v3244 = vadd.f32 %v2756, %v3243
      %v3245 = vpop.f32.mrb[0].mxu0
      %3246 = vmatprep.mubr.f32.mxu0 0.0
      %v3247 = vand.u32 %v2906, 4294901760
      %v3248 = vsub.f32 %v2906, %v3247
      %v3249 = vand.u32 %v3248, 4294901760
      %v3250 = vsub.f32 %v3248, %v3249
      %v3251 = vand.u32 %v3250, 4294901760
      %3252 = vmatmul.mubr.f32.gmra.mrb[0].mxu0 %v3251
      %v3253 = vpop.f32.mrb[0].mxu0
      %v3254 = vadd.f32 %v2756, %v3253
      %v3255 = vpop.f32.mrb[0].mxu0
      %3256 = vmatprep.mubr.f32.mxu0 0.0
      %v3257 = vand.u32 %v2908, 4294901760
      %v3258 = vsub.f32 %v2908, %v3257
      %v3259 = vand.u32 %v3258, 4294901760
      %v3260 = vsub.f32 %v3258, %v3259
      %v3261 = vand.u32 %v3260, 4294901760
      %3262 = vmatmul.mubr.f32.gmra.mrb[0].mxu0 %v3261
      %v3263 = vpop.f32.mrb[0].mxu0
      %v3264 = vadd.f32 %v2756, %v3263
      %v3265 = vpop.f32.mrb[0].mxu0
      %3266 = vmatprep.mubr.f32.mxu0 0.0
      %v3267 = vand.u32 %v2910, 4294901760
      %v3268 = vsub.f32 %v2910, %v3267
      %v3269 = vand.u32 %v3268, 4294901760
      %v3270 = vsub.f32 %v3268, %v3269
      %v3271 = vand.u32 %v3270, 4294901760
      %3272 = vmatmul.mubr.f32.gmra.mrb[0].mxu0 %v3271
      %v3273 = vpop.f32.mrb[0].mxu0
      %v3274 = vadd.f32 %v2756, %v3273
      %v3275 = vpop.f32.mrb[0].mxu0
      %3276 = vmatprep.mubr.f32.mxu0 0.0
      %v3277 = vand.u32 %v2912, 4294901760
      %v3278 = vsub.f32 %v2912, %v3277
      %v3279 = vand.u32 %v3278, 4294901760
      %v3280 = vsub.f32 %v3278, %v3279
      %v3281 = vand.u32 %v3280, 4294901760
      %3282 = vmatmul.mubr.f32.gmra.mrb[0].mxu0 %v3281
      %v3283 = vpop.f32.mrb[0].mxu0
      %v3284 = vadd.f32 %v2756, %v3283
      %v3285 = vpop.f32.mrb[0].mxu0
      %3286 = vmatprep.mubr.f32.mxu0 0.0
      %v3287 = vand.u32 %v2914, 4294901760
      %v3288 = vsub.f32 %v2914, %v3287
      %v3289 = vand.u32 %v3288, 4294901760
      %v3290 = vsub.f32 %v3288, %v3289
      %v3291 = vand.u32 %v3290, 4294901760
      %3292 = vmatmul.mubr.f32.gmra.mrb[0].mxu0 %v3291
      %v3293 = vpop.f32.mrb[0].mxu0
      %v3294 = vadd.f32 %v2756, %v3293
      %v3295 = vpop.f32.mrb[0].mxu0
      %3296 = vmatprep.mubr.f32.mxu0 0.0
      %v3297 = vand.u32 %v2916, 4294901760
      %v3298 = vsub.f32 %v2916, %v3297
      %v3299 = vand.u32 %v3298, 4294901760
      %v3300 = vsub.f32 %v3298, %v3299
      %v3301 = vand.u32 %v3300, 4294901760
      %3302 = vmatmul.mubr.f32.gmra.mrb[0].mxu0 %v3301
      %v3303 = vpop.f32.mrb[0].mxu0
      %v3304 = vadd.f32 %v2756, %v3303
      %v3305 = vpop.f32.mrb[0].mxu0
      %3306 = vdwg.mxu0
      %3307 = vmatprep.subr.mxu0 0.0
      %v3308 = vand.u32 %v2919, 4294901760
      %v3309 = vsub.f32 %v2919, %v3308
      %v3310 = vand.u32 %v3309, 4294901760
      %v3311 = vsub.f32 %v3309, %v3310
      %v3312 = vand.u32 %v3311, 4294901760
      %3313 = vmatpush1.msra.mxu0 %v3312
      %3314 = vmatprep.subr.mxu0 0.0
      %3315 = vmatpush1.msra.mxu0 0.0
      %3316 = vmatprep.subr.mxu0 0.0
      %3317 = vmatpush1.msra.mxu0 0.0
      %3318 = vmatprep.subr.mxu0 0.0
      %3319 = vmatpush1.msra.mxu0 0.0
      %3320 = vmatprep.subr.mxu0 0.0
      %3321 = vmatpush1.msra.mxu0 0.0
      %3322 = vmatprep.subr.mxu0 0.0
      %3323 = vmatpush1.msra.mxu0 0.0
      %3324 = vmatprep.subr.mxu0 0.0
      %3325 = vmatpush1.msra.mxu0 0.0
      %3326 = vmatprep.subr.mxu0 0.0
      %3327 = vmatpush1.msra.mxu0 0.0
      %3328 = vmatprep.subr.mxu0 0.0
      %3329 = vmatpush1.msra.mxu0 0.0
      %3330 = vmatprep.subr.mxu0 0.0
      %3331 = vmatpush1.msra.mxu0 0.0
      %3332 = vmatprep.subr.mxu0 0.0
      %3333 = vmatpush1.msra.mxu0 0.0
      %3334 = vmatprep.subr.mxu0 0.0
      %3335 = vmatpush1.msra.mxu0 0.0
      %3336 = vmatprep.subr.mxu0 0.0
      %3337 = vmatpush1.msra.mxu0 0.0
      %3338 = vmatprep.subr.mxu0 0.0
      %3339 = vmatpush1.msra.mxu0 0.0
      %3340 = vmatprep.subr.mxu0 0.0
      %3341 = vmatpush1.msra.mxu0 0.0
      %3342 = vmatprep.subr.mxu0 0.0
      %3343 = vmatpush1.msra.mxu0 0.0
      %3344 = vmatprep.subr.mxu0 0.0
      %3345 = vmatpush1.msra.mxu0 0.0
      %3346 = vmatprep.subr.mxu0 0.0
      %3347 = vmatpush1.msra.mxu0 0.0
      %3348 = vmatprep.subr.mxu0 0.0
      %3349 = vmatpush1.msra.mxu0 0.0
      %3350 = vmatprep.subr.mxu0 0.0
      %3351 = vmatpush1.msra.mxu0 0.0
      %3352 = vmatprep.subr.mxu0 0.0
      %3353 = vmatpush1.msra.mxu0 0.0
      %3354 = vmatprep.subr.mxu0 0.0
      %3355 = vmatpush1.msra.mxu0 0.0
      %3356 = vmatprep.subr.mxu0 0.0
      %3357 = vmatpush1.msra.mxu0 0.0
      %3358 = vmatprep.subr.mxu0 0.0
      %3359 = vmatpush1.msra.mxu0 0.0
      %3360 = vmatprep.subr.mxu0 0.0
      %3361 = vmatpush1.msra.mxu0 0.0
      %3362 = vmatprep.subr.mxu0 0.0
      %3363 = vmatpush1.msra.mxu0 0.0
      %3364 = vmatprep.subr.mxu0 0.0
      %3365 = vmatpush1.msra.mxu0 0.0
      %3366 = vmatprep.subr.mxu0 0.0
      %3367 = vmatpush1.msra.mxu0 0.0
      %3368 = vmatprep.subr.mxu0 0.0
      %3369 = vmatpush1.msra.mxu0 0.0
      %3370 = vmatprep.subr.mxu0 0.0
      %3371 = vmatpush1.msra.mxu0 0.0
      %3372 = vmatprep.subr.mxu0 0.0
      %3373 = vmatpush1.msra.mxu0 0.0
      %3374 = vmatprep.subr.mxu0 0.0
      %3375 = vmatpush1.msra.mxu0 0.0
      %3376 = vmatprep.mubr.f32.mxu0 0.0
      %v3377 = vand.u32 %v2854, 4294901760
      %3378 = vmatmul.mubr.f32.gmra.mrb[0].mxu0 %v3377
      %v3379 = vpop.f32.mrb[0].mxu0
      %v3380 = vadd.f32 %v2994, %v3379
      %v3381 = vpop.f32.mrb[0].mxu0
      %3382 = vmatprep.mubr.f32.mxu0 0.0
      %v3383 = vand.u32 %v2856, 4294901760
      %3384 = vmatmul.mubr.f32.gmra.mrb[0].mxu0 %v3383
      %v3385 = vpop.f32.mrb[0].mxu0
      %v3386 = vadd.f32 %v3004, %v3385
      %v3387 = vpop.f32.mrb[0].mxu0
      %3388 = vmatprep.mubr.f32.mxu0 0.0
      %v3389 = vand.u32 %v2858, 4294901760
      %3390 = vmatmul.mubr.f32.gmra.mrb[0].mxu0 %v3389
      %v3391 = vpop.f32.mrb[0].mxu0
      %v3392 = vadd.f32 %v3014, %v3391
      %v3393 = vpop.f32.mrb[0].mxu0
      %3394 = vmatprep.mubr.f32.mxu0 0.0
      %v3395 = vand.u32 %v2860, 4294901760
      %3396 = vmatmul.mubr.f32.gmra.mrb[0].mxu0 %v3395
      %v3397 = vpop.f32.mrb[0].mxu0
      %v3398 = vadd.f32 %v3024, %v3397
      %v3399 = vpop.f32.mrb[0].mxu0
      %3400 = vmatprep.mubr.f32.mxu0 0.0
      %v3401 = vand.u32 %v2862, 4294901760
      %3402 = vmatmul.mubr.f32.gmra.mrb[0].mxu0 %v3401
      %v3403 = vpop.f32.mrb[0].mxu0
      %v3404 = vadd.f32 %v3034, %v3403
      %v3405 = vpop.f32.mrb[0].mxu0
      %3406 = vmatprep.mubr.f32.mxu0 0.0
      %v3407 = vand.u32 %v2864, 4294901760
      %3408 = vmatmul.mubr.f32.gmra.mrb[0].mxu0 %v3407
      %v3409 = vpop.f32.mrb[0].mxu0
      %v3410 = vadd.f32 %v3044, %v3409
      %v3411 = vpop.f32.mrb[0].mxu0
      %3412 = vmatprep.mubr.f32.mxu0 0.0
      %v3413 = vand.u32 %v2866, 4294901760
      %3414 = vmatmul.mubr.f32.gmra.mrb[0].mxu0 %v3413
      %v3415 = vpop.f32.mrb[0].mxu0
      %v3416 = vadd.f32 %v3054, %v3415
      %v3417 = vpop.f32.mrb[0].mxu0
      %3418 = vmatprep.mubr.f32.mxu0 0.0
      %v3419 = vand.u32 %v2868, 4294901760
      %3420 = vmatmul.mubr.f32.gmra.mrb[0].mxu0 %v3419
      %v3421 = vpop.f32.mrb[0].mxu0
      %v3422 = vadd.f32 %v3064, %v3421
      %v3423 = vpop.f32.mrb[0].mxu0
      %3424 = vmatprep.mubr.f32.mxu0 0.0
      %v3425 = vand.u32 %v2870, 4294901760
      %3426 = vmatmul.mubr.f32.gmra.mrb[0].mxu0 %v3425
      %v3427 = vpop.f32.mrb[0].mxu0
      %v3428 = vadd.f32 %v3074, %v3427
      %v3429 = vpop.f32.mrb[0].mxu0
      %3430 = vmatprep.mubr.f32.mxu0 0.0
      %v3431 = vand.u32 %v2872, 4294901760
      %3432 = vmatmul.mubr.f32.gmra.mrb[0].mxu0 %v3431
      %v3433 = vpop.f32.mrb[0].mxu0
      %v3434 = vadd.f32 %v3084, %v3433
      %v3435 = vpop.f32.mrb[0].mxu0
      %3436 = vmatprep.mubr.f32.mxu0 0.0
      %v3437 = vand.u32 %v2874, 4294901760
      %3438 = vmatmul.mubr.f32.gmra.mrb[0].mxu0 %v3437
      %v3439 = vpop.f32.mrb[0].mxu0
      %v3440 = vadd.f32 %v3094, %v3439
      %v3441 = vpop.f32.mrb[0].mxu0
      %3442 = vmatprep.mubr.f32.mxu0 0.0
      %v3443 = vand.u32 %v2876, 4294901760
      %3444 = vmatmul.mubr.f32.gmra.mrb[0].mxu0 %v3443
      %v3445 = vpop.f32.mrb[0].mxu0
      %v3446 = vadd.f32 %v3104, %v3445
      %v3447 = vpop.f32.mrb[0].mxu0
      %3448 = vmatprep.mubr.f32.mxu0 0.0
      %v3449 = vand.u32 %v2878, 4294901760
      %3450 = vmatmul.mubr.f32.gmra.mrb[0].mxu0 %v3449
      %v3451 = vpop.f32.mrb[0].mxu0
      %v3452 = vadd.f32 %v3114, %v3451
      %v3453 = vpop.f32.mrb[0].mxu0
      %3454 = vmatprep.mubr.f32.mxu0 0.0
      %v3455 = vand.u32 %v2880, 4294901760
      %3456 = vmatmul.mubr.f32.gmra.mrb[0].mxu0 %v3455
      %v3457 = vpop.f32.mrb[0].mxu0
      %v3458 = vadd.f32 %v3124, %v3457
      %v3459 = vpop.f32.mrb[0].mxu0
      %3460 = vmatprep.mubr.f32.mxu0 0.0
      %v3461 = vand.u32 %v2882, 4294901760
      %3462 = vmatmul.mubr.f32.gmra.mrb[0].mxu0 %v3461
      %v3463 = vpop.f32.mrb[0].mxu0
      %v3464 = vadd.f32 %v3134, %v3463
      %v3465 = vpop.f32.mrb[0].mxu0
      %3466 = vmatprep.mubr.f32.mxu0 0.0
      %v3467 = vand.u32 %v2884, 4294901760
      %3468 = vmatmul.mubr.f32.gmra.mrb[0].mxu0 %v3467
      %v3469 = vpop.f32.mrb[0].mxu0
      %v3470 = vadd.f32 %v3144, %v3469
      %v3471 = vpop.f32.mrb[0].mxu0
      %3472 = vmatprep.mubr.f32.mxu0 0.0
      %v3473 = vand.u32 %v2886, 4294901760
      %3474 = vmatmul.mubr.f32.gmra.mrb[0].mxu0 %v3473
      %v3475 = vpop.f32.mrb[0].mxu0
      %v3476 = vadd.f32 %v3154, %v3475
      %v3477 = vpop.f32.mrb[0].mxu0
      %3478 = vmatprep.mubr.f32.mxu0 0.0
      %v3479 = vand.u32 %v2888, 4294901760
      %3480 = vmatmul.mubr.f32.gmra.mrb[0].mxu0 %v3479
      %v3481 = vpop.f32.mrb[0].mxu0
      %v3482 = vadd.f32 %v3164, %v3481
      %v3483 = vpop.f32.mrb[0].mxu0
      %3484 = vmatprep.mubr.f32.mxu0 0.0
      %v3485 = vand.u32 %v2890, 4294901760
      %3486 = vmatmul.mubr.f32.gmra.mrb[0].mxu0 %v3485
      %v3487 = vpop.f32.mrb[0].mxu0
      %v3488 = vadd.f32 %v3174, %v3487
      %v3489 = vpop.f32.mrb[0].mxu0
      %3490 = vmatprep.mubr.f32.mxu0 0.0
      %v3491 = vand.u32 %v2892, 4294901760
      %3492 = vmatmul.mubr.f32.gmra.mrb[0].mxu0 %v3491
      %v3493 = vpop.f32.mrb[0].mxu0
      %v3494 = vadd.f32 %v3184, %v3493
      %v3495 = vpop.f32.mrb[0].mxu0
      %3496 = vmatprep.mubr.f32.mxu0 0.0
      %v3497 = vand.u32 %v2894, 4294901760
      %3498 = vmatmul.mubr.f32.gmra.mrb[0].mxu0 %v3497
      %v3499 = vpop.f32.mrb[0].mxu0
      %v3500 = vadd.f32 %v3194, %v3499
      %v3501 = vpop.f32.mrb[0].mxu0
      %3502 = vmatprep.mubr.f32.mxu0 0.0
      %v3503 = vand.u32 %v2896, 4294901760
      %3504 = vmatmul.mubr.f32.gmra.mrb[0].mxu0 %v3503
      %v3505 = vpop.f32.mrb[0].mxu0
      %v3506 = vadd.f32 %v3204, %v3505
      %v3507 = vpop.f32.mrb[0].mxu0
      %3508 = vmatprep.mubr.f32.mxu0 0.0
      %v3509 = vand.u32 %v2898, 4294901760
      %3510 = vmatmul.mubr.f32.gmra.mrb[0].mxu0 %v3509
      %v3511 = vpop.f32.mrb[0].mxu0
      %v3512 = vadd.f32 %v3214, %v3511
      %v3513 = vpop.f32.mrb[0].mxu0
      %3514 = vmatprep.mubr.f32.mxu0 0.0
      %v3515 = vand.u32 %v2900, 4294901760
      %3516 = vmatmul.mubr.f32.gmra.mrb[0].mxu0 %v3515
      %v3517 = vpop.f32.mrb[0].mxu0
      %v3518 = vadd.f32 %v3224, %v3517
      %v3519 = vpop.f32.mrb[0].mxu0
      %3520 = vmatprep.mubr.f32.mxu0 0.0
      %v3521 = vand.u32 %v2902, 4294901760
      %3522 = vmatmul.mubr.f32.gmra.mrb[0].mxu0 %v3521
      %v3523 = vpop.f32.mrb[0].mxu0
      %v3524 = vadd.f32 %v3234, %v3523
      %v3525 = vpop.f32.mrb[0].mxu0
      %3526 = vmatprep.mubr.f32.mxu0 0.0
      %v3527 = vand.u32 %v2904, 4294901760
      %3528 = vmatmul.mubr.f32.gmra.mrb[0].mxu0 %v3527
      %v3529 = vpop.f32.mrb[0].mxu0
      %v3530 = vadd.f32 %v3244, %v3529
      %v3531 = vpop.f32.mrb[0].mxu0
      %3532 = vmatprep.mubr.f32.mxu0 0.0
      %v3533 = vand.u32 %v2906, 4294901760
      %3534 = vmatmul.mubr.f32.gmra.mrb[0].mxu0 %v3533
      %v3535 = vpop.f32.mrb[0].mxu0
      %v3536 = vadd.f32 %v3254, %v3535
      %v3537 = vpop.f32.mrb[0].mxu0
      %3538 = vmatprep.mubr.f32.mxu0 0.0
      %v3539 = vand.u32 %v2908, 4294901760
      %3540 = vmatmul.mubr.f32.gmra.mrb[0].mxu0 %v3539
      %v3541 = vpop.f32.mrb[0].mxu0
      %v3542 = vadd.f32 %v3264, %v3541
      %v3543 = vpop.f32.mrb[0].mxu0
      %3544 = vmatprep.mubr.f32.mxu0 0.0
      %v3545 = vand.u32 %v2910, 4294901760
      %3546 = vmatmul.mubr.f32.gmra.mrb[0].mxu0 %v3545
      %v3547 = vpop.f32.mrb[0].mxu0
      %v3548 = vadd.f32 %v3274, %v3547
      %v3549 = vpop.f32.mrb[0].mxu0
      %3550 = vmatprep.mubr.f32.mxu0 0.0
      %v3551 = vand.u32 %v2912, 4294901760
      %3552 = vmatmul.mubr.f32.gmra.mrb[0].mxu0 %v3551
      %v3553 = vpop.f32.mrb[0].mxu0
      %v3554 = vadd.f32 %v3284, %v3553
      %v3555 = vpop.f32.mrb[0].mxu0
      %3556 = vmatprep.mubr.f32.mxu0 0.0
      %v3557 = vand.u32 %v2914, 4294901760
      %3558 = vmatmul.mubr.f32.gmra.mrb[0].mxu0 %v3557
      %v3559 = vpop.f32.mrb[0].mxu0
      %v3560 = vadd.f32 %v3294, %v3559
      %v3561 = vpop.f32.mrb[0].mxu0
      %3562 = vmatprep.mubr.f32.mxu0 0.0
      %v3563 = vand.u32 %v2916, 4294901760
      %3564 = vmatmul.mubr.f32.gmra.mrb[0].mxu0 %v3563
      %v3565 = vpop.f32.mrb[0].mxu0
      %v3566 = vadd.f32 %v3304, %v3565
      %v3567 = vpop.f32.mrb[0].mxu0
      %3568 = vdwg.mxu0
      %3569 = vmatprep.subr.mxu0 0.0
      %v3570 = vand.u32 %v2919, 4294901760
      %v3571 = vsub.f32 %v2919, %v3570
      %3572 = vmatpush1.msra.mxu0 %v3571
      %3573 = vmatprep.subr.mxu0 0.0
      %3574 = vmatpush1.msra.mxu0 0.0
      %3575 = vmatprep.subr.mxu0 0.0
      %3576 = vmatpush1.msra.mxu0 0.0
      %3577 = vmatprep.subr.mxu0 0.0
      %3578 = vmatpush1.msra.mxu0 0.0
      %3579 = vmatprep.subr.mxu0 0.0
      %3580 = vmatpush1.msra.mxu0 0.0
      %3581 = vmatprep.subr.mxu0 0.0
      %3582 = vmatpush1.msra.mxu0 0.0
      %3583 = vmatprep.subr.mxu0 0.0
      %3584 = vmatpush1.msra.mxu0 0.0
      %3585 = vmatprep.subr.mxu0 0.0
      %3586 = vmatpush1.msra.mxu0 0.0
      %3587 = vmatprep.subr.mxu0 0.0
      %3588 = vmatpush1.msra.mxu0 0.0
      %3589 = vmatprep.subr.mxu0 0.0
      %3590 = vmatpush1.msra.mxu0 0.0
      %3591 = vmatprep.subr.mxu0 0.0
      %3592 = vmatpush1.msra.mxu0 0.0
      %3593 = vmatprep.subr.mxu0 0.0
      %3594 = vmatpush1.msra.mxu0 0.0
      %3595 = vmatprep.subr.mxu0 0.0
      %3596 = vmatpush1.msra.mxu0 0.0
      %3597 = vmatprep.subr.mxu0 0.0
      %3598 = vmatpush1.msra.mxu0 0.0
      %3599 = vmatprep.subr.mxu0 0.0
      %3600 = vmatpush1.msra.mxu0 0.0
      %3601 = vmatprep.subr.mxu0 0.0
      %3602 = vmatpush1.msra.mxu0 0.0
      %3603 = vmatprep.subr.mxu0 0.0
      %3604 = vmatpush1.msra.mxu0 0.0
      %3605 = vmatprep.subr.mxu0 0.0
      %3606 = vmatpush1.msra.mxu0 0.0
      %3607 = vmatprep.subr.mxu0 0.0
      %3608 = vmatpush1.msra.mxu0 0.0
      %3609 = vmatprep.subr.mxu0 0.0
      %3610 = vmatpush1.msra.mxu0 0.0
      %3611 = vmatprep.subr.mxu0 0.0
      %3612 = vmatpush1.msra.mxu0 0.0
      %3613 = vmatprep.subr.mxu0 0.0
      %3614 = vmatpush1.msra.mxu0 0.0
      %3615 = vmatprep.subr.mxu0 0.0
      %3616 = vmatpush1.msra.mxu0 0.0
      %3617 = vmatprep.subr.mxu0 0.0
      %3618 = vmatpush1.msra.mxu0 0.0
      %3619 = vmatprep.subr.mxu0 0.0
      %3620 = vmatpush1.msra.mxu0 0.0
      %3621 = vmatprep.subr.mxu0 0.0
      %3622 = vmatpush1.msra.mxu0 0.0
      %3623 = vmatprep.subr.mxu0 0.0
      %3624 = vmatpush1.msra.mxu0 0.0
      %3625 = vmatprep.subr.mxu0 0.0
      %3626 = vmatpush1.msra.mxu0 0.0
      %3627 = vmatprep.subr.mxu0 0.0
      %3628 = vmatpush1.msra.mxu0 0.0
      %3629 = vmatprep.subr.mxu0 0.0
      %3630 = vmatpush1.msra.mxu0 0.0
      %3631 = vmatprep.subr.mxu0 0.0
      %3632 = vmatpush1.msra.mxu0 0.0
      %3633 = vmatprep.subr.mxu0 0.0
      %3634 = vmatpush1.msra.mxu0 0.0
      %3635 = vmatprep.mubr.f32.mxu0 0.0
      %v3636 = vand.u32 %v2854, 4294901760
      %v3637 = vsub.f32 %v2854, %v3636
      %3638 = vmatmul.mubr.f32.gmra.mrb[0].mxu0 %v3637
      %v3639 = vpop.f32.mrb[0].mxu0
      %v3640 = vadd.f32 %v3380, %v3639
      %v3641 = vpop.f32.mrb[0].mxu0
      %3642 = vmatprep.mubr.f32.mxu0 0.0
      %v3643 = vand.u32 %v2856, 4294901760
      %v3644 = vsub.f32 %v2856, %v3643
      %3645 = vmatmul.mubr.f32.gmra.mrb[0].mxu0 %v3644
      %v3646 = vpop.f32.mrb[0].mxu0
      %v3647 = vadd.f32 %v3386, %v3646
      %v3648 = vpop.f32.mrb[0].mxu0
      %3649 = vmatprep.mubr.f32.mxu0 0.0
      %v3650 = vand.u32 %v2858, 4294901760
      %v3651 = vsub.f32 %v2858, %v3650
      %3652 = vmatmul.mubr.f32.gmra.mrb[0].mxu0 %v3651
      %v3653 = vpop.f32.mrb[0].mxu0
      %v3654 = vadd.f32 %v3392, %v3653
      %v3655 = vpop.f32.mrb[0].mxu0
      %3656 = vmatprep.mubr.f32.mxu0 0.0
      %v3657 = vand.u32 %v2860, 4294901760
      %v3658 = vsub.f32 %v2860, %v3657
      %3659 = vmatmul.mubr.f32.gmra.mrb[0].mxu0 %v3658
      %v3660 = vpop.f32.mrb[0].mxu0
      %v3661 = vadd.f32 %v3398, %v3660
      %v3662 = vpop.f32.mrb[0].mxu0
      %3663 = vmatprep.mubr.f32.mxu0 0.0
      %v3664 = vand.u32 %v2862, 4294901760
      %v3665 = vsub.f32 %v2862, %v3664
      %3666 = vmatmul.mubr.f32.gmra.mrb[0].mxu0 %v3665
      %v3667 = vpop.f32.mrb[0].mxu0
      %v3668 = vadd.f32 %v3404, %v3667
      %v3669 = vpop.f32.mrb[0].mxu0
      %3670 = vmatprep.mubr.f32.mxu0 0.0
      %v3671 = vand.u32 %v2864, 4294901760
      %v3672 = vsub.f32 %v2864, %v3671
      %3673 = vmatmul.mubr.f32.gmra.mrb[0].mxu0 %v3672
      %v3674 = vpop.f32.mrb[0].mxu0
      %v3675 = vadd.f32 %v3410, %v3674
      %v3676 = vpop.f32.mrb[0].mxu0
      %3677 = vmatprep.mubr.f32.mxu0 0.0
      %v3678 = vand.u32 %v2866, 4294901760
      %v3679 = vsub.f32 %v2866, %v3678
      %3680 = vmatmul.mubr.f32.gmra.mrb[0].mxu0 %v3679
      %v3681 = vpop.f32.mrb[0].mxu0
      %v3682 = vadd.f32 %v3416, %v3681
      %v3683 = vpop.f32.mrb[0].mxu0
      %3684 = vmatprep.mubr.f32.mxu0 0.0
      %v3685 = vand.u32 %v2868, 4294901760
      %v3686 = vsub.f32 %v2868, %v3685
      %3687 = vmatmul.mubr.f32.gmra.mrb[0].mxu0 %v3686
      %v3688 = vpop.f32.mrb[0].mxu0
      %v3689 = vadd.f32 %v3422, %v3688
      %v3690 = vpop.f32.mrb[0].mxu0
      %3691 = vmatprep.mubr.f32.mxu0 0.0
      %v3692 = vand.u32 %v2870, 4294901760
      %v3693 = vsub.f32 %v2870, %v3692
      %3694 = vmatmul.mubr.f32.gmra.mrb[0].mxu0 %v3693
      %v3695 = vpop.f32.mrb[0].mxu0
      %v3696 = vadd.f32 %v3428, %v3695
      %v3697 = vpop.f32.mrb[0].mxu0
      %3698 = vmatprep.mubr.f32.mxu0 0.0
      %v3699 = vand.u32 %v2872, 4294901760
      %v3700 = vsub.f32 %v2872, %v3699
      %3701 = vmatmul.mubr.f32.gmra.mrb[0].mxu0 %v3700
      %v3702 = vpop.f32.mrb[0].mxu0
      %v3703 = vadd.f32 %v3434, %v3702
      %v3704 = vpop.f32.mrb[0].mxu0
      %3705 = vmatprep.mubr.f32.mxu0 0.0
      %v3706 = vand.u32 %v2874, 4294901760
      %v3707 = vsub.f32 %v2874, %v3706
      %3708 = vmatmul.mubr.f32.gmra.mrb[0].mxu0 %v3707
      %v3709 = vpop.f32.mrb[0].mxu0
      %v3710 = vadd.f32 %v3440, %v3709
      %v3711 = vpop.f32.mrb[0].mxu0
      %3712 = vmatprep.mubr.f32.mxu0 0.0
      %v3713 = vand.u32 %v2876, 4294901760
      %v3714 = vsub.f32 %v2876, %v3713
      %3715 = vmatmul.mubr.f32.gmra.mrb[0].mxu0 %v3714
      %v3716 = vpop.f32.mrb[0].mxu0
      %v3717 = vadd.f32 %v3446, %v3716
      %v3718 = vpop.f32.mrb[0].mxu0
      %3719 = vmatprep.mubr.f32.mxu0 0.0
      %v3720 = vand.u32 %v2878, 4294901760
      %v3721 = vsub.f32 %v2878, %v3720
      %3722 = vmatmul.mubr.f32.gmra.mrb[0].mxu0 %v3721
      %v3723 = vpop.f32.mrb[0].mxu0
      %v3724 = vadd.f32 %v3452, %v3723
      %v3725 = vpop.f32.mrb[0].mxu0
      %3726 = vmatprep.mubr.f32.mxu0 0.0
      %v3727 = vand.u32 %v2880, 4294901760
      %v3728 = vsub.f32 %v2880, %v3727
      %3729 = vmatmul.mubr.f32.gmra.mrb[0].mxu0 %v3728
      %v3730 = vpop.f32.mrb[0].mxu0
      %v3731 = vadd.f32 %v3458, %v3730
      %v3732 = vpop.f32.mrb[0].mxu0
      %3733 = vmatprep.mubr.f32.mxu0 0.0
      %v3734 = vand.u32 %v2882, 4294901760
      %v3735 = vsub.f32 %v2882, %v3734
      %3736 = vmatmul.mubr.f32.gmra.mrb[0].mxu0 %v3735
      %v3737 = vpop.f32.mrb[0].mxu0
      %v3738 = vadd.f32 %v3464, %v3737
      %v3739 = vpop.f32.mrb[0].mxu0
      %3740 = vmatprep.mubr.f32.mxu0 0.0
      %v3741 = vand.u32 %v2884, 4294901760
      %v3742 = vsub.f32 %v2884, %v3741
      %3743 = vmatmul.mubr.f32.gmra.mrb[0].mxu0 %v3742
      %v3744 = vpop.f32.mrb[0].mxu0
      %v3745 = vadd.f32 %v3470, %v3744
      %v3746 = vpop.f32.mrb[0].mxu0
      %3747 = vmatprep.mubr.f32.mxu0 0.0
      %v3748 = vand.u32 %v2886, 4294901760
      %v3749 = vsub.f32 %v2886, %v3748
      %3750 = vmatmul.mubr.f32.gmra.mrb[0].mxu0 %v3749
      %v3751 = vpop.f32.mrb[0].mxu0
      %v3752 = vadd.f32 %v3476, %v3751
      %v3753 = vpop.f32.mrb[0].mxu0
      %3754 = vmatprep.mubr.f32.mxu0 0.0
      %v3755 = vand.u32 %v2888, 4294901760
      %v3756 = vsub.f32 %v2888, %v3755
      %3757 = vmatmul.mubr.f32.gmra.mrb[0].mxu0 %v3756
      %v3758 = vpop.f32.mrb[0].mxu0
      %v3759 = vadd.f32 %v3482, %v3758
      %v3760 = vpop.f32.mrb[0].mxu0
      %3761 = vmatprep.mubr.f32.mxu0 0.0
      %v3762 = vand.u32 %v2890, 4294901760
      %v3763 = vsub.f32 %v2890, %v3762
      %3764 = vmatmul.mubr.f32.gmra.mrb[0].mxu0 %v3763
      %v3765 = vpop.f32.mrb[0].mxu0
      %v3766 = vadd.f32 %v3488, %v3765
      %v3767 = vpop.f32.mrb[0].mxu0
      %3768 = vmatprep.mubr.f32.mxu0 0.0
      %v3769 = vand.u32 %v2892, 4294901760
      %v3770 = vsub.f32 %v2892, %v3769
      %3771 = vmatmul.mubr.f32.gmra.mrb[0].mxu0 %v3770
      %v3772 = vpop.f32.mrb[0].mxu0
      %v3773 = vadd.f32 %v3494, %v3772
      %v3774 = vpop.f32.mrb[0].mxu0
      %3775 = vmatprep.mubr.f32.mxu0 0.0
      %v3776 = vand.u32 %v2894, 4294901760
      %v3777 = vsub.f32 %v2894, %v3776
      %3778 = vmatmul.mubr.f32.gmra.mrb[0].mxu0 %v3777
      %v3779 = vpop.f32.mrb[0].mxu0
      %v3780 = vadd.f32 %v3500, %v3779
      %v3781 = vpop.f32.mrb[0].mxu0
      %3782 = vmatprep.mubr.f32.mxu0 0.0
      %v3783 = vand.u32 %v2896, 4294901760
      %v3784 = vsub.f32 %v2896, %v3783
      %3785 = vmatmul.mubr.f32.gmra.mrb[0].mxu0 %v3784
      %v3786 = vpop.f32.mrb[0].mxu0
      %v3787 = vadd.f32 %v3506, %v3786
      %v3788 = vpop.f32.mrb[0].mxu0
      %3789 = vmatprep.mubr.f32.mxu0 0.0
      %v3790 = vand.u32 %v2898, 4294901760
      %v3791 = vsub.f32 %v2898, %v3790
      %3792 = vmatmul.mubr.f32.gmra.mrb[0].mxu0 %v3791
      %v3793 = vpop.f32.mrb[0].mxu0
      %v3794 = vadd.f32 %v3512, %v3793
      %v3795 = vpop.f32.mrb[0].mxu0
      %3796 = vmatprep.mubr.f32.mxu0 0.0
      %v3797 = vand.u32 %v2900, 4294901760
      %v3798 = vsub.f32 %v2900, %v3797
      %3799 = vmatmul.mubr.f32.gmra.mrb[0].mxu0 %v3798
      %v3800 = vpop.f32.mrb[0].mxu0
      %v3801 = vadd.f32 %v3518, %v3800
      %v3802 = vpop.f32.mrb[0].mxu0
      %3803 = vmatprep.mubr.f32.mxu0 0.0
      %v3804 = vand.u32 %v2902, 4294901760
      %v3805 = vsub.f32 %v2902, %v3804
      %3806 = vmatmul.mubr.f32.gmra.mrb[0].mxu0 %v3805
      %v3807 = vpop.f32.mrb[0].mxu0
      %v3808 = vadd.f32 %v3524, %v3807
      %v3809 = vpop.f32.mrb[0].mxu0
      %3810 = vmatprep.mubr.f32.mxu0 0.0
      %v3811 = vand.u32 %v2904, 4294901760
      %v3812 = vsub.f32 %v2904, %v3811
      %3813 = vmatmul.mubr.f32.gmra.mrb[0].mxu0 %v3812
      %v3814 = vpop.f32.mrb[0].mxu0
      %v3815 = vadd.f32 %v3530, %v3814
      %v3816 = vpop.f32.mrb[0].mxu0
      %3817 = vmatprep.mubr.f32.mxu0 0.0
      %v3818 = vand.u32 %v2906, 4294901760
      %v3819 = vsub.f32 %v2906, %v3818
      %3820 = vmatmul.mubr.f32.gmra.mrb[0].mxu0 %v3819
      %v3821 = vpop.f32.mrb[0].mxu0
      %v3822 = vadd.f32 %v3536, %v3821
      %v3823 = vpop.f32.mrb[0].mxu0
      %3824 = vmatprep.mubr.f32.mxu0 0.0
      %v3825 = vand.u32 %v2908, 4294901760
      %v3826 = vsub.f32 %v2908, %v3825
      %3827 = vmatmul.mubr.f32.gmra.mrb[0].mxu0 %v3826
      %v3828 = vpop.f32.mrb[0].mxu0
      %v3829 = vadd.f32 %v3542, %v3828
      %v3830 = vpop.f32.mrb[0].mxu0
      %3831 = vmatprep.mubr.f32.mxu0 0.0
      %v3832 = vand.u32 %v2910, 4294901760
      %v3833 = vsub.f32 %v2910, %v3832
      %3834 = vmatmul.mubr.f32.gmra.mrb[0].mxu0 %v3833
      %v3835 = vpop.f32.mrb[0].mxu0
      %v3836 = vadd.f32 %v3548, %v3835
      %v3837 = vpop.f32.mrb[0].mxu0
      %3838 = vmatprep.mubr.f32.mxu0 0.0
      %v3839 = vand.u32 %v2912, 4294901760
      %v3840 = vsub.f32 %v2912, %v3839
      %3841 = vmatmul.mubr.f32.gmra.mrb[0].mxu0 %v3840
      %v3842 = vpop.f32.mrb[0].mxu0
      %v3843 = vadd.f32 %v3554, %v3842
      %v3844 = vpop.f32.mrb[0].mxu0
      %3845 = vmatprep.mubr.f32.mxu0 0.0
      %v3846 = vand.u32 %v2914, 4294901760
      %v3847 = vsub.f32 %v2914, %v3846
      %3848 = vmatmul.mubr.f32.gmra.mrb[0].mxu0 %v3847
      %v3849 = vpop.f32.mrb[0].mxu0
      %v3850 = vadd.f32 %v3560, %v3849
      %v3851 = vpop.f32.mrb[0].mxu0
      %3852 = vmatprep.mubr.f32.mxu0 0.0
      %v3853 = vand.u32 %v2916, 4294901760
      %v3854 = vsub.f32 %v2916, %v3853
      %3855 = vmatmul.mubr.f32.gmra.mrb[0].mxu0 %v3854
      %v3856 = vpop.f32.mrb[0].mxu0
      %v3857 = vadd.f32 %v3566, %v3856
      %v3858 = vpop.f32.mrb[0].mxu0
      %3859 = vdwg.mxu0
      %3860 = vmatprep.subr.mxu0 0.0
      %v3861 = vand.u32 %v2919, 4294901760
      %3862 = vmatpush1.msra.mxu0 %v3861
      %3863 = vmatprep.subr.mxu0 0.0
      %3864 = vmatpush1.msra.mxu0 0.0
      %3865 = vmatprep.subr.mxu0 0.0
      %3866 = vmatpush1.msra.mxu0 0.0
      %3867 = vmatprep.subr.mxu0 0.0
      %3868 = vmatpush1.msra.mxu0 0.0
      %3869 = vmatprep.subr.mxu0 0.0
      %3870 = vmatpush1.msra.mxu0 0.0
      %3871 = vmatprep.subr.mxu0 0.0
      %3872 = vmatpush1.msra.mxu0 0.0
      %3873 = vmatprep.subr.mxu0 0.0
      %3874 = vmatpush1.msra.mxu0 0.0
      %3875 = vmatprep.subr.mxu0 0.0
      %3876 = vmatpush1.msra.mxu0 0.0
      %3877 = vmatprep.subr.mxu0 0.0
      %3878 = vmatpush1.msra.mxu0 0.0
      %3879 = vmatprep.subr.mxu0 0.0
      %3880 = vmatpush1.msra.mxu0 0.0
      %3881 = vmatprep.subr.mxu0 0.0
      %3882 = vmatpush1.msra.mxu0 0.0
      %3883 = vmatprep.subr.mxu0 0.0
      %3884 = vmatpush1.msra.mxu0 0.0
      %3885 = vmatprep.subr.mxu0 0.0
      %3886 = vmatpush1.msra.mxu0 0.0
      %3887 = vmatprep.subr.mxu0 0.0
      %3888 = vmatpush1.msra.mxu0 0.0
      %3889 = vmatprep.subr.mxu0 0.0
      %3890 = vmatpush1.msra.mxu0 0.0
      %3891 = vmatprep.subr.mxu0 0.0
      %3892 = vmatpush1.msra.mxu0 0.0
      %3893 = vmatprep.subr.mxu0 0.0
      %3894 = vmatpush1.msra.mxu0 0.0
      %3895 = vmatprep.subr.mxu0 0.0
      %3896 = vmatpush1.msra.mxu0 0.0
      %3897 = vmatprep.subr.mxu0 0.0
      %3898 = vmatpush1.msra.mxu0 0.0
      %3899 = vmatprep.subr.mxu0 0.0
      %3900 = vmatpush1.msra.mxu0 0.0
      %3901 = vmatprep.subr.mxu0 0.0
      %3902 = vmatpush1.msra.mxu0 0.0
      %3903 = vmatprep.subr.mxu0 0.0
      %3904 = vmatpush1.msra.mxu0 0.0
      %3905 = vmatprep.subr.mxu0 0.0
      %3906 = vmatpush1.msra.mxu0 0.0
      %3907 = vmatprep.subr.mxu0 0.0
      %3908 = vmatpush1.msra.mxu0 0.0
      %3909 = vmatprep.subr.mxu0 0.0
      %3910 = vmatpush1.msra.mxu0 0.0
      %3911 = vmatprep.subr.mxu0 0.0
      %3912 = vmatpush1.msra.mxu0 0.0
      %3913 = vmatprep.subr.mxu0 0.0
      %3914 = vmatpush1.msra.mxu0 0.0
      %3915 = vmatprep.subr.mxu0 0.0
      %3916 = vmatpush1.msra.mxu0 0.0
      %3917 = vmatprep.subr.mxu0 0.0
      %3918 = vmatpush1.msra.mxu0 0.0
      %3919 = vmatprep.subr.mxu0 0.0
      %3920 = vmatpush1.msra.mxu0 0.0
      %3921 = vmatprep.subr.mxu0 0.0
      %3922 = vmatpush1.msra.mxu0 0.0
      %3923 = vmatprep.subr.mxu0 0.0
      %3924 = vmatpush1.msra.mxu0 0.0
      %3925 = vmatprep.mubr.f32.mxu0 0.0
      %v3926 = vand.u32 %v2854, 4294901760
      %v3927 = vsub.f32 %v2854, %v3926
      %v3928 = vand.u32 %v3927, 4294901760
      %3929 = vmatmul.mubr.f32.gmra.mrb[0].mxu0 %v3928
      %v3930 = vpop.f32.mrb[0].mxu0
      %v3931 = vadd.f32 %v3640, %v3930
      %v3932 = vpop.f32.mrb[0].mxu0
      %3933 = vmatprep.mubr.f32.mxu0 0.0
      %v3934 = vand.u32 %v2856, 4294901760
      %v3935 = vsub.f32 %v2856, %v3934
      %v3936 = vand.u32 %v3935, 4294901760
      %3937 = vmatmul.mubr.f32.gmra.mrb[0].mxu0 %v3936
      %v3938 = vpop.f32.mrb[0].mxu0
      %v3939 = vadd.f32 %v3647, %v3938
      %v3940 = vpop.f32.mrb[0].mxu0
      %3941 = vmatprep.mubr.f32.mxu0 0.0
      %v3942 = vand.u32 %v2858, 4294901760
      %v3943 = vsub.f32 %v2858, %v3942
      %v3944 = vand.u32 %v3943, 4294901760
      %3945 = vmatmul.mubr.f32.gmra.mrb[0].mxu0 %v3944
      %v3946 = vpop.f32.mrb[0].mxu0
      %v3947 = vadd.f32 %v3654, %v3946
      %v3948 = vpop.f32.mrb[0].mxu0
      %3949 = vmatprep.mubr.f32.mxu0 0.0
      %v3950 = vand.u32 %v2860, 4294901760
      %v3951 = vsub.f32 %v2860, %v3950
      %v3952 = vand.u32 %v3951, 4294901760
      %3953 = vmatmul.mubr.f32.gmra.mrb[0].mxu0 %v3952
      %v3954 = vpop.f32.mrb[0].mxu0
      %v3955 = vadd.f32 %v3661, %v3954
      %v3956 = vpop.f32.mrb[0].mxu0
      %3957 = vmatprep.mubr.f32.mxu0 0.0
      %v3958 = vand.u32 %v2862, 4294901760
      %v3959 = vsub.f32 %v2862, %v3958
      %v3960 = vand.u32 %v3959, 4294901760
      %3961 = vmatmul.mubr.f32.gmra.mrb[0].mxu0 %v3960
      %v3962 = vpop.f32.mrb[0].mxu0
      %v3963 = vadd.f32 %v3668, %v3962
      %v3964 = vpop.f32.mrb[0].mxu0
      %3965 = vmatprep.mubr.f32.mxu0 0.0
      %v3966 = vand.u32 %v2864, 4294901760
      %v3967 = vsub.f32 %v2864, %v3966
      %v3968 = vand.u32 %v3967, 4294901760
      %3969 = vmatmul.mubr.f32.gmra.mrb[0].mxu0 %v3968
      %v3970 = vpop.f32.mrb[0].mxu0
      %v3971 = vadd.f32 %v3675, %v3970
      %v3972 = vpop.f32.mrb[0].mxu0
      %3973 = vmatprep.mubr.f32.mxu0 0.0
      %v3974 = vand.u32 %v2866, 4294901760
      %v3975 = vsub.f32 %v2866, %v3974
      %v3976 = vand.u32 %v3975, 4294901760
      %3977 = vmatmul.mubr.f32.gmra.mrb[0].mxu0 %v3976
      %v3978 = vpop.f32.mrb[0].mxu0
      %v3979 = vadd.f32 %v3682, %v3978
      %v3980 = vpop.f32.mrb[0].mxu0
      %3981 = vmatprep.mubr.f32.mxu0 0.0
      %v3982 = vand.u32 %v2868, 4294901760
      %v3983 = vsub.f32 %v2868, %v3982
      %v3984 = vand.u32 %v3983, 4294901760
      %3985 = vmatmul.mubr.f32.gmra.mrb[0].mxu0 %v3984
      %v3986 = vpop.f32.mrb[0].mxu0
      %v3987 = vadd.f32 %v3689, %v3986
      %v3988 = vpop.f32.mrb[0].mxu0
      %3989 = vmatprep.mubr.f32.mxu0 0.0
      %v3990 = vand.u32 %v2870, 4294901760
      %v3991 = vsub.f32 %v2870, %v3990
      %v3992 = vand.u32 %v3991, 4294901760
      %3993 = vmatmul.mubr.f32.gmra.mrb[0].mxu0 %v3992
      %v3994 = vpop.f32.mrb[0].mxu0
      %v3995 = vadd.f32 %v3696, %v3994
      %v3996 = vpop.f32.mrb[0].mxu0
      %3997 = vmatprep.mubr.f32.mxu0 0.0
      %v3998 = vand.u32 %v2872, 4294901760
      %v3999 = vsub.f32 %v2872, %v3998
      %v4000 = vand.u32 %v3999, 4294901760
      %4001 = vmatmul.mubr.f32.gmra.mrb[0].mxu0 %v4000
      %v4002 = vpop.f32.mrb[0].mxu0
      %v4003 = vadd.f32 %v3703, %v4002
      %v4004 = vpop.f32.mrb[0].mxu0
      %4005 = vmatprep.mubr.f32.mxu0 0.0
      %v4006 = vand.u32 %v2874, 4294901760
      %v4007 = vsub.f32 %v2874, %v4006
      %v4008 = vand.u32 %v4007, 4294901760
      %4009 = vmatmul.mubr.f32.gmra.mrb[0].mxu0 %v4008
      %v4010 = vpop.f32.mrb[0].mxu0
      %v4011 = vadd.f32 %v3710, %v4010
      %v4012 = vpop.f32.mrb[0].mxu0
      %4013 = vmatprep.mubr.f32.mxu0 0.0
      %v4014 = vand.u32 %v2876, 4294901760
      %v4015 = vsub.f32 %v2876, %v4014
      %v4016 = vand.u32 %v4015, 4294901760
      %4017 = vmatmul.mubr.f32.gmra.mrb[0].mxu0 %v4016
      %v4018 = vpop.f32.mrb[0].mxu0
      %v4019 = vadd.f32 %v3717, %v4018
      %v4020 = vpop.f32.mrb[0].mxu0
      %4021 = vmatprep.mubr.f32.mxu0 0.0
      %v4022 = vand.u32 %v2878, 4294901760
      %v4023 = vsub.f32 %v2878, %v4022
      %v4024 = vand.u32 %v4023, 4294901760
      %4025 = vmatmul.mubr.f32.gmra.mrb[0].mxu0 %v4024
      %v4026 = vpop.f32.mrb[0].mxu0
      %v4027 = vadd.f32 %v3724, %v4026
      %v4028 = vpop.f32.mrb[0].mxu0
      %4029 = vmatprep.mubr.f32.mxu0 0.0
      %v4030 = vand.u32 %v2880, 4294901760
      %v4031 = vsub.f32 %v2880, %v4030
      %v4032 = vand.u32 %v4031, 4294901760
      %4033 = vmatmul.mubr.f32.gmra.mrb[0].mxu0 %v4032
      %v4034 = vpop.f32.mrb[0].mxu0
      %v4035 = vadd.f32 %v3731, %v4034
      %v4036 = vpop.f32.mrb[0].mxu0
      %4037 = vmatprep.mubr.f32.mxu0 0.0
      %v4038 = vand.u32 %v2882, 4294901760
      %v4039 = vsub.f32 %v2882, %v4038
      %v4040 = vand.u32 %v4039, 4294901760
      %4041 = vmatmul.mubr.f32.gmra.mrb[0].mxu0 %v4040
      %v4042 = vpop.f32.mrb[0].mxu0
      %v4043 = vadd.f32 %v3738, %v4042
      %v4044 = vpop.f32.mrb[0].mxu0
      %4045 = vmatprep.mubr.f32.mxu0 0.0
      %v4046 = vand.u32 %v2884, 4294901760
      %v4047 = vsub.f32 %v2884, %v4046
      %v4048 = vand.u32 %v4047, 4294901760
      %4049 = vmatmul.mubr.f32.gmra.mrb[0].mxu0 %v4048
      %v4050 = vpop.f32.mrb[0].mxu0
      %v4051 = vadd.f32 %v3745, %v4050
      %v4052 = vpop.f32.mrb[0].mxu0
      %4053 = vmatprep.mubr.f32.mxu0 0.0
      %v4054 = vand.u32 %v2886, 4294901760
      %v4055 = vsub.f32 %v2886, %v4054
      %v4056 = vand.u32 %v4055, 4294901760
      %4057 = vmatmul.mubr.f32.gmra.mrb[0].mxu0 %v4056
      %v4058 = vpop.f32.mrb[0].mxu0
      %v4059 = vadd.f32 %v3752, %v4058
      %v4060 = vpop.f32.mrb[0].mxu0
      %4061 = vmatprep.mubr.f32.mxu0 0.0
      %v4062 = vand.u32 %v2888, 4294901760
      %v4063 = vsub.f32 %v2888, %v4062
      %v4064 = vand.u32 %v4063, 4294901760
      %4065 = vmatmul.mubr.f32.gmra.mrb[0].mxu0 %v4064
      %v4066 = vpop.f32.mrb[0].mxu0
      %v4067 = vadd.f32 %v3759, %v4066
      %v4068 = vpop.f32.mrb[0].mxu0
      %4069 = vmatprep.mubr.f32.mxu0 0.0
      %v4070 = vand.u32 %v2890, 4294901760
      %v4071 = vsub.f32 %v2890, %v4070
      %v4072 = vand.u32 %v4071, 4294901760
      %4073 = vmatmul.mubr.f32.gmra.mrb[0].mxu0 %v4072
      %v4074 = vpop.f32.mrb[0].mxu0
      %v4075 = vadd.f32 %v3766, %v4074
      %v4076 = vpop.f32.mrb[0].mxu0
      %4077 = vmatprep.mubr.f32.mxu0 0.0
      %v4078 = vand.u32 %v2892, 4294901760
      %v4079 = vsub.f32 %v2892, %v4078
      %v4080 = vand.u32 %v4079, 4294901760
      %4081 = vmatmul.mubr.f32.gmra.mrb[0].mxu0 %v4080
      %v4082 = vpop.f32.mrb[0].mxu0
      %v4083 = vadd.f32 %v3773, %v4082
      %v4084 = vpop.f32.mrb[0].mxu0
      %4085 = vmatprep.mubr.f32.mxu0 0.0
      %v4086 = vand.u32 %v2894, 4294901760
      %v4087 = vsub.f32 %v2894, %v4086
      %v4088 = vand.u32 %v4087, 4294901760
      %4089 = vmatmul.mubr.f32.gmra.mrb[0].mxu0 %v4088
      %v4090 = vpop.f32.mrb[0].mxu0
      %v4091 = vadd.f32 %v3780, %v4090
      %v4092 = vpop.f32.mrb[0].mxu0
      %4093 = vmatprep.mubr.f32.mxu0 0.0
      %v4094 = vand.u32 %v2896, 4294901760
      %v4095 = vsub.f32 %v2896, %v4094
      %v4096 = vand.u32 %v4095, 4294901760
      %4097 = vmatmul.mubr.f32.gmra.mrb[0].mxu0 %v4096
      %v4098 = vpop.f32.mrb[0].mxu0
      %v4099 = vadd.f32 %v3787, %v4098
      %v4100 = vpop.f32.mrb[0].mxu0
      %4101 = vmatprep.mubr.f32.mxu0 0.0
      %v4102 = vand.u32 %v2898, 4294901760
      %v4103 = vsub.f32 %v2898, %v4102
      %v4104 = vand.u32 %v4103, 4294901760
      %4105 = vmatmul.mubr.f32.gmra.mrb[0].mxu0 %v4104
      %v4106 = vpop.f32.mrb[0].mxu0
      %v4107 = vadd.f32 %v3794, %v4106
      %v4108 = vpop.f32.mrb[0].mxu0
      %4109 = vmatprep.mubr.f32.mxu0 0.0
      %v4110 = vand.u32 %v2900, 4294901760
      %v4111 = vsub.f32 %v2900, %v4110
      %v4112 = vand.u32 %v4111, 4294901760
      %4113 = vmatmul.mubr.f32.gmra.mrb[0].mxu0 %v4112
      %v4114 = vpop.f32.mrb[0].mxu0
      %v4115 = vadd.f32 %v3801, %v4114
      %v4116 = vpop.f32.mrb[0].mxu0
      %4117 = vmatprep.mubr.f32.mxu0 0.0
      %v4118 = vand.u32 %v2902, 4294901760
      %v4119 = vsub.f32 %v2902, %v4118
      %v4120 = vand.u32 %v4119, 4294901760
      %4121 = vmatmul.mubr.f32.gmra.mrb[0].mxu0 %v4120
      %v4122 = vpop.f32.mrb[0].mxu0
      %v4123 = vadd.f32 %v3808, %v4122
      %v4124 = vpop.f32.mrb[0].mxu0
      %4125 = vmatprep.mubr.f32.mxu0 0.0
      %v4126 = vand.u32 %v2904, 4294901760
      %v4127 = vsub.f32 %v2904, %v4126
      %v4128 = vand.u32 %v4127, 4294901760
      %4129 = vmatmul.mubr.f32.gmra.mrb[0].mxu0 %v4128
      %v4130 = vpop.f32.mrb[0].mxu0
      %v4131 = vadd.f32 %v3815, %v4130
      %v4132 = vpop.f32.mrb[0].mxu0
      %4133 = vmatprep.mubr.f32.mxu0 0.0
      %v4134 = vand.u32 %v2906, 4294901760
      %v4135 = vsub.f32 %v2906, %v4134
      %v4136 = vand.u32 %v4135, 4294901760
      %4137 = vmatmul.mubr.f32.gmra.mrb[0].mxu0 %v4136
      %v4138 = vpop.f32.mrb[0].mxu0
      %v4139 = vadd.f32 %v3822, %v4138
      %v4140 = vpop.f32.mrb[0].mxu0
      %4141 = vmatprep.mubr.f32.mxu0 0.0
      %v4142 = vand.u32 %v2908, 4294901760
      %v4143 = vsub.f32 %v2908, %v4142
      %v4144 = vand.u32 %v4143, 4294901760
      %4145 = vmatmul.mubr.f32.gmra.mrb[0].mxu0 %v4144
      %v4146 = vpop.f32.mrb[0].mxu0
      %v4147 = vadd.f32 %v3829, %v4146
      %v4148 = vpop.f32.mrb[0].mxu0
      %4149 = vmatprep.mubr.f32.mxu0 0.0
      %v4150 = vand.u32 %v2910, 4294901760
      %v4151 = vsub.f32 %v2910, %v4150
      %v4152 = vand.u32 %v4151, 4294901760
      %4153 = vmatmul.mubr.f32.gmra.mrb[0].mxu0 %v4152
      %v4154 = vpop.f32.mrb[0].mxu0
      %v4155 = vadd.f32 %v3836, %v4154
      %v4156 = vpop.f32.mrb[0].mxu0
      %4157 = vmatprep.mubr.f32.mxu0 0.0
      %v4158 = vand.u32 %v2912, 4294901760
      %v4159 = vsub.f32 %v2912, %v4158
      %v4160 = vand.u32 %v4159, 4294901760
      %4161 = vmatmul.mubr.f32.gmra.mrb[0].mxu0 %v4160
      %v4162 = vpop.f32.mrb[0].mxu0
      %v4163 = vadd.f32 %v3843, %v4162
      %v4164 = vpop.f32.mrb[0].mxu0
      %4165 = vmatprep.mubr.f32.mxu0 0.0
      %v4166 = vand.u32 %v2914, 4294901760
      %v4167 = vsub.f32 %v2914, %v4166
      %v4168 = vand.u32 %v4167, 4294901760
      %4169 = vmatmul.mubr.f32.gmra.mrb[0].mxu0 %v4168
      %v4170 = vpop.f32.mrb[0].mxu0
      %v4171 = vadd.f32 %v3850, %v4170
      %v4172 = vpop.f32.mrb[0].mxu0
      %4173 = vmatprep.mubr.f32.mxu0 0.0
      %v4174 = vand.u32 %v2916, 4294901760
      %v4175 = vsub.f32 %v2916, %v4174
      %v4176 = vand.u32 %v4175, 4294901760
      %4177 = vmatmul.mubr.f32.gmra.mrb[0].mxu0 %v4176
      %v4178 = vpop.f32.mrb[0].mxu0
      %v4179 = vadd.f32 %v3857, %v4178
      %v4180 = vpop.f32.mrb[0].mxu0
      %4181 = vdwg.mxu0
      %4182 = vmatprep.subr.mxu0 0.0
      %v4183 = vand.u32 %v2919, 4294901760
      %v4184 = vsub.f32 %v2919, %v4183
      %v4185 = vand.u32 %v4184, 4294901760
      %4186 = vmatpush1.msra.mxu0 %v4185
      %4187 = vmatprep.subr.mxu0 0.0
      %4188 = vmatpush1.msra.mxu0 0.0
      %4189 = vmatprep.subr.mxu0 0.0
      %4190 = vmatpush1.msra.mxu0 0.0
      %4191 = vmatprep.subr.mxu0 0.0
      %4192 = vmatpush1.msra.mxu0 0.0
      %4193 = vmatprep.subr.mxu0 0.0
      %4194 = vmatpush1.msra.mxu0 0.0
      %4195 = vmatprep.subr.mxu0 0.0
      %4196 = vmatpush1.msra.mxu0 0.0
      %4197 = vmatprep.subr.mxu0 0.0
      %4198 = vmatpush1.msra.mxu0 0.0
      %4199 = vmatprep.subr.mxu0 0.0
      %4200 = vmatpush1.msra.mxu0 0.0
      %4201 = vmatprep.subr.mxu0 0.0
      %4202 = vmatpush1.msra.mxu0 0.0
      %4203 = vmatprep.subr.mxu0 0.0
      %4204 = vmatpush1.msra.mxu0 0.0
      %4205 = vmatprep.subr.mxu0 0.0
      %4206 = vmatpush1.msra.mxu0 0.0
      %4207 = vmatprep.subr.mxu0 0.0
      %4208 = vmatpush1.msra.mxu0 0.0
      %4209 = vmatprep.subr.mxu0 0.0
      %4210 = vmatpush1.msra.mxu0 0.0
      %4211 = vmatprep.subr.mxu0 0.0
      %4212 = vmatpush1.msra.mxu0 0.0
      %4213 = vmatprep.subr.mxu0 0.0
      %4214 = vmatpush1.msra.mxu0 0.0
      %4215 = vmatprep.subr.mxu0 0.0
      %4216 = vmatpush1.msra.mxu0 0.0
      %4217 = vmatprep.subr.mxu0 0.0
      %4218 = vmatpush1.msra.mxu0 0.0
      %4219 = vmatprep.subr.mxu0 0.0
      %4220 = vmatpush1.msra.mxu0 0.0
      %4221 = vmatprep.subr.mxu0 0.0
      %4222 = vmatpush1.msra.mxu0 0.0
      %4223 = vmatprep.subr.mxu0 0.0
      %4224 = vmatpush1.msra.mxu0 0.0
      %4225 = vmatprep.subr.mxu0 0.0
      %4226 = vmatpush1.msra.mxu0 0.0
      %4227 = vmatprep.subr.mxu0 0.0
      %4228 = vmatpush1.msra.mxu0 0.0
      %4229 = vmatprep.subr.mxu0 0.0
      %4230 = vmatpush1.msra.mxu0 0.0
      %4231 = vmatprep.subr.mxu0 0.0
      %4232 = vmatpush1.msra.mxu0 0.0
      %4233 = vmatprep.subr.mxu0 0.0
      %4234 = vmatpush1.msra.mxu0 0.0
      %4235 = vmatprep.subr.mxu0 0.0
      %4236 = vmatpush1.msra.mxu0 0.0
      %4237 = vmatprep.subr.mxu0 0.0
      %4238 = vmatpush1.msra.mxu0 0.0
      %4239 = vmatprep.subr.mxu0 0.0
      %4240 = vmatpush1.msra.mxu0 0.0
      %4241 = vmatprep.subr.mxu0 0.0
      %4242 = vmatpush1.msra.mxu0 0.0
      %4243 = vmatprep.subr.mxu0 0.0
      %4244 = vmatpush1.msra.mxu0 0.0
      %4245 = vmatprep.subr.mxu0 0.0
      %4246 = vmatpush1.msra.mxu0 0.0
      %4247 = vmatprep.subr.mxu0 0.0
      %4248 = vmatpush1.msra.mxu0 0.0
      %4249 = vmatprep.mubr.f32.mxu0 0.0
      %v4250 = vand.u32 %v2854, 4294901760
      %4251 = vmatmul.mubr.f32.gmra.mrb[0].mxu0 %v4250
      %v4252 = vpop.f32.mrb[0].mxu0
      %v4253 = vadd.f32 %v3931, %v4252
      %v4254 = vpop.f32.mrb[0].mxu0
      %4255 = vmatprep.mubr.f32.mxu0 0.0
      %v4256 = vand.u32 %v2856, 4294901760
      %4257 = vmatmul.mubr.f32.gmra.mrb[0].mxu0 %v4256
      %v4258 = vpop.f32.mrb[0].mxu0
      %v4259 = vadd.f32 %v3939, %v4258
      %v4260 = vpop.f32.mrb[0].mxu0
      %4261 = vmatprep.mubr.f32.mxu0 0.0
      %v4262 = vand.u32 %v2858, 4294901760
      %4263 = vmatmul.mubr.f32.gmra.mrb[0].mxu0 %v4262
      %v4264 = vpop.f32.mrb[0].mxu0
      %v4265 = vadd.f32 %v3947, %v4264
      %v4266 = vpop.f32.mrb[0].mxu0
      %4267 = vmatprep.mubr.f32.mxu0 0.0
      %v4268 = vand.u32 %v2860, 4294901760
      %4269 = vmatmul.mubr.f32.gmra.mrb[0].mxu0 %v4268
      %v4270 = vpop.f32.mrb[0].mxu0
      %v4271 = vadd.f32 %v3955, %v4270
      %v4272 = vpop.f32.mrb[0].mxu0
      %4273 = vmatprep.mubr.f32.mxu0 0.0
      %v4274 = vand.u32 %v2862, 4294901760
      %4275 = vmatmul.mubr.f32.gmra.mrb[0].mxu0 %v4274
      %v4276 = vpop.f32.mrb[0].mxu0
      %v4277 = vadd.f32 %v3963, %v4276
      %v4278 = vpop.f32.mrb[0].mxu0
      %4279 = vmatprep.mubr.f32.mxu0 0.0
      %v4280 = vand.u32 %v2864, 4294901760
      %4281 = vmatmul.mubr.f32.gmra.mrb[0].mxu0 %v4280
      %v4282 = vpop.f32.mrb[0].mxu0
      %v4283 = vadd.f32 %v3971, %v4282
      %v4284 = vpop.f32.mrb[0].mxu0
      %4285 = vmatprep.mubr.f32.mxu0 0.0
      %v4286 = vand.u32 %v2866, 4294901760
      %4287 = vmatmul.mubr.f32.gmra.mrb[0].mxu0 %v4286
      %v4288 = vpop.f32.mrb[0].mxu0
      %v4289 = vadd.f32 %v3979, %v4288
      %v4290 = vpop.f32.mrb[0].mxu0
      %4291 = vmatprep.mubr.f32.mxu0 0.0
      %v4292 = vand.u32 %v2868, 4294901760
      %4293 = vmatmul.mubr.f32.gmra.mrb[0].mxu0 %v4292
      %v4294 = vpop.f32.mrb[0].mxu0
      %v4295 = vadd.f32 %v3987, %v4294
      %v4296 = vpop.f32.mrb[0].mxu0
      %4297 = vmatprep.mubr.f32.mxu0 0.0
      %v4298 = vand.u32 %v2870, 4294901760
      %4299 = vmatmul.mubr.f32.gmra.mrb[0].mxu0 %v4298
      %v4300 = vpop.f32.mrb[0].mxu0
      %v4301 = vadd.f32 %v3995, %v4300
      %v4302 = vpop.f32.mrb[0].mxu0
      %4303 = vmatprep.mubr.f32.mxu0 0.0
      %v4304 = vand.u32 %v2872, 4294901760
      %4305 = vmatmul.mubr.f32.gmra.mrb[0].mxu0 %v4304
      %v4306 = vpop.f32.mrb[0].mxu0
      %v4307 = vadd.f32 %v4003, %v4306
      %v4308 = vpop.f32.mrb[0].mxu0
      %4309 = vmatprep.mubr.f32.mxu0 0.0
      %v4310 = vand.u32 %v2874, 4294901760
      %4311 = vmatmul.mubr.f32.gmra.mrb[0].mxu0 %v4310
      %v4312 = vpop.f32.mrb[0].mxu0
      %v4313 = vadd.f32 %v4011, %v4312
      %v4314 = vpop.f32.mrb[0].mxu0
      %4315 = vmatprep.mubr.f32.mxu0 0.0
      %v4316 = vand.u32 %v2876, 4294901760
      %4317 = vmatmul.mubr.f32.gmra.mrb[0].mxu0 %v4316
      %v4318 = vpop.f32.mrb[0].mxu0
      %v4319 = vadd.f32 %v4019, %v4318
      %v4320 = vpop.f32.mrb[0].mxu0
      %4321 = vmatprep.mubr.f32.mxu0 0.0
      %v4322 = vand.u32 %v2878, 4294901760
      %4323 = vmatmul.mubr.f32.gmra.mrb[0].mxu0 %v4322
      %v4324 = vpop.f32.mrb[0].mxu0
      %v4325 = vadd.f32 %v4027, %v4324
      %v4326 = vpop.f32.mrb[0].mxu0
      %4327 = vmatprep.mubr.f32.mxu0 0.0
      %v4328 = vand.u32 %v2880, 4294901760
      %4329 = vmatmul.mubr.f32.gmra.mrb[0].mxu0 %v4328
      %v4330 = vpop.f32.mrb[0].mxu0
      %v4331 = vadd.f32 %v4035, %v4330
      %v4332 = vpop.f32.mrb[0].mxu0
      %4333 = vmatprep.mubr.f32.mxu0 0.0
      %v4334 = vand.u32 %v2882, 4294901760
      %4335 = vmatmul.mubr.f32.gmra.mrb[0].mxu0 %v4334
      %v4336 = vpop.f32.mrb[0].mxu0
      %v4337 = vadd.f32 %v4043, %v4336
      %v4338 = vpop.f32.mrb[0].mxu0
      %4339 = vmatprep.mubr.f32.mxu0 0.0
      %v4340 = vand.u32 %v2884, 4294901760
      %4341 = vmatmul.mubr.f32.gmra.mrb[0].mxu0 %v4340
      %v4342 = vpop.f32.mrb[0].mxu0
      %v4343 = vadd.f32 %v4051, %v4342
      %v4344 = vpop.f32.mrb[0].mxu0
      %4345 = vmatprep.mubr.f32.mxu0 0.0
      %v4346 = vand.u32 %v2886, 4294901760
      %4347 = vmatmul.mubr.f32.gmra.mrb[0].mxu0 %v4346
      %v4348 = vpop.f32.mrb[0].mxu0
      %v4349 = vadd.f32 %v4059, %v4348
      %v4350 = vpop.f32.mrb[0].mxu0
      %4351 = vmatprep.mubr.f32.mxu0 0.0
      %v4352 = vand.u32 %v2888, 4294901760
      %4353 = vmatmul.mubr.f32.gmra.mrb[0].mxu0 %v4352
      %v4354 = vpop.f32.mrb[0].mxu0
      %v4355 = vadd.f32 %v4067, %v4354
      %v4356 = vpop.f32.mrb[0].mxu0
      %4357 = vmatprep.mubr.f32.mxu0 0.0
      %v4358 = vand.u32 %v2890, 4294901760
      %4359 = vmatmul.mubr.f32.gmra.mrb[0].mxu0 %v4358
      %v4360 = vpop.f32.mrb[0].mxu0
      %v4361 = vadd.f32 %v4075, %v4360
      %v4362 = vpop.f32.mrb[0].mxu0
      %4363 = vmatprep.mubr.f32.mxu0 0.0
      %v4364 = vand.u32 %v2892, 4294901760
      %4365 = vmatmul.mubr.f32.gmra.mrb[0].mxu0 %v4364
      %v4366 = vpop.f32.mrb[0].mxu0
      %v4367 = vadd.f32 %v4083, %v4366
      %v4368 = vpop.f32.mrb[0].mxu0
      %4369 = vmatprep.mubr.f32.mxu0 0.0
      %v4370 = vand.u32 %v2894, 4294901760
      %4371 = vmatmul.mubr.f32.gmra.mrb[0].mxu0 %v4370
      %v4372 = vpop.f32.mrb[0].mxu0
      %v4373 = vadd.f32 %v4091, %v4372
      %v4374 = vpop.f32.mrb[0].mxu0
      %4375 = vmatprep.mubr.f32.mxu0 0.0
      %v4376 = vand.u32 %v2896, 4294901760
      %4377 = vmatmul.mubr.f32.gmra.mrb[0].mxu0 %v4376
      %v4378 = vpop.f32.mrb[0].mxu0
      %v4379 = vadd.f32 %v4099, %v4378
      %v4380 = vpop.f32.mrb[0].mxu0
      %4381 = vmatprep.mubr.f32.mxu0 0.0
      %v4382 = vand.u32 %v2898, 4294901760
      %4383 = vmatmul.mubr.f32.gmra.mrb[0].mxu0 %v4382
      %v4384 = vpop.f32.mrb[0].mxu0
      %v4385 = vadd.f32 %v4107, %v4384
      %v4386 = vpop.f32.mrb[0].mxu0
      %4387 = vmatprep.mubr.f32.mxu0 0.0
      %v4388 = vand.u32 %v2900, 4294901760
      %4389 = vmatmul.mubr.f32.gmra.mrb[0].mxu0 %v4388
      %v4390 = vpop.f32.mrb[0].mxu0
      %v4391 = vadd.f32 %v4115, %v4390
      %v4392 = vpop.f32.mrb[0].mxu0
      %4393 = vmatprep.mubr.f32.mxu0 0.0
      %v4394 = vand.u32 %v2902, 4294901760
      %4395 = vmatmul.mubr.f32.gmra.mrb[0].mxu0 %v4394
      %v4396 = vpop.f32.mrb[0].mxu0
      %v4397 = vadd.f32 %v4123, %v4396
      %v4398 = vpop.f32.mrb[0].mxu0
      %4399 = vmatprep.mubr.f32.mxu0 0.0
      %v4400 = vand.u32 %v2904, 4294901760
      %4401 = vmatmul.mubr.f32.gmra.mrb[0].mxu0 %v4400
      %v4402 = vpop.f32.mrb[0].mxu0
      %v4403 = vadd.f32 %v4131, %v4402
      %v4404 = vpop.f32.mrb[0].mxu0
      %4405 = vmatprep.mubr.f32.mxu0 0.0
      %v4406 = vand.u32 %v2906, 4294901760
      %4407 = vmatmul.mubr.f32.gmra.mrb[0].mxu0 %v4406
      %v4408 = vpop.f32.mrb[0].mxu0
      %v4409 = vadd.f32 %v4139, %v4408
      %v4410 = vpop.f32.mrb[0].mxu0
      %4411 = vmatprep.mubr.f32.mxu0 0.0
      %v4412 = vand.u32 %v2908, 4294901760
      %4413 = vmatmul.mubr.f32.gmra.mrb[0].mxu0 %v4412
      %v4414 = vpop.f32.mrb[0].mxu0
      %v4415 = vadd.f32 %v4147, %v4414
      %v4416 = vpop.f32.mrb[0].mxu0
      %4417 = vmatprep.mubr.f32.mxu0 0.0
      %v4418 = vand.u32 %v2910, 4294901760
      %4419 = vmatmul.mubr.f32.gmra.mrb[0].mxu0 %v4418
      %v4420 = vpop.f32.mrb[0].mxu0
      %v4421 = vadd.f32 %v4155, %v4420
      %v4422 = vpop.f32.mrb[0].mxu0
      %4423 = vmatprep.mubr.f32.mxu0 0.0
      %v4424 = vand.u32 %v2912, 4294901760
      %4425 = vmatmul.mubr.f32.gmra.mrb[0].mxu0 %v4424
      %v4426 = vpop.f32.mrb[0].mxu0
      %v4427 = vadd.f32 %v4163, %v4426
      %v4428 = vpop.f32.mrb[0].mxu0
      %4429 = vmatprep.mubr.f32.mxu0 0.0
      %v4430 = vand.u32 %v2914, 4294901760
      %4431 = vmatmul.mubr.f32.gmra.mrb[0].mxu0 %v4430
      %v4432 = vpop.f32.mrb[0].mxu0
      %v4433 = vadd.f32 %v4171, %v4432
      %v4434 = vpop.f32.mrb[0].mxu0
      %4435 = vmatprep.mubr.f32.mxu0 0.0
      %v4436 = vand.u32 %v2916, 4294901760
      %4437 = vmatmul.mubr.f32.gmra.mrb[0].mxu0 %v4436
      %v4438 = vpop.f32.mrb[0].mxu0
      %v4439 = vadd.f32 %v4179, %v4438
      %v4440 = vpop.f32.mrb[0].mxu0
      %4441 = vdwg.mxu0
      %4442 = vmatprep.subr.mxu0 0.0
      %v4443 = vand.u32 %v2919, 4294901760
      %4444 = vmatpush1.msra.mxu0 %v4443
      %4445 = vmatprep.subr.mxu0 0.0
      %4446 = vmatpush1.msra.mxu0 0.0
      %4447 = vmatprep.subr.mxu0 0.0
      %4448 = vmatpush1.msra.mxu0 0.0
      %4449 = vmatprep.subr.mxu0 0.0
      %4450 = vmatpush1.msra.mxu0 0.0
      %4451 = vmatprep.subr.mxu0 0.0
      %4452 = vmatpush1.msra.mxu0 0.0
      %4453 = vmatprep.subr.mxu0 0.0
      %4454 = vmatpush1.msra.mxu0 0.0
      %4455 = vmatprep.subr.mxu0 0.0
      %4456 = vmatpush1.msra.mxu0 0.0
      %4457 = vmatprep.subr.mxu0 0.0
      %4458 = vmatpush1.msra.mxu0 0.0
      %4459 = vmatprep.subr.mxu0 0.0
      %4460 = vmatpush1.msra.mxu0 0.0
      %4461 = vmatprep.subr.mxu0 0.0
      %4462 = vmatpush1.msra.mxu0 0.0
      %4463 = vmatprep.subr.mxu0 0.0
      %4464 = vmatpush1.msra.mxu0 0.0
      %4465 = vmatprep.subr.mxu0 0.0
      %4466 = vmatpush1.msra.mxu0 0.0
      %4467 = vmatprep.subr.mxu0 0.0
      %4468 = vmatpush1.msra.mxu0 0.0
      %4469 = vmatprep.subr.mxu0 0.0
      %4470 = vmatpush1.msra.mxu0 0.0
      %4471 = vmatprep.subr.mxu0 0.0
      %4472 = vmatpush1.msra.mxu0 0.0
      %4473 = vmatprep.subr.mxu0 0.0
      %4474 = vmatpush1.msra.mxu0 0.0
      %4475 = vmatprep.subr.mxu0 0.0
      %4476 = vmatpush1.msra.mxu0 0.0
      %4477 = vmatprep.subr.mxu0 0.0
      %4478 = vmatpush1.msra.mxu0 0.0
      %4479 = vmatprep.subr.mxu0 0.0
      %4480 = vmatpush1.msra.mxu0 0.0
      %4481 = vmatprep.subr.mxu0 0.0
      %4482 = vmatpush1.msra.mxu0 0.0
      %4483 = vmatprep.subr.mxu0 0.0
      %4484 = vmatpush1.msra.mxu0 0.0
      %4485 = vmatprep.subr.mxu0 0.0
      %4486 = vmatpush1.msra.mxu0 0.0
      %4487 = vmatprep.subr.mxu0 0.0
      %4488 = vmatpush1.msra.mxu0 0.0
      %4489 = vmatprep.subr.mxu0 0.0
      %4490 = vmatpush1.msra.mxu0 0.0
      %4491 = vmatprep.subr.mxu0 0.0
      %4492 = vmatpush1.msra.mxu0 0.0
      %4493 = vmatprep.subr.mxu0 0.0
      %4494 = vmatpush1.msra.mxu0 0.0
      %4495 = vmatprep.subr.mxu0 0.0
      %4496 = vmatpush1.msra.mxu0 0.0
      %4497 = vmatprep.subr.mxu0 0.0
      %4498 = vmatpush1.msra.mxu0 0.0
      %4499 = vmatprep.subr.mxu0 0.0
      %4500 = vmatpush1.msra.mxu0 0.0
      %4501 = vmatprep.subr.mxu0 0.0
      %4502 = vmatpush1.msra.mxu0 0.0
      %4503 = vmatprep.subr.mxu0 0.0
      %4504 = vmatpush1.msra.mxu0 0.0
      %4505 = vmatprep.subr.mxu0 0.0
      %4506 = vmatpush1.msra.mxu0 0.0
      %4507 = vmatprep.mubr.f32.mxu0 0.0
      %v4508 = vand.u32 %v2854, 4294901760
      %4509 = vmatmul.mubr.f32.gmra.mrb[0].mxu0 %v4508
      %v4510 = vpop.f32.mrb[0].mxu0
      %v4511 = vadd.f32 %v4253, %v4510
      %v4512 = vpop.f32.mrb[0].mxu0
      %4513 = vmatprep.mubr.f32.mxu0 0.0
      %v4514 = vand.u32 %v2856, 4294901760
      %4515 = vmatmul.mubr.f32.gmra.mrb[0].mxu0 %v4514
      %v4516 = vpop.f32.mrb[0].mxu0
      %v4517 = vadd.f32 %v4259, %v4516
      %v4518 = vpop.f32.mrb[0].mxu0
      %4519 = vmatprep.mubr.f32.mxu0 0.0
      %v4520 = vand.u32 %v2858, 4294901760
      %4521 = vmatmul.mubr.f32.gmra.mrb[0].mxu0 %v4520
      %v4522 = vpop.f32.mrb[0].mxu0
      %v4523 = vadd.f32 %v4265, %v4522
      %v4524 = vpop.f32.mrb[0].mxu0
      %4525 = vmatprep.mubr.f32.mxu0 0.0
      %v4526 = vand.u32 %v2860, 4294901760
      %4527 = vmatmul.mubr.f32.gmra.mrb[0].mxu0 %v4526
      %v4528 = vpop.f32.mrb[0].mxu0
      %v4529 = vadd.f32 %v4271, %v4528
      %v4530 = vpop.f32.mrb[0].mxu0
      %4531 = vmatprep.mubr.f32.mxu0 0.0
      %v4532 = vand.u32 %v2862, 4294901760
      %4533 = vmatmul.mubr.f32.gmra.mrb[0].mxu0 %v4532
      %v4534 = vpop.f32.mrb[0].mxu0
      %v4535 = vadd.f32 %v4277, %v4534
      %v4536 = vpop.f32.mrb[0].mxu0
      %4537 = vmatprep.mubr.f32.mxu0 0.0
      %v4538 = vand.u32 %v2864, 4294901760
      %4539 = vmatmul.mubr.f32.gmra.mrb[0].mxu0 %v4538
      %v4540 = vpop.f32.mrb[0].mxu0
      %v4541 = vadd.f32 %v4283, %v4540
      %v4542 = vpop.f32.mrb[0].mxu0
      %4543 = vmatprep.mubr.f32.mxu0 0.0
      %v4544 = vand.u32 %v2866, 4294901760
      %4545 = vmatmul.mubr.f32.gmra.mrb[0].mxu0 %v4544
      %v4546 = vpop.f32.mrb[0].mxu0
      %v4547 = vadd.f32 %v4289, %v4546
      %v4548 = vpop.f32.mrb[0].mxu0
      %4549 = vmatprep.mubr.f32.mxu0 0.0
      %v4550 = vand.u32 %v2868, 4294901760
      %4551 = vmatmul.mubr.f32.gmra.mrb[0].mxu0 %v4550
      %v4552 = vpop.f32.mrb[0].mxu0
      %v4553 = vadd.f32 %v4295, %v4552
      %v4554 = vpop.f32.mrb[0].mxu0
      %4555 = vmatprep.mubr.f32.mxu0 0.0
      %v4556 = vand.u32 %v2870, 4294901760
      %4557 = vmatmul.mubr.f32.gmra.mrb[0].mxu0 %v4556
      %v4558 = vpop.f32.mrb[0].mxu0
      %v4559 = vadd.f32 %v4301, %v4558
      %v4560 = vpop.f32.mrb[0].mxu0
      %4561 = vmatprep.mubr.f32.mxu0 0.0
      %v4562 = vand.u32 %v2872, 4294901760
      %4563 = vmatmul.mubr.f32.gmra.mrb[0].mxu0 %v4562
      %v4564 = vpop.f32.mrb[0].mxu0
      %v4565 = vadd.f32 %v4307, %v4564
      %v4566 = vpop.f32.mrb[0].mxu0
      %4567 = vmatprep.mubr.f32.mxu0 0.0
      %v4568 = vand.u32 %v2874, 4294901760
      %4569 = vmatmul.mubr.f32.gmra.mrb[0].mxu0 %v4568
      %v4570 = vpop.f32.mrb[0].mxu0
      %v4571 = vadd.f32 %v4313, %v4570
      %v4572 = vpop.f32.mrb[0].mxu0
      %4573 = vmatprep.mubr.f32.mxu0 0.0
      %v4574 = vand.u32 %v2876, 4294901760
      %4575 = vmatmul.mubr.f32.gmra.mrb[0].mxu0 %v4574
      %v4576 = vpop.f32.mrb[0].mxu0
      %v4577 = vadd.f32 %v4319, %v4576
      %v4578 = vpop.f32.mrb[0].mxu0
      %4579 = vmatprep.mubr.f32.mxu0 0.0
      %v4580 = vand.u32 %v2878, 4294901760
      %4581 = vmatmul.mubr.f32.gmra.mrb[0].mxu0 %v4580
      %v4582 = vpop.f32.mrb[0].mxu0
      %v4583 = vadd.f32 %v4325, %v4582
      %v4584 = vpop.f32.mrb[0].mxu0
      %4585 = vmatprep.mubr.f32.mxu0 0.0
      %v4586 = vand.u32 %v2880, 4294901760
      %4587 = vmatmul.mubr.f32.gmra.mrb[0].mxu0 %v4586
      %v4588 = vpop.f32.mrb[0].mxu0
      %v4589 = vadd.f32 %v4331, %v4588
      %v4590 = vpop.f32.mrb[0].mxu0
      %4591 = vmatprep.mubr.f32.mxu0 0.0
      %v4592 = vand.u32 %v2882, 4294901760
      %4593 = vmatmul.mubr.f32.gmra.mrb[0].mxu0 %v4592
      %v4594 = vpop.f32.mrb[0].mxu0
      %v4595 = vadd.f32 %v4337, %v4594
      %v4596 = vpop.f32.mrb[0].mxu0
      %4597 = vmatprep.mubr.f32.mxu0 0.0
      %v4598 = vand.u32 %v2884, 4294901760
      %4599 = vmatmul.mubr.f32.gmra.mrb[0].mxu0 %v4598
      %v4600 = vpop.f32.mrb[0].mxu0
      %v4601 = vadd.f32 %v4343, %v4600
      %v4602 = vpop.f32.mrb[0].mxu0
      %4603 = vmatprep.mubr.f32.mxu0 0.0
      %v4604 = vand.u32 %v2886, 4294901760
      %4605 = vmatmul.mubr.f32.gmra.mrb[0].mxu0 %v4604
      %v4606 = vpop.f32.mrb[0].mxu0
      %v4607 = vadd.f32 %v4349, %v4606
      %v4608 = vpop.f32.mrb[0].mxu0
      %4609 = vmatprep.mubr.f32.mxu0 0.0
      %v4610 = vand.u32 %v2888, 4294901760
      %4611 = vmatmul.mubr.f32.gmra.mrb[0].mxu0 %v4610
      %v4612 = vpop.f32.mrb[0].mxu0
      %v4613 = vadd.f32 %v4355, %v4612
      %v4614 = vpop.f32.mrb[0].mxu0
      %4615 = vmatprep.mubr.f32.mxu0 0.0
      %v4616 = vand.u32 %v2890, 4294901760
      %4617 = vmatmul.mubr.f32.gmra.mrb[0].mxu0 %v4616
      %v4618 = vpop.f32.mrb[0].mxu0
      %v4619 = vadd.f32 %v4361, %v4618
      %v4620 = vpop.f32.mrb[0].mxu0
      %4621 = vmatprep.mubr.f32.mxu0 0.0
      %v4622 = vand.u32 %v2892, 4294901760
      %4623 = vmatmul.mubr.f32.gmra.mrb[0].mxu0 %v4622
      %v4624 = vpop.f32.mrb[0].mxu0
      %v4625 = vadd.f32 %v4367, %v4624
      %v4626 = vpop.f32.mrb[0].mxu0
      %4627 = vmatprep.mubr.f32.mxu0 0.0
      %v4628 = vand.u32 %v2894, 4294901760
      %4629 = vmatmul.mubr.f32.gmra.mrb[0].mxu0 %v4628
      %v4630 = vpop.f32.mrb[0].mxu0
      %v4631 = vadd.f32 %v4373, %v4630
      %v4632 = vpop.f32.mrb[0].mxu0
      %4633 = vmatprep.mubr.f32.mxu0 0.0
      %v4634 = vand.u32 %v2896, 4294901760
      %4635 = vmatmul.mubr.f32.gmra.mrb[0].mxu0 %v4634
      %v4636 = vpop.f32.mrb[0].mxu0
      %v4637 = vadd.f32 %v4379, %v4636
      %v4638 = vpop.f32.mrb[0].mxu0
      %4639 = vmatprep.mubr.f32.mxu0 0.0
      %v4640 = vand.u32 %v2898, 4294901760
      %4641 = vmatmul.mubr.f32.gmra.mrb[0].mxu0 %v4640
      %v4642 = vpop.f32.mrb[0].mxu0
      %v4643 = vadd.f32 %v4385, %v4642
      %v4644 = vpop.f32.mrb[0].mxu0
      %4645 = vmatprep.mubr.f32.mxu0 0.0
      %v4646 = vand.u32 %v2900, 4294901760
      %4647 = vmatmul.mubr.f32.gmra.mrb[0].mxu0 %v4646
      %v4648 = vpop.f32.mrb[0].mxu0
      %v4649 = vadd.f32 %v4391, %v4648
      %v4650 = vpop.f32.mrb[0].mxu0
      %4651 = vmatprep.mubr.f32.mxu0 0.0
      %v4652 = vand.u32 %v2902, 4294901760
      %4653 = vmatmul.mubr.f32.gmra.mrb[0].mxu0 %v4652
      %v4654 = vpop.f32.mrb[0].mxu0
      %v4655 = vadd.f32 %v4397, %v4654
      %v4656 = vpop.f32.mrb[0].mxu0
      %4657 = vmatprep.mubr.f32.mxu0 0.0
      %v4658 = vand.u32 %v2904, 4294901760
      %4659 = vmatmul.mubr.f32.gmra.mrb[0].mxu0 %v4658
      %v4660 = vpop.f32.mrb[0].mxu0
      %v4661 = vadd.f32 %v4403, %v4660
      %v4662 = vpop.f32.mrb[0].mxu0
      %4663 = vmatprep.mubr.f32.mxu0 0.0
      %v4664 = vand.u32 %v2906, 4294901760
      %4665 = vmatmul.mubr.f32.gmra.mrb[0].mxu0 %v4664
      %v4666 = vpop.f32.mrb[0].mxu0
      %v4667 = vadd.f32 %v4409, %v4666
      %v4668 = vpop.f32.mrb[0].mxu0
      %4669 = vmatprep.mubr.f32.mxu0 0.0
      %v4670 = vand.u32 %v2908, 4294901760
      %4671 = vmatmul.mubr.f32.gmra.mrb[0].mxu0 %v4670
      %v4672 = vpop.f32.mrb[0].mxu0
      %v4673 = vadd.f32 %v4415, %v4672
      %v4674 = vpop.f32.mrb[0].mxu0
      %4675 = vmatprep.mubr.f32.mxu0 0.0
      %v4676 = vand.u32 %v2910, 4294901760
      %4677 = vmatmul.mubr.f32.gmra.mrb[0].mxu0 %v4676
      %v4678 = vpop.f32.mrb[0].mxu0
      %v4679 = vadd.f32 %v4421, %v4678
      %v4680 = vpop.f32.mrb[0].mxu0
      %4681 = vmatprep.mubr.f32.mxu0 0.0
      %v4682 = vand.u32 %v2912, 4294901760
      %4683 = vmatmul.mubr.f32.gmra.mrb[0].mxu0 %v4682
      %v4684 = vpop.f32.mrb[0].mxu0
      %v4685 = vadd.f32 %v4427, %v4684
      %v4686 = vpop.f32.mrb[0].mxu0
      %4687 = vmatprep.mubr.f32.mxu0 0.0
      %v4688 = vand.u32 %v2914, 4294901760
      %4689 = vmatmul.mubr.f32.gmra.mrb[0].mxu0 %v4688
      %v4690 = vpop.f32.mrb[0].mxu0
      %v4691 = vadd.f32 %v4433, %v4690
      %v4692 = vpop.f32.mrb[0].mxu0
      %4693 = vmatprep.mubr.f32.mxu0 0.0
      %v4694 = vand.u32 %v2916, 4294901760
      %4695 = vmatmul.mubr.f32.gmra.mrb[0].mxu0 %v4694
      %v4696 = vpop.f32.mrb[0].mxu0
      %v4697 = vadd.f32 %v4439, %v4696
      %v4698 = vpop.f32.mrb[0].mxu0
      %4699 = vdwg.mxu0
      %v4700 = vadd.f32 %v269, %v4511
      %v4701 = vadd.f32 %v270, %v4517
      %v4702 = vadd.f32 %v271, %v4523
      %v4703 = vadd.f32 %v272, %v4529
      %v4704 = vadd.f32 %v273, %v4535
      %v4705 = vadd.f32 %v274, %v4541
      %v4706 = vadd.f32 %v275, %v4547
      %v4707 = vadd.f32 %v276, %v4553
      %v4708 = vadd.f32 %v277, %v4559
      %v4709 = vadd.f32 %v278, %v4565
      %v4710 = vadd.f32 %v279, %v4571
      %v4711 = vadd.f32 %v280, %v4577
      %v4712 = vadd.f32 %v281, %v4583
      %v4713 = vadd.f32 %v282, %v4589
      %v4714 = vadd.f32 %v283, %v4595
      %v4715 = vadd.f32 %v284, %v4601
      %v4716 = vadd.f32 %v285, %v4607
      %v4717 = vadd.f32 %v286, %v4613
      %v4718 = vadd.f32 %v287, %v4619
      %v4719 = vadd.f32 %v288, %v4625
      %v4720 = vadd.f32 %v289, %v4631
      %v4721 = vadd.f32 %v290, %v4637
      %v4722 = vadd.f32 %v291, %v4643
      %v4723 = vadd.f32 %v292, %v4649
      %v4724 = vadd.f32 %v293, %v4655
      %v4725 = vadd.f32 %v294, %v4661
      %v4726 = vadd.f32 %v295, %v4667
      %v4727 = vadd.f32 %v296, %v4673
      %v4728 = vadd.f32 %v297, %v4679
      %v4729 = vadd.f32 %v298, %v4685
      %v4730 = vadd.f32 %v299, %v4691
      %v4731 = vadd.f32 %v300, %v4697
      %4732 = vst.msk [vmem:[%s267] sm:$0xff] %vm309, %v4700
      %4733 = vst.msk [vmem:[%s267 + $0x8] sm:$0xff] %vm309, %v4701
      %4734 = vst.msk [vmem:[%s267 + $0x10] sm:$0xff] %vm309, %v4702
      %4735 = vst.msk [vmem:[%s267 + $0x18] sm:$0xff] %vm309, %v4703
      %4736 = vst.msk [vmem:[%s267 + $0x20] sm:$0xff] %vm309, %v4704
      %4737 = vst.msk [vmem:[%s267 + $0x28] sm:$0xff] %vm309, %v4705
      %4738 = vst.msk [vmem:[%s267 + $0x30] sm:$0xff] %vm309, %v4706
      %4739 = vst.msk [vmem:[%s267 + $0x38] sm:$0xff] %vm309, %v4707
      %4740 = vst.msk [vmem:[%s267 + $0x40] sm:$0xff] %vm309, %v4708
      %4741 = vst.msk [vmem:[%s267 + $0x48] sm:$0xff] %vm309, %v4709
      %4742 = vst.msk [vmem:[%s267 + $0x50] sm:$0xff] %vm309, %v4710
      %4743 = vst.msk [vmem:[%s267 + $0x58] sm:$0xff] %vm309, %v4711
      %4744 = vst.msk [vmem:[%s267 + $0x60] sm:$0xff] %vm309, %v4712
      %4745 = vst.msk [vmem:[%s267 + $0x68] sm:$0xff] %vm309, %v4713
      %4746 = vst.msk [vmem:[%s267 + $0x70] sm:$0xff] %vm309, %v4714
      %4747 = vst.msk [vmem:[%s267 + $0x78] sm:$0xff] %vm309, %v4715
      %4748 = vst.msk [vmem:[%s267 + $0x80] sm:$0xff] %vm309, %v4716
      %4749 = vst.msk [vmem:[%s267 + $0x88] sm:$0xff] %vm309, %v4717
      %4750 = vst.msk [vmem:[%s267 + $0x90] sm:$0xff] %vm309, %v4718
      %4751 = vst.msk [vmem:[%s267 + $0x98] sm:$0xff] %vm309, %v4719
      %4752 = vst.msk [vmem:[%s267 + $0xa0] sm:$0xff] %vm309, %v4720
      %4753 = vst.msk [vmem:[%s267 + $0xa8] sm:$0xff] %vm309, %v4721
      %4754 = vst.msk [vmem:[%s267 + $0xb0] sm:$0xff] %vm309, %v4722
      %4755 = vst.msk [vmem:[%s267 + $0xb8] sm:$0xff] %vm309, %v4723
      %4756 = vst.msk [vmem:[%s267 + $0xc0] sm:$0xff] %vm309, %v4724
      %4757 = vst.msk [vmem:[%s267 + $0xc8] sm:$0xff] %vm309, %v4725
      %4758 = vst.msk [vmem:[%s267 + $0xd0] sm:$0xff] %vm309, %v4726
      %4759 = vst.msk [vmem:[%s267 + $0xd8] sm:$0xff] %vm309, %v4727
      %4760 = vst.msk [vmem:[%s267 + $0xe0] sm:$0xff] %vm309, %v4728
      %4761 = vst.msk [vmem:[%s267 + $0xe8] sm:$0xff] %vm309, %v4729
      %4762 = vst.msk [vmem:[%s267 + $0xf0] sm:$0xff] %vm309, %v4730
      %4763 = vst.msk [vmem:[%s267 + $0xf8] sm:$0xff] %vm309, %v4731
      %s4764 = smul.u32 16, %s21
      %p4765 = scmp.lt.s32.totalorder %s20, 1
      %s4766 = scalar_select %p4765, %s20, 1
      %p4767 = scmp.lt.s32.totalorder %s4764, 15
      %s4768 = scalar_select %p4767, %s4764, 15
      %s4769 = smul.addr %s4768, 2
      %s4770 = smul.addr %s4766, 32
      %s4771 = sadd.s32 %s4769, %s4770
      %s4772 = smul.addr %s4771, 8
      %s4773 = scalar_lea.vmem %s5, %s4772
      // Predicated region
      $region41: #{tpu_custom_call.1} parent=39 // pred_check
        %p4774 = pneg %p160
      $region42: #{tpu_custom_call.1} parent=39 // pred_check_branch
        %4776 = sbr.rel (%p4774) target = $region44
      $region43: #{tpu_custom_call.1} parent=39 // pred_region
        %s4777 = smul.u32 16, %s21
      $region44: #{tpu_custom_call.1} parent=39 // pred_fallthru
        _
    $region40: #{tpu_custom_call.1} parent=5 // pred_fallthru
      _
    %p4778 = scmp.le.s32.totalorder 2, %s11
    // Predicated region
    $region45: #{tpu_custom_call.1} parent=5 // pred_check
      %p4779 = pneg %p4778
    $region46: #{tpu_custom_call.1} parent=5 // pred_check_branch
      %4781 = sbr.rel (%p4779) target = $region48
    $region47: #{tpu_custom_call.1} parent=5 // pred_region
      %s4782 = ssub.s32 %s11, 2
      // Predicated region
      $region49: #{tpu_custom_call.1} parent=47 // pred_check
        %p4783 = pneg %p166
      $region50: #{tpu_custom_call.1} parent=47 // pred_check_branch
        %4785 = sbr.rel (%p4783) target = $region52
      $region51: #{tpu_custom_call.1} parent=47 // pred_region
        %s4786 = smul.u32 16, %s23
        %p4787 = scmp.lt.s32.totalorder %s22, 1
        %s4788 = scalar_select %p4787, %s22, 1
        %p4789 = scmp.lt.s32.totalorder %s4786, 15
        %s4790 = scalar_select %p4789, %s4786, 15
        %s4791 = smul.addr %s4790, 2
        %s4792 = smul.addr %s4788, 32
        %s4793 = sadd.s32 %s4791, %s4792
        %s4794 = smul.addr %s4793, 8
        %s4795 = scalar_lea.vmem %s5, %s4794
      $region52: #{tpu_custom_call.1} parent=47 // pred_fallthru
        _
    $region48: #{tpu_custom_call.1} parent=5 // pred_fallthru
      _
  $region6: #{tpu_custom_call.1} parent=0 // loop_footer
    %s15 = sadd.s32 1, %s11
  $region7: #{tpu_custom_call.1} parent=0 // loop_footer_branch
    %10 = sbr.rel target = $region3
  $region8: #{tpu_custom_call.1} parent=0 // loop_exit
    _

</llo_original>
